<compile_context>
chip_gen: v6e
topology: v6e:2x2x1
jax: 0.10.0
libtpu: 0.0.40
codegen_flags: <defaults>
</compile_context>

<pallas_src>
import jax
import jax.numpy as jnp
from jax import lax
from jax.experimental import pallas as pl
from jax.experimental.pallas import tpu as pltpu

# ---- model config (small shapes consistent with the module) ----
INPUT_DIM = 8          # len(data_set.feature_columns) stand-in
D_MODEL   = 128
D_STATE   = 16
EXPAND    = 2
D_INNER   = EXPAND * D_MODEL
N_LAYERS  = 5
N_PARAMS  = 3
BATCH     = 2
SEQ       = 8

# bf16 weights halve DMA bytes (the dominant cost here); accumulation is f32.
# Set to jnp.float32 to reproduce PyTorch numerics bit-for-bit-ish.
WEIGHT_DTYPE = jnp.bfloat16

# Synthetic stand-ins for data_set.get_index('平均股价'/'TTM营业额'/'TTM毛利率'/'TTM净利率')
PRICE_IDX, RY_IDX, GY_IDX, NY_IDX = 0, 1, 2, 3


# ---------------- in-kernel nonlinearities ----------------
def _sigmoid(x):
    return 1.0 / (1.0 + jnp.exp(-x))


def _silu(x):
    return x * _sigmoid(x)


def _softplus(x):
    # numerically stable softplus
    return jnp.maximum(x, 0.0) + jnp.log1p(jnp.exp(-jnp.abs(x)))


# ---------------- fused forward kernel ----------------
def fused_forward_kernel(
        x_ref, last1_ref, last2_ref,
        emb_w_ref, emb_b_ref,
        w_in_ref, b_in_ref, w_xpdt_ref, b_xpdt_ref,
        w_out_ref, b_out_ref, a_ref, d_ref, gamma_ref, beta_ref,
        h1_w_ref, h1_b_ref, h2_w_ref, h2_b_ref,
        o_ref,
        act_scr, y_scr):
    layer = pl.program_id(0)
    n_layers = pl.num_programs(0)
    LB, D = act_scr.shape                     # (L*B, D_MODEL), L-major rows
    B = last1_ref.shape[0]
    L = LB // B

    # ---- input embedding: only on the first grid step ----
    @pl.when(layer == 0)
    def _():
        x_in = x_ref[...]                                        # (L*B, F)
        act_scr[...] = (jnp.dot(x_in, emb_w_ref[...],
                                preferred_element_type=jnp.float32)
                        + emb_b_ref[...])

    # ---- Mamba block `layer` (use_conv=False path) ----
    x2 = act_scr[...]                                            # (L*B, D)
    xw = x2.astype(w_in_ref.dtype)
    xz = (jnp.dot(xw, w_in_ref[...], preferred_element_type=jnp.float32)
          + b_in_ref[...])                                       # (L*B, 2*D_INNER)
    d_inner = xz.shape[-1] // 2
    xp = xz[:, :d_inner]
    z = xz[:, d_inner:]
    xc = _silu(xp)                                               # (L*B, d_inner)

    # fused x_proj + dt_proj: one matmul, columns = [dt | B | C]
    xcw = xc.astype(w_xpdt_ref.dtype)
    proj = (jnp.dot(xcw, w_xpdt_ref[...], preferred_element_type=jnp.float32)
            + b_xpdt_ref[...])                                   # (L*B, d_inner + 2*d_state)
    d_state = (proj.shape[-1] - d_inner) // 2
    dt = _softplus(proj[:, :d_inner])                            # (L*B, d_inner)
    Bmat = proj[:, d_inner:d_inner + d_state]                    # (L*B, d_state)
    Cmat = proj[:, d_inner + d_state:]                           # (L*B, d_state)

    A = a_ref[...]                        # (d_state, d_inner) = -exp(A_log).T
    Dp = d_ref[...]                       # (1, d_inner)

    # ---- selective scan ----
    # L-major leading-axis views -> contiguous per-step slices.
    u3 = xc.reshape(L, B, d_inner)
    dt3 = dt.reshape(L, B, d_inner)
    Bm = Bmat.reshape(L, B, d_state)
    Cm = Cmat.reshape(L, B, d_state)

    # Hoist everything non-recurrent out of the serial 8-step chain.
    dA_all = jnp.exp(dt3[:, :, None, :] * A[None, None, :, :])   # (L,B,S,I)
    dBu_all = (dt3[:, :, None, :] * Bm[:, :, :, None]) * u3[:, :, None, :]
    C_all = Cm[:, :, :, None]                                    # (L,B,S,1)

    h = jnp.zeros((B, d_state, d_inner), jnp.float32)
    for i in range(L):                                           # fully unrolled
        h = h * dA_all[i] + dBu_all[i]
        y_scr[i * B:(i + 1) * B, :] = jnp.sum(h * C_all[i], axis=1)
    y = y_scr[...] + xc * Dp                                     # + D*u, vectorized

    y = y * _silu(z)
    out = (jnp.dot(y.astype(w_out_ref.dtype), w_out_ref[...],
                   preferred_element_type=jnp.float32)
           + b_out_ref[...])                                     # (L*B, D_MODEL)

    # residual add + LayerNorm (eps=1e-5, biased variance, like nn.LayerNorm)
    h_res = out + x2
    mean = jnp.mean(h_res, axis=-1, keepdims=True)
    var = jnp.mean((h_res - mean) ** 2, axis=-1, keepdims=True)
    act_new = ((h_res - mean) * lax.rsqrt(var + 1e-5)
               * gamma_ref[...] + beta_ref[...])
    act_scr[...] = act_new

    # ---- head + financial model: only on the last grid step ----
    @pl.when(layer == n_layers - 1)
    def _():
        pooled = jnp.mean(act_new.reshape(L, B, D), axis=0)      # (B, D_MODEL)
        h1 = jnp.maximum(
            jnp.dot(pooled, h1_w_ref[...], preferred_element_type=jnp.float32)
            + h1_b_ref[...], 0.0)
        # TODO(synk): nn.Dropout(0.1) treated as identity (inference mode).
        prm = _sigmoid(
            jnp.dot(h1, h2_w_ref[...], preferred_element_type=jnp.float32)
            + h2_b_ref[...]) * 2.0                               # (B, N_PARAMS)

        a = prm[:, 0:1]
        b = prm[:, 1:2]
        c = prm[:, 2:3]

        last1 = last1_ref[...]
        last2 = last2_ref[...]
        price     = last1[:, PRICE_IDX:PRICE_IDX + 1]
        ry_now    = last1[:, RY_IDX:RY_IDX + 1]
        ry_before = last2[:, RY_IDX:RY_IDX + 1]
        gy_now    = last1[:, GY_IDX:GY_IDX + 1]
        gy_before = last2[:, GY_IDX:GY_IDX + 1]
        ny_now    = last1[:, NY_IDX:NY_IDX + 1]
        ny_before = last2[:, NY_IDX:NY_IDX + 1]

        # matches the PyTorch source; no epsilon guard on ry_before
        o_ref[...] = (price * a * ry_now / ry_before * 2.0
                      * (b * _sigmoid(gy_now - gy_before)
                         + c * _sigmoid(ny_now - ny_before)))    # (B, 1)


# ---------------- wrapper ----------------
def mamba_model_forward(origins, x, params):
    B, L, F = x.shape
    # L-major flatten: row = l*B + b -> contiguous per-timestep slices in-kernel
    x2d = jnp.transpose(x, (1, 0, 2)).reshape(L * B, F)
    last1 = origins[:, -1, :]
    last2 = origins[:, -2, :]

    def cspec(shape):
        # full-array block, same block every grid step -> DMA'd once
        zeros = (0,) * len(shape)
        return pl.BlockSpec(shape, lambda l, z=zeros: z)

    def lspec(tail):
        # stacked per-layer weight: leading layer dim squeezed away
        zeros = (0,) * len(tail)
        return pl.BlockSpec((None,) + tail, lambda l, z=zeros: (l,) + z)

    in_specs = [
        cspec((L * B, F)),                        # x2d
        cspec((B, F)),                            # last1
        cspec((B, F)),                            # last2
        cspec((F, D_MODEL)),                      # emb_w
        cspec((1, D_MODEL)),                      # emb_b
        lspec((D_MODEL, 2 * D_INNER)),            # w_in
        lspec((1, 2 * D_INNER)),                  # b_in
        lspec((D_INNER, D_INNER + 2 * D_STATE)),  # w_xpdt  ([dt | B | C])
        lspec((1, D_INNER + 2 * D_STATE)),        # b_xpdt
        lspec((D_INNER, D_MODEL)),                # w_out
        lspec((1, D_MODEL)),                      # b_out
        lspec((D_STATE, D_INNER)),                # A = -exp(A_log).T
        lspec((1, D_INNER)),                      # D
        lspec((1, D_MODEL)),                      # gamma
        lspec((1, D_MODEL)),                      # beta
        cspec((D_MODEL, D_MODEL // 2)),           # h1_w
        cspec((1, D_MODEL // 2)),                 # h1_b
        cspec((D_MODEL // 2, N_PARAMS)),          # h2_w
        cspec((1, N_PARAMS)),                     # h2_b
    ]

    out = pl.pallas_call(
        fused_forward_kernel,
        out_shape=jax.ShapeDtypeStruct((B, 1), jnp.float32),
        grid_spec=pltpu.PrefetchScalarGridSpec(
            num_scalar_prefetch=0,
            grid=(N_LAYERS,),
            in_specs=in_specs,
            out_specs=pl.BlockSpec((B, 1), lambda l: (0, 0)),
            scratch_shapes=[
                pltpu.VMEM((L * B, D_MODEL), jnp.float32),   # running activation
                pltpu.VMEM((L * B, D_INNER), jnp.float32),   # scan output rows
            ],
        ),
        compiler_params=pltpu.CompilerParams(
            dimension_semantics=("arbitrary",)),
    )(x2d, last1, last2,
      params['emb_w'], params['emb_b'],
      params['w_in'], params['b_in'], params['w_xpdt'], params['b_xpdt'],
      params['w_out'], params['b_out'],
      params['a'], params['d'], params['gamma'], params['beta'],
      params['h1_w'], params['h1_b'], params['h2_w'], params['h2_b'])
    return out[:, 0]                          # (B,)


# ---------------- deterministic parameter init (stacked layers) ----------------
def init_params(key):
    def uniform(k, shape, fan_in):
        bound = 1.0 / jnp.sqrt(jnp.float32(fan_in))
        return jax.random.uniform(k, shape, jnp.float32, -bound, bound)

    keys = jax.random.split(key, 14)
    p = {}
    p['emb_w'] = uniform(keys[0], (INPUT_DIM, D_MODEL), INPUT_DIM)
    p['emb_b'] = uniform(keys[1], (1, D_MODEL), INPUT_DIM)

    p['w_in'] = uniform(keys[2], (N_LAYERS, D_MODEL, 2 * D_INNER),
                        D_MODEL).astype(WEIGHT_DTYPE)
    p['b_in'] = uniform(keys[3], (N_LAYERS, 1, 2 * D_INNER), D_MODEL)

    # Fuse dt_proj and x_proj into one weight: columns = [dt | B | C]
    # (dt kept first so its 256-wide slice stays lane-tile aligned).
    w_xp = uniform(keys[4], (N_LAYERS, D_INNER, 2 * D_STATE), D_INNER)
    b_xp = uniform(keys[5], (N_LAYERS, 1, 2 * D_STATE), D_INNER)
    w_dt = uniform(keys[6], (N_LAYERS, D_INNER, D_INNER), D_INNER)
    b_dt = uniform(keys[7], (N_LAYERS, 1, D_INNER), D_INNER)
    p['w_xpdt'] = jnp.concatenate([w_dt, w_xp], axis=-1).astype(WEIGHT_DTYPE)
    p['b_xpdt'] = jnp.concatenate([b_dt, b_xp], axis=-1)

    p['w_out'] = uniform(keys[8], (N_LAYERS, D_INNER, D_MODEL),
                         D_INNER).astype(WEIGHT_DTYPE)
    p['b_out'] = uniform(keys[9], (N_LAYERS, 1, D_MODEL), D_INNER)

    # A = -exp(A_log).T precomputed at init (inference-frozen weights);
    # A_log = log(arange(1..d_state)) tiled over d_inner, so in the
    # (d_state, d_inner) layout A[s, :] == -(s+1).
    p['a'] = -jnp.tile(
        jnp.arange(1, D_STATE + 1, dtype=jnp.float32)[None, :, None],
        (N_LAYERS, 1, D_INNER))
    p['d'] = jnp.ones((N_LAYERS, 1, D_INNER), jnp.float32)
    p['gamma'] = jnp.ones((N_LAYERS, 1, D_MODEL), jnp.float32)
    p['beta'] = jnp.zeros((N_LAYERS, 1, D_MODEL), jnp.float32)

    p['h1_w'] = uniform(keys[10], (D_MODEL, D_MODEL // 2), D_MODEL)
    p['h1_b'] = uniform(keys[11], (1, D_MODEL // 2), D_MODEL)
    p['h2_w'] = uniform(keys[12], (D_MODEL // 2, N_PARAMS), D_MODEL // 2)
    p['h2_b'] = uniform(keys[13], (1, N_PARAMS), D_MODEL // 2)
    return p


if __name__ == "__main__":
    key = jax.random.PRNGKey(0)
    kp, kx, ko = jax.random.split(key, 3)
    params = init_params(kp)

    x = jax.random.normal(kx, (BATCH, SEQ, INPUT_DIM), jnp.float32)
    # origins kept positive and away from zero (ry_before is a divisor)
    origins = jax.random.uniform(ko, (BATCH, SEQ, INPUT_DIM), jnp.float32, 0.5, 1.5)

    out = mamba_model_forward(origins, x, params)
    jax.block_until_ready(out)
    assert out.shape == (BATCH,) and out.dtype == jnp.float32
    assert bool(jnp.all(jnp.isfinite(out)))
    print("KERNEL_OK")
</pallas_src>

<mosaic_0001>
module attributes {stable_mosaic.version = 11 : i64} {
  func.func @fused_forward_kernel(%arg0: i32, %arg1: memref<16x8xf32, #tpu.memory_space<vmem>>, %arg2: memref<2x8xf32, #tpu.memory_space<vmem>>, %arg3: memref<2x8xf32, #tpu.memory_space<vmem>>, %arg4: memref<8x128xf32, #tpu.memory_space<vmem>>, %arg5: memref<1x128xf32, #tpu.memory_space<vmem>>, %arg6: memref<1x128x512xbf16, #tpu.memory_space<vmem>>, %arg7: memref<1x1x512xf32, #tpu.memory_space<vmem>>, %arg8: memref<1x256x288xbf16, #tpu.memory_space<vmem>>, %arg9: memref<1x1x288xf32, #tpu.memory_space<vmem>>, %arg10: memref<1x256x128xbf16, #tpu.memory_space<vmem>>, %arg11: memref<1x1x128xf32, #tpu.memory_space<vmem>>, %arg12: memref<1x16x256xf32, #tpu.memory_space<vmem>>, %arg13: memref<1x1x256xf32, #tpu.memory_space<vmem>>, %arg14: memref<1x1x128xf32, #tpu.memory_space<vmem>>, %arg15: memref<1x1x128xf32, #tpu.memory_space<vmem>>, %arg16: memref<128x64xf32, #tpu.memory_space<vmem>>, %arg17: memref<1x64xf32, #tpu.memory_space<vmem>>, %arg18: memref<64x3xf32, #tpu.memory_space<vmem>>, %arg19: memref<1x3xf32, #tpu.memory_space<vmem>>, %arg20: memref<2x1xf32, #tpu.memory_space<vmem>>, %arg21: memref<16x128xf32, #tpu.memory_space<vmem>>, %arg22: memref<16x256xf32, #tpu.memory_space<vmem>>) attributes {dimension_semantics = [#tpu.dimension_semantics<arbitrary>], iteration_bounds = array<i64: 5>, scalar_prefetch = 0 : i64, scratch_operands = 2 : i64, tpu.core_type = #tpu.core_type<tc>, window_params = [{pipeline_mode = #tpu.pipeline_mode<synchronous>, transform_indices = @transform_0, window_bounds = array<i64: 16, 8>}, {pipeline_mode = #tpu.pipeline_mode<synchronous>, transform_indices = @transform_1, window_bounds = array<i64: 2, 8>}, {pipeline_mode = #tpu.pipeline_mode<synchronous>, transform_indices = @transform_2, window_bounds = array<i64: 2, 8>}, {pipeline_mode = #tpu.pipeline_mode<synchronous>, transform_indices = @transform_3, window_bounds = array<i64: 8, 128>}, {pipeline_mode = #tpu.pipeline_mode<synchronous>, transform_indices = @transform_4, window_bounds = array<i64: 1, 128>}, {transform_indices = @transform_5, window_bounds = array<i64: 1, 128, 512>}, {transform_indices = @transform_6, window_bounds = array<i64: 1, 1, 512>}, {transform_indices = @transform_7, window_bounds = array<i64: 1, 256, 288>}, {transform_indices = @transform_8, window_bounds = array<i64: 1, 1, 288>}, {transform_indices = @transform_9, window_bounds = array<i64: 1, 256, 128>}, {transform_indices = @transform_10, window_bounds = array<i64: 1, 1, 128>}, {transform_indices = @transform_11, window_bounds = array<i64: 1, 16, 256>}, {transform_indices = @transform_12, window_bounds = array<i64: 1, 1, 256>}, {transform_indices = @transform_13, window_bounds = array<i64: 1, 1, 128>}, {transform_indices = @transform_14, window_bounds = array<i64: 1, 1, 128>}, {pipeline_mode = #tpu.pipeline_mode<synchronous>, transform_indices = @transform_15, window_bounds = array<i64: 128, 64>}, {pipeline_mode = #tpu.pipeline_mode<synchronous>, transform_indices = @transform_16, window_bounds = array<i64: 1, 64>}, {pipeline_mode = #tpu.pipeline_mode<synchronous>, transform_indices = @transform_17, window_bounds = array<i64: 64, 3>}, {pipeline_mode = #tpu.pipeline_mode<synchronous>, transform_indices = @transform_18, window_bounds = array<i64: 1, 3>}, {pipeline_mode = #tpu.pipeline_mode<synchronous>, transform_indices = @transform_19, window_bounds = array<i64: 2, 1>}]} {
    %c0_i32 = arith.constant 0 : i32
    %0 = arith.cmpi eq, %arg0, %c0_i32 : i32
    %1 = arith.extui %0 : i1 to i32
    %c0_i32_0 = arith.constant 0 : i32
    %2 = arith.cmpi ne, %1, %c0_i32_0 : i32
    scf.if %2 {
      %c0_70 = arith.constant 0 : index
      %c0_71 = arith.constant 0 : index
      %213 = vector.load %arg1[%c0_70, %c0_71] : memref<16x8xf32, #tpu.memory_space<vmem>>, vector<16x8xf32>
      %c0_72 = arith.constant 0 : index
      %c0_73 = arith.constant 0 : index
      %214 = vector.load %arg4[%c0_72, %c0_73] : memref<8x128xf32, #tpu.memory_space<vmem>>, vector<8x128xf32>
      %cst_74 = arith.constant dense<0.000000e+00> : vector<16x128xf32>
      %215 = tpu.matmul %213, %214, %cst_74 {dimension_numbers = #tpu.dot_dimension_numbers<[1], [0], [0], [1], [0, 0, 1, 1], [], []>} : vector<16x8xf32>, vector<8x128xf32>, vector<16x128xf32> -> vector<16x128xf32>
      %c0_75 = arith.constant 0 : index
      %c0_76 = arith.constant 0 : index
      %216 = vector.load %arg5[%c0_75, %c0_76] : memref<1x128xf32, #tpu.memory_space<vmem>>, vector<1x128xf32>
      %217 = vector.broadcast %216 : vector<1x128xf32> to vector<16x128xf32>
      %218 = arith.addf %215, %217 : vector<16x128xf32>
      %c0_77 = arith.constant 0 : index
      %c0_78 = arith.constant 0 : index
      %219 = vector.load %arg21[%c0_77, %c0_78] : memref<16x128xf32, #tpu.memory_space<vmem>>, vector<16x128xf32>
      tpu.vector_store %arg21[%c0_77, %c0_78], %218 {strides = array<i32>} : memref<16x128xf32, #tpu.memory_space<vmem>>, vector<16x128xf32>,
    } else {
    }
    %c0 = arith.constant 0 : index
    %c0_1 = arith.constant 0 : index
    %3 = vector.load %arg21[%c0, %c0_1] : memref<16x128xf32, #tpu.memory_space<vmem>>, vector<16x128xf32>
    %4 = arith.truncf %3 : vector<16x128xf32> to vector<16x128xbf16>
    %c0_2 = arith.constant 0 : index
    %c0_3 = arith.constant 0 : index
    %c0_4 = arith.constant 0 : index
    %5 = vector.load %arg6[%c0_2, %c0_3, %c0_4] : memref<1x128x512xbf16, #tpu.memory_space<vmem>>, vector<1x128x512xbf16>
    %6 = vector.shape_cast %5 : vector<1x128x512xbf16> to vector<128x512xbf16>
    %cst = arith.constant dense<0.000000e+00> : vector<16x512xf32>
    %7 = tpu.matmul %4, %6, %cst {dimension_numbers = #tpu.dot_dimension_numbers<[1], [0], [0], [1], [0, 0, 1, 1], [], []>} : vector<16x128xbf16>, vector<128x512xbf16>, vector<16x512xf32> -> vector<16x512xf32>
    %c0_5 = arith.constant 0 : index
    %c0_6 = arith.constant 0 : index
    %c0_7 = arith.constant 0 : index
    %8 = vector.load %arg7[%c0_5, %c0_6, %c0_7] : memref<1x1x512xf32, #tpu.memory_space<vmem>>, vector<1x1x512xf32>
    %9 = vector.shape_cast %8 : vector<1x1x512xf32> to vector<1x512xf32>
    %10 = vector.broadcast %9 : vector<1x512xf32> to vector<16x512xf32>
    %11 = arith.addf %7, %10 : vector<16x512xf32>
    %12 = vector.extract_strided_slice %11 {offsets = [0, 0], sizes = [16, 256], strides = [1, 1]} : vector<16x512xf32> to vector<16x256xf32>
    %13 = vector.extract_strided_slice %11 {offsets = [0, 256], sizes = [16, 256], strides = [1, 1]} : vector<16x512xf32> to vector<16x256xf32>
    %cst_8 = arith.constant 0.000000e+00 : f32
    %14 = vector.broadcast %cst_8 : f32 to vector<16x256xf32>
    %15 = arith.subf %14, %12 : vector<16x256xf32>
    %16 = math.exp %15 : vector<16x256xf32>
    %cst_9 = arith.constant 1.000000e+00 : f32
    %17 = vector.broadcast %cst_9 : f32 to vector<16x256xf32>
    %18 = arith.addf %17, %16 : vector<16x256xf32>
    %cst_10 = arith.constant 1.000000e+00 : f32
    %19 = vector.broadcast %cst_10 : f32 to vector<16x256xf32>
    %20 = arith.divf %19, %18 : vector<16x256xf32>
    %21 = arith.mulf %12, %20 : vector<16x256xf32>
    %22 = arith.truncf %21 : vector<16x256xf32> to vector<16x256xbf16>
    %c0_11 = arith.constant 0 : index
    %c0_12 = arith.constant 0 : index
    %c0_13 = arith.constant 0 : index
    %23 = vector.load %arg8[%c0_11, %c0_12, %c0_13] : memref<1x256x288xbf16, #tpu.memory_space<vmem>>, vector<1x256x288xbf16>
    %24 = vector.shape_cast %23 : vector<1x256x288xbf16> to vector<256x288xbf16>
    %cst_14 = arith.constant dense<0.000000e+00> : vector<16x288xf32>
    %25 = tpu.matmul %22, %24, %cst_14 {dimension_numbers = #tpu.dot_dimension_numbers<[1], [0], [0], [1], [0, 0, 1, 1], [], []>} : vector<16x256xbf16>, vector<256x288xbf16>, vector<16x288xf32> -> vector<16x288xf32>
    %c0_15 = arith.constant 0 : index
    %c0_16 = arith.constant 0 : index
    %c0_17 = arith.constant 0 : index
    %26 = vector.load %arg9[%c0_15, %c0_16, %c0_17] : memref<1x1x288xf32, #tpu.memory_space<vmem>>, vector<1x1x288xf32>
    %27 = vector.shape_cast %26 : vector<1x1x288xf32> to vector<1x288xf32>
    %28 = vector.broadcast %27 : vector<1x288xf32> to vector<16x288xf32>
    %29 = arith.addf %25, %28 : vector<16x288xf32>
    %30 = vector.extract_strided_slice %29 {offsets = [0, 0], sizes = [16, 256], strides = [1, 1]} : vector<16x288xf32> to vector<16x256xf32>
    %cst_18 = arith.constant 0.000000e+00 : f32
    %31 = vector.broadcast %cst_18 : f32 to vector<16x256xf32>
    %32 = arith.maximumf %30, %31 : vector<16x256xf32>
    %33 = math.absf %30 : vector<16x256xf32>
    %cst_19 = arith.constant 0.000000e+00 : f32
    %34 = vector.broadcast %cst_19 : f32 to vector<16x256xf32>
    %35 = arith.subf %34, %33 : vector<16x256xf32>
    %36 = math.exp %35 : vector<16x256xf32>
    %37 = math.log1p %36 : vector<16x256xf32>
    %38 = arith.addf %32, %37 : vector<16x256xf32>
    %39 = vector.extract_strided_slice %29 {offsets = [0, 256], sizes = [16, 16], strides = [1, 1]} : vector<16x288xf32> to vector<16x16xf32>
    %40 = vector.extract_strided_slice %29 {offsets = [0, 272], sizes = [16, 16], strides = [1, 1]} : vector<16x288xf32> to vector<16x16xf32>
    %c0_20 = arith.constant 0 : index
    %c0_21 = arith.constant 0 : index
    %c0_22 = arith.constant 0 : index
    %41 = vector.load %arg12[%c0_20, %c0_21, %c0_22] : memref<1x16x256xf32, #tpu.memory_space<vmem>>, vector<1x16x256xf32>
    %42 = vector.shape_cast %41 : vector<1x16x256xf32> to vector<16x256xf32>
    %c0_23 = arith.constant 0 : index
    %c0_24 = arith.constant 0 : index
    %c0_25 = arith.constant 0 : index
    %43 = vector.load %arg13[%c0_23, %c0_24, %c0_25] : memref<1x1x256xf32, #tpu.memory_space<vmem>>, vector<1x1x256xf32>
    %44 = vector.shape_cast %43 : vector<1x1x256xf32> to vector<1x256xf32>
    %45 = vector.shape_cast %21 : vector<16x256xf32> to vector<8x2x256xf32>
    %46 = vector.shape_cast %38 : vector<16x256xf32> to vector<8x2x256xf32>
    %47 = vector.shape_cast %39 : vector<16x16xf32> to vector<8x2x16xf32>
    %48 = vector.shape_cast %40 : vector<16x16xf32> to vector<8x2x16xf32>
    %49 = vector.shape_cast %46 : vector<8x2x256xf32> to vector<8x2x1x256xf32>
    %50 = vector.shape_cast %42 : vector<16x256xf32> to vector<1x1x16x256xf32>
    %51 = vector.broadcast %49 : vector<8x2x1x256xf32> to vector<8x2x16x256xf32>
    %52 = vector.broadcast %50 : vector<1x1x16x256xf32> to vector<8x2x16x256xf32>
    %53 = arith.mulf %51, %52 : vector<8x2x16x256xf32>
    %54 = math.exp %53 : vector<8x2x16x256xf32>
    %55 = vector.shape_cast %46 : vector<8x2x256xf32> to vector<8x2x1x256xf32>
    %56 = vector.shape_cast %47 : vector<8x2x16xf32> to vector<8x2x16x1xf32>
    %57 = vector.broadcast %55 : vector<8x2x1x256xf32> to vector<8x2x16x256xf32>
    %58 = vector.broadcast %56 : vector<8x2x16x1xf32> to vector<8x2x16x256xf32>
    %59 = arith.mulf %57, %58 : vector<8x2x16x256xf32>
    %60 = vector.shape_cast %45 : vector<8x2x256xf32> to vector<8x2x1x256xf32>
    %61 = vector.broadcast %60 : vector<8x2x1x256xf32> to vector<8x2x16x256xf32>
    %62 = arith.mulf %59, %61 : vector<8x2x16x256xf32>
    %63 = vector.shape_cast %48 : vector<8x2x16xf32> to vector<8x2x16x1xf32>
    %cst_26 = arith.constant 0.000000e+00 : f32
    %64 = vector.broadcast %cst_26 : f32 to vector<2x16x256xf32>
    %65 = vector.extract_strided_slice %54 {offsets = [0, 0, 0, 0], sizes = [1, 2, 16, 256], strides = [1, 1, 1, 1]} : vector<8x2x16x256xf32> to vector<1x2x16x256xf32>
    %66 = vector.shape_cast %65 : vector<1x2x16x256xf32> to vector<2x16x256xf32>
    %67 = arith.mulf %64, %66 : vector<2x16x256xf32>
    %68 = vector.extract_strided_slice %62 {offsets = [0, 0, 0, 0], sizes = [1, 2, 16, 256], strides = [1, 1, 1, 1]} : vector<8x2x16x256xf32> to vector<1x2x16x256xf32>
    %69 = vector.shape_cast %68 : vector<1x2x16x256xf32> to vector<2x16x256xf32>
    %70 = arith.addf %67, %69 : vector<2x16x256xf32>
    %71 = vector.extract_strided_slice %63 {offsets = [0, 0, 0, 0], sizes = [1, 2, 16, 1], strides = [1, 1, 1, 1]} : vector<8x2x16x1xf32> to vector<1x2x16x1xf32>
    %72 = vector.shape_cast %71 : vector<1x2x16x1xf32> to vector<2x16x1xf32>
    %73 = vector.broadcast %72 : vector<2x16x1xf32> to vector<2x16x256xf32>
    %74 = arith.mulf %70, %73 : vector<2x16x256xf32>
    %cst_27 = arith.constant dense<0.000000e+00> : vector<2x256xf32>
    %75 = vector.multi_reduction <add>, %74, %cst_27 [1] : vector<2x16x256xf32> to vector<2x256xf32>
    %c0_28 = arith.constant 0 : index
    %c0_29 = arith.constant 0 : index
    %76 = vector.load %arg22[%c0_28, %c0_29] : memref<16x256xf32, #tpu.memory_space<vmem>>, vector<2x256xf32>
    tpu.vector_store %arg22[%c0_28, %c0_29], %75 {strides = array<i32>} : memref<16x256xf32, #tpu.memory_space<vmem>>, vector<2x256xf32>,
    %77 = vector.extract_strided_slice %54 {offsets = [1, 0, 0, 0], sizes = [1, 2, 16, 256], strides = [1, 1, 1, 1]} : vector<8x2x16x256xf32> to vector<1x2x16x256xf32>
    %78 = vector.shape_cast %77 : vector<1x2x16x256xf32> to vector<2x16x256xf32>
    %79 = arith.mulf %70, %78 : vector<2x16x256xf32>
    %80 = vector.extract_strided_slice %62 {offsets = [1, 0, 0, 0], sizes = [1, 2, 16, 256], strides = [1, 1, 1, 1]} : vector<8x2x16x256xf32> to vector<1x2x16x256xf32>
    %81 = vector.shape_cast %80 : vector<1x2x16x256xf32> to vector<2x16x256xf32>
    %82 = arith.addf %79, %81 : vector<2x16x256xf32>
    %83 = vector.extract_strided_slice %63 {offsets = [1, 0, 0, 0], sizes = [1, 2, 16, 1], strides = [1, 1, 1, 1]} : vector<8x2x16x1xf32> to vector<1x2x16x1xf32>
    %84 = vector.shape_cast %83 : vector<1x2x16x1xf32> to vector<2x16x1xf32>
    %85 = vector.broadcast %84 : vector<2x16x1xf32> to vector<2x16x256xf32>
    %86 = arith.mulf %82, %85 : vector<2x16x256xf32>
    %cst_30 = arith.constant dense<0.000000e+00> : vector<2x256xf32>
    %87 = vector.multi_reduction <add>, %86, %cst_30 [1] : vector<2x16x256xf32> to vector<2x256xf32>
    %c2 = arith.constant 2 : index
    %c0_31 = arith.constant 0 : index
    %88 = vector.load %arg22[%c2, %c0_31] : memref<16x256xf32, #tpu.memory_space<vmem>>, vector<2x256xf32>
    tpu.vector_store %arg22[%c2, %c0_31], %87 {strides = array<i32>} : memref<16x256xf32, #tpu.memory_space<vmem>>, vector<2x256xf32>,
    %89 = vector.extract_strided_slice %54 {offsets = [2, 0, 0, 0], sizes = [1, 2, 16, 256], strides = [1, 1, 1, 1]} : vector<8x2x16x256xf32> to vector<1x2x16x256xf32>
    %90 = vector.shape_cast %89 : vector<1x2x16x256xf32> to vector<2x16x256xf32>
    %91 = arith.mulf %82, %90 : vector<2x16x256xf32>
    %92 = vector.extract_strided_slice %62 {offsets = [2, 0, 0, 0], sizes = [1, 2, 16, 256], strides = [1, 1, 1, 1]} : vector<8x2x16x256xf32> to vector<1x2x16x256xf32>
    %93 = vector.shape_cast %92 : vector<1x2x16x256xf32> to vector<2x16x256xf32>
    %94 = arith.addf %91, %93 : vector<2x16x256xf32>
    %95 = vector.extract_strided_slice %63 {offsets = [2, 0, 0, 0], sizes = [1, 2, 16, 1], strides = [1, 1, 1, 1]} : vector<8x2x16x1xf32> to vector<1x2x16x1xf32>
    %96 = vector.shape_cast %95 : vector<1x2x16x1xf32> to vector<2x16x1xf32>
    %97 = vector.broadcast %96 : vector<2x16x1xf32> to vector<2x16x256xf32>
    %98 = arith.mulf %94, %97 : vector<2x16x256xf32>
    %cst_32 = arith.constant dense<0.000000e+00> : vector<2x256xf32>
    %99 = vector.multi_reduction <add>, %98, %cst_32 [1] : vector<2x16x256xf32> to vector<2x256xf32>
    %c4 = arith.constant 4 : index
    %c0_33 = arith.constant 0 : index
    %100 = vector.load %arg22[%c4, %c0_33] : memref<16x256xf32, #tpu.memory_space<vmem>>, vector<2x256xf32>
    tpu.vector_store %arg22[%c4, %c0_33], %99 {strides = array<i32>} : memref<16x256xf32, #tpu.memory_space<vmem>>, vector<2x256xf32>,
    %101 = vector.extract_strided_slice %54 {offsets = [3, 0, 0, 0], sizes = [1, 2, 16, 256], strides = [1, 1, 1, 1]} : vector<8x2x16x256xf32> to vector<1x2x16x256xf32>
    %102 = vector.shape_cast %101 : vector<1x2x16x256xf32> to vector<2x16x256xf32>
    %103 = arith.mulf %94, %102 : vector<2x16x256xf32>
    %104 = vector.extract_strided_slice %62 {offsets = [3, 0, 0, 0], sizes = [1, 2, 16, 256], strides = [1, 1, 1, 1]} : vector<8x2x16x256xf32> to vector<1x2x16x256xf32>
    %105 = vector.shape_cast %104 : vector<1x2x16x256xf32> to vector<2x16x256xf32>
    %106 = arith.addf %103, %105 : vector<2x16x256xf32>
    %107 = vector.extract_strided_slice %63 {offsets = [3, 0, 0, 0], sizes = [1, 2, 16, 1], strides = [1, 1, 1, 1]} : vector<8x2x16x1xf32> to vector<1x2x16x1xf32>
    %108 = vector.shape_cast %107 : vector<1x2x16x1xf32> to vector<2x16x1xf32>
    %109 = vector.broadcast %108 : vector<2x16x1xf32> to vector<2x16x256xf32>
    %110 = arith.mulf %106, %109 : vector<2x16x256xf32>
    %cst_34 = arith.constant dense<0.000000e+00> : vector<2x256xf32>
    %111 = vector.multi_reduction <add>, %110, %cst_34 [1] : vector<2x16x256xf32> to vector<2x256xf32>
    %c6 = arith.constant 6 : index
    %c0_35 = arith.constant 0 : index
    %112 = vector.load %arg22[%c6, %c0_35] : memref<16x256xf32, #tpu.memory_space<vmem>>, vector<2x256xf32>
    tpu.vector_store %arg22[%c6, %c0_35], %111 {strides = array<i32>} : memref<16x256xf32, #tpu.memory_space<vmem>>, vector<2x256xf32>,
    %113 = vector.extract_strided_slice %54 {offsets = [4, 0, 0, 0], sizes = [1, 2, 16, 256], strides = [1, 1, 1, 1]} : vector<8x2x16x256xf32> to vector<1x2x16x256xf32>
    %114 = vector.shape_cast %113 : vector<1x2x16x256xf32> to vector<2x16x256xf32>
    %115 = arith.mulf %106, %114 : vector<2x16x256xf32>
    %116 = vector.extract_strided_slice %62 {offsets = [4, 0, 0, 0], sizes = [1, 2, 16, 256], strides = [1, 1, 1, 1]} : vector<8x2x16x256xf32> to vector<1x2x16x256xf32>
    %117 = vector.shape_cast %116 : vector<1x2x16x256xf32> to vector<2x16x256xf32>
    %118 = arith.addf %115, %117 : vector<2x16x256xf32>
    %119 = vector.extract_strided_slice %63 {offsets = [4, 0, 0, 0], sizes = [1, 2, 16, 1], strides = [1, 1, 1, 1]} : vector<8x2x16x1xf32> to vector<1x2x16x1xf32>
    %120 = vector.shape_cast %119 : vector<1x2x16x1xf32> to vector<2x16x1xf32>
    %121 = vector.broadcast %120 : vector<2x16x1xf32> to vector<2x16x256xf32>
    %122 = arith.mulf %118, %121 : vector<2x16x256xf32>
    %cst_36 = arith.constant dense<0.000000e+00> : vector<2x256xf32>
    %123 = vector.multi_reduction <add>, %122, %cst_36 [1] : vector<2x16x256xf32> to vector<2x256xf32>
    %c8 = arith.constant 8 : index
    %c0_37 = arith.constant 0 : index
    %124 = vector.load %arg22[%c8, %c0_37] : memref<16x256xf32, #tpu.memory_space<vmem>>, vector<2x256xf32>
    tpu.vector_store %arg22[%c8, %c0_37], %123 {strides = array<i32>} : memref<16x256xf32, #tpu.memory_space<vmem>>, vector<2x256xf32>,
    %125 = vector.extract_strided_slice %54 {offsets = [5, 0, 0, 0], sizes = [1, 2, 16, 256], strides = [1, 1, 1, 1]} : vector<8x2x16x256xf32> to vector<1x2x16x256xf32>
    %126 = vector.shape_cast %125 : vector<1x2x16x256xf32> to vector<2x16x256xf32>
    %127 = arith.mulf %118, %126 : vector<2x16x256xf32>
    %128 = vector.extract_strided_slice %62 {offsets = [5, 0, 0, 0], sizes = [1, 2, 16, 256], strides = [1, 1, 1, 1]} : vector<8x2x16x256xf32> to vector<1x2x16x256xf32>
    %129 = vector.shape_cast %128 : vector<1x2x16x256xf32> to vector<2x16x256xf32>
    %130 = arith.addf %127, %129 : vector<2x16x256xf32>
    %131 = vector.extract_strided_slice %63 {offsets = [5, 0, 0, 0], sizes = [1, 2, 16, 1], strides = [1, 1, 1, 1]} : vector<8x2x16x1xf32> to vector<1x2x16x1xf32>
    %132 = vector.shape_cast %131 : vector<1x2x16x1xf32> to vector<2x16x1xf32>
    %133 = vector.broadcast %132 : vector<2x16x1xf32> to vector<2x16x256xf32>
    %134 = arith.mulf %130, %133 : vector<2x16x256xf32>
    %cst_38 = arith.constant dense<0.000000e+00> : vector<2x256xf32>
    %135 = vector.multi_reduction <add>, %134, %cst_38 [1] : vector<2x16x256xf32> to vector<2x256xf32>
    %c10 = arith.constant 10 : index
    %c0_39 = arith.constant 0 : index
    %136 = vector.load %arg22[%c10, %c0_39] : memref<16x256xf32, #tpu.memory_space<vmem>>, vector<2x256xf32>
    tpu.vector_store %arg22[%c10, %c0_39], %135 {strides = array<i32>} : memref<16x256xf32, #tpu.memory_space<vmem>>, vector<2x256xf32>,
    %137 = vector.extract_strided_slice %54 {offsets = [6, 0, 0, 0], sizes = [1, 2, 16, 256], strides = [1, 1, 1, 1]} : vector<8x2x16x256xf32> to vector<1x2x16x256xf32>
    %138 = vector.shape_cast %137 : vector<1x2x16x256xf32> to vector<2x16x256xf32>
    %139 = arith.mulf %130, %138 : vector<2x16x256xf32>
    %140 = vector.extract_strided_slice %62 {offsets = [6, 0, 0, 0], sizes = [1, 2, 16, 256], strides = [1, 1, 1, 1]} : vector<8x2x16x256xf32> to vector<1x2x16x256xf32>
    %141 = vector.shape_cast %140 : vector<1x2x16x256xf32> to vector<2x16x256xf32>
    %142 = arith.addf %139, %141 : vector<2x16x256xf32>
    %143 = vector.extract_strided_slice %63 {offsets = [6, 0, 0, 0], sizes = [1, 2, 16, 1], strides = [1, 1, 1, 1]} : vector<8x2x16x1xf32> to vector<1x2x16x1xf32>
    %144 = vector.shape_cast %143 : vector<1x2x16x1xf32> to vector<2x16x1xf32>
    %145 = vector.broadcast %144 : vector<2x16x1xf32> to vector<2x16x256xf32>
    %146 = arith.mulf %142, %145 : vector<2x16x256xf32>
    %cst_40 = arith.constant dense<0.000000e+00> : vector<2x256xf32>
    %147 = vector.multi_reduction <add>, %146, %cst_40 [1] : vector<2x16x256xf32> to vector<2x256xf32>
    %c12 = arith.constant 12 : index
    %c0_41 = arith.constant 0 : index
    %148 = vector.load %arg22[%c12, %c0_41] : memref<16x256xf32, #tpu.memory_space<vmem>>, vector<2x256xf32>
    tpu.vector_store %arg22[%c12, %c0_41], %147 {strides = array<i32>} : memref<16x256xf32, #tpu.memory_space<vmem>>, vector<2x256xf32>,
    %149 = vector.extract_strided_slice %54 {offsets = [7, 0, 0, 0], sizes = [1, 2, 16, 256], strides = [1, 1, 1, 1]} : vector<8x2x16x256xf32> to vector<1x2x16x256xf32>
    %150 = vector.shape_cast %149 : vector<1x2x16x256xf32> to vector<2x16x256xf32>
    %151 = arith.mulf %142, %150 : vector<2x16x256xf32>
    %152 = vector.extract_strided_slice %62 {offsets = [7, 0, 0, 0], sizes = [1, 2, 16, 256], strides = [1, 1, 1, 1]} : vector<8x2x16x256xf32> to vector<1x2x16x256xf32>
    %153 = vector.shape_cast %152 : vector<1x2x16x256xf32> to vector<2x16x256xf32>
    %154 = arith.addf %151, %153 : vector<2x16x256xf32>
    %155 = vector.extract_strided_slice %63 {offsets = [7, 0, 0, 0], sizes = [1, 2, 16, 1], strides = [1, 1, 1, 1]} : vector<8x2x16x1xf32> to vector<1x2x16x1xf32>
    %156 = vector.shape_cast %155 : vector<1x2x16x1xf32> to vector<2x16x1xf32>
    %157 = vector.broadcast %156 : vector<2x16x1xf32> to vector<2x16x256xf32>
    %158 = arith.mulf %154, %157 : vector<2x16x256xf32>
    %cst_42 = arith.constant dense<0.000000e+00> : vector<2x256xf32>
    %159 = vector.multi_reduction <add>, %158, %cst_42 [1] : vector<2x16x256xf32> to vector<2x256xf32>
    %c14 = arith.constant 14 : index
    %c0_43 = arith.constant 0 : index
    %160 = vector.load %arg22[%c14, %c0_43] : memref<16x256xf32, #tpu.memory_space<vmem>>, vector<2x256xf32>
    tpu.vector_store %arg22[%c14, %c0_43], %159 {strides = array<i32>} : memref<16x256xf32, #tpu.memory_space<vmem>>, vector<2x256xf32>,
    %c0_44 = arith.constant 0 : index
    %c0_45 = arith.constant 0 : index
    %161 = vector.load %arg22[%c0_44, %c0_45] : memref<16x256xf32, #tpu.memory_space<vmem>>, vector<16x256xf32>
    %162 = vector.broadcast %44 : vector<1x256xf32> to vector<16x256xf32>
    %163 = arith.mulf %21, %162 : vector<16x256xf32>
    %164 = arith.addf %161, %163 : vector<16x256xf32>
    %cst_46 = arith.constant 0.000000e+00 : f32
    %165 = vector.broadcast %cst_46 : f32 to vector<16x256xf32>
    %166 = arith.subf %165, %13 : vector<16x256xf32>
    %167 = math.exp %166 : vector<16x256xf32>
    %cst_47 = arith.constant 1.000000e+00 : f32
    %168 = vector.broadcast %cst_47 : f32 to vector<16x256xf32>
    %169 = arith.addf %168, %167 : vector<16x256xf32>
    %cst_48 = arith.constant 1.000000e+00 : f32
    %170 = vector.broadcast %cst_48 : f32 to vector<16x256xf32>
    %171 = arith.divf %170, %169 : vector<16x256xf32>
    %172 = arith.mulf %13, %171 : vector<16x256xf32>
    %173 = arith.mulf %164, %172 : vector<16x256xf32>
    %174 = arith.truncf %173 : vector<16x256xf32> to vector<16x256xbf16>
    %c0_49 = arith.constant 0 : index
    %c0_50 = arith.constant 0 : index
    %c0_51 = arith.constant 0 : index
    %175 = vector.load %arg10[%c0_49, %c0_50, %c0_51] : memref<1x256x128xbf16, #tpu.memory_space<vmem>>, vector<1x256x128xbf16>
    %176 = vector.shape_cast %175 : vector<1x256x128xbf16> to vector<256x128xbf16>
    %cst_52 = arith.constant dense<0.000000e+00> : vector<16x128xf32>
    %177 = tpu.matmul %174, %176, %cst_52 {dimension_numbers = #tpu.dot_dimension_numbers<[1], [0], [0], [1], [0, 0, 1, 1], [], []>} : vector<16x256xbf16>, vector<256x128xbf16>, vector<16x128xf32> -> vector<16x128xf32>
    %c0_53 = arith.constant 0 : index
    %c0_54 = arith.constant 0 : index
    %c0_55 = arith.constant 0 : index
    %178 = vector.load %arg11[%c0_53, %c0_54, %c0_55] : memref<1x1x128xf32, #tpu.memory_space<vmem>>, vector<1x1x128xf32>
    %179 = vector.shape_cast %178 : vector<1x1x128xf32> to vector<1x128xf32>
    %180 = vector.broadcast %179 : vector<1x128xf32> to vector<16x128xf32>
    %181 = arith.addf %177, %180 : vector<16x128xf32>
    %182 = arith.addf %181, %3 : vector<16x128xf32>
    %cst_56 = arith.constant dense<0.000000e+00> : vector<16xf32>
    %183 = vector.multi_reduction <add>, %182, %cst_56 [1] : vector<16x128xf32> to vector<16xf32>
    %184 = vector.shape_cast %183 : vector<16xf32> to vector<16x1xf32>
    %cst_57 = arith.constant 1.280000e+02 : f32
    %185 = vector.broadcast %cst_57 : f32 to vector<16x1xf32>
    %186 = arith.divf %184, %185 : vector<16x1xf32>
    %187 = vector.broadcast %186 : vector<16x1xf32> to vector<16x128xf32>
    %188 = arith.subf %182, %187 : vector<16x128xf32>
    %189 = arith.mulf %188, %188 : vector<16x128xf32>
    %cst_58 = arith.constant dense<0.000000e+00> : vector<16xf32>
    %190 = vector.multi_reduction <add>, %189, %cst_58 [1] : vector<16x128xf32> to vector<16xf32>
    %191 = vector.shape_cast %190 : vector<16xf32> to vector<16x1xf32>
    %cst_59 = arith.constant 1.280000e+02 : f32
    %192 = vector.broadcast %cst_59 : f32 to vector<16x1xf32>
    %193 = arith.divf %191, %192 : vector<16x1xf32>
    %194 = vector.broadcast %186 : vector<16x1xf32> to vector<16x128xf32>
    %195 = arith.subf %182, %194 : vector<16x128xf32>
    %cst_60 = arith.constant 9.99999974E-6 : f32
    %196 = vector.broadcast %cst_60 : f32 to vector<16x1xf32>
    %197 = arith.addf %193, %196 : vector<16x1xf32>
    %198 = math.rsqrt %197 : vector<16x1xf32>
    %199 = vector.broadcast %198 : vector<16x1xf32> to vector<16x128xf32>
    %200 = arith.mulf %195, %199 : vector<16x128xf32>
    %c0_61 = arith.constant 0 : index
    %c0_62 = arith.constant 0 : index
    %c0_63 = arith.constant 0 : index
    %201 = vector.load %arg14[%c0_61, %c0_62, %c0_63] : memref<1x1x128xf32, #tpu.memory_space<vmem>>, vector<1x1x128xf32>
    %202 = vector.shape_cast %201 : vector<1x1x128xf32> to vector<1x128xf32>
    %203 = vector.broadcast %202 : vector<1x128xf32> to vector<16x128xf32>
    %204 = arith.mulf %200, %203 : vector<16x128xf32>
    %c0_64 = arith.constant 0 : index
    %c0_65 = arith.constant 0 : index
    %c0_66 = arith.constant 0 : index
    %205 = vector.load %arg15[%c0_64, %c0_65, %c0_66] : memref<1x1x128xf32, #tpu.memory_space<vmem>>, vector<1x1x128xf32>
    %206 = vector.shape_cast %205 : vector<1x1x128xf32> to vector<1x128xf32>
    %207 = vector.broadcast %206 : vector<1x128xf32> to vector<16x128xf32>
    %208 = arith.addf %204, %207 : vector<16x128xf32>
    %c0_67 = arith.constant 0 : index
    %c0_68 = arith.constant 0 : index
    %209 = vector.load %arg21[%c0_67, %c0_68] : memref<16x128xf32, #tpu.memory_space<vmem>>, vector<16x128xf32>
    tpu.vector_store %arg21[%c0_67, %c0_68], %208 {strides = array<i32>} : memref<16x128xf32, #tpu.memory_space<vmem>>, vector<16x128xf32>,
    %c4_i32 = arith.constant 4 : i32
    %210 = arith.cmpi eq, %arg0, %c4_i32 : i32
    %211 = arith.extui %210 : i1 to i32
    %c0_i32_69 = arith.constant 0 : i32
    %212 = arith.cmpi ne, %211, %c0_i32_69 : i32
    scf.if %212 {
      %213 = vector.shape_cast %208 : vector<16x128xf32> to vector<8x2x128xf32>
      %cst_70 = arith.constant dense<0.000000e+00> : vector<2x128xf32>
      %214 = vector.multi_reduction <add>, %213, %cst_70 [0] : vector<8x2x128xf32> to vector<2x128xf32>
      %cst_71 = arith.constant 8.000000e+00 : f32
      %215 = vector.broadcast %cst_71 : f32 to vector<2x128xf32>
      %216 = arith.divf %214, %215 : vector<2x128xf32>
      %c0_72 = arith.constant 0 : index
      %c0_73 = arith.constant 0 : index
      %217 = vector.load %arg16[%c0_72, %c0_73] : memref<128x64xf32, #tpu.memory_space<vmem>>, vector<128x64xf32>
      %cst_74 = arith.constant dense<0.000000e+00> : vector<2x64xf32>
      %218 = tpu.matmul %216, %217, %cst_74 {dimension_numbers = #tpu.dot_dimension_numbers<[1], [0], [0], [1], [0, 0, 1, 1], [], []>} : vector<2x128xf32>, vector<128x64xf32>, vector<2x64xf32> -> vector<2x64xf32>
      %c0_75 = arith.constant 0 : index
      %c0_76 = arith.constant 0 : index
      %219 = vector.load %arg17[%c0_75, %c0_76] : memref<1x64xf32, #tpu.memory_space<vmem>>, vector<1x64xf32>
      %220 = vector.broadcast %219 : vector<1x64xf32> to vector<2x64xf32>
      %221 = arith.addf %218, %220 : vector<2x64xf32>
      %cst_77 = arith.constant 0.000000e+00 : f32
      %222 = vector.broadcast %cst_77 : f32 to vector<2x64xf32>
      %223 = arith.maximumf %221, %222 : vector<2x64xf32>
      %c0_78 = arith.constant 0 : index
      %c0_79 = arith.constant 0 : index
      %224 = vector.load %arg18[%c0_78, %c0_79] : memref<64x3xf32, #tpu.memory_space<vmem>>, vector<64x3xf32>
      %cst_80 = arith.constant dense<0.000000e+00> : vector<2x3xf32>
      %225 = tpu.matmul %223, %224, %cst_80 {dimension_numbers = #tpu.dot_dimension_numbers<[1], [0], [0], [1], [0, 0, 1, 1], [], []>} : vector<2x64xf32>, vector<64x3xf32>, vector<2x3xf32> -> vector<2x3xf32>
      %c0_81 = arith.constant 0 : index
      %c0_82 = arith.constant 0 : index
      %226 = vector.load %arg19[%c0_81, %c0_82] : memref<1x3xf32, #tpu.memory_space<vmem>>, vector<1x3xf32>
      %227 = vector.broadcast %226 : vector<1x3xf32> to vector<2x3xf32>
      %228 = arith.addf %225, %227 : vector<2x3xf32>
      %cst_83 = arith.constant 0.000000e+00 : f32
      %229 = vector.broadcast %cst_83 : f32 to vector<2x3xf32>
      %230 = arith.subf %229, %228 : vector<2x3xf32>
      %231 = math.exp %230 : vector<2x3xf32>
      %cst_84 = arith.constant 1.000000e+00 : f32
      %232 = vector.broadcast %cst_84 : f32 to vector<2x3xf32>
      %233 = arith.addf %232, %231 : vector<2x3xf32>
      %cst_85 = arith.constant 1.000000e+00 : f32
      %234 = vector.broadcast %cst_85 : f32 to vector<2x3xf32>
      %235 = arith.divf %234, %233 : vector<2x3xf32>
      %cst_86 = arith.constant 2.000000e+00 : f32
      %236 = vector.broadcast %cst_86 : f32 to vector<2x3xf32>
      %237 = arith.mulf %235, %236 : vector<2x3xf32>
      %238 = vector.extract_strided_slice %237 {offsets = [0, 0], sizes = [2, 1], strides = [1, 1]} : vector<2x3xf32> to vector<2x1xf32>
      %239 = vector.extract_strided_slice %237 {offsets = [0, 1], sizes = [2, 1], strides = [1, 1]} : vector<2x3xf32> to vector<2x1xf32>
      %240 = vector.extract_strided_slice %237 {offsets = [0, 2], sizes = [2, 1], strides = [1, 1]} : vector<2x3xf32> to vector<2x1xf32>
      %c0_87 = arith.constant 0 : index
      %c0_88 = arith.constant 0 : index
      %241 = vector.load %arg2[%c0_87, %c0_88] : memref<2x8xf32, #tpu.memory_space<vmem>>, vector<2x8xf32>
      %c0_89 = arith.constant 0 : index
      %c0_90 = arith.constant 0 : index
      %242 = vector.load %arg3[%c0_89, %c0_90] : memref<2x8xf32, #tpu.memory_space<vmem>>, vector<2x8xf32>
      %243 = vector.extract_strided_slice %241 {offsets = [0, 0], sizes = [2, 1], strides = [1, 1]} : vector<2x8xf32> to vector<2x1xf32>
      %244 = vector.extract_strided_slice %241 {offsets = [0, 1], sizes = [2, 1], strides = [1, 1]} : vector<2x8xf32> to vector<2x1xf32>
      %245 = vector.extract_strided_slice %242 {offsets = [0, 1], sizes = [2, 1], strides = [1, 1]} : vector<2x8xf32> to vector<2x1xf32>
      %246 = vector.extract_strided_slice %241 {offsets = [0, 2], sizes = [2, 1], strides = [1, 1]} : vector<2x8xf32> to vector<2x1xf32>
      %247 = vector.extract_strided_slice %242 {offsets = [0, 2], sizes = [2, 1], strides = [1, 1]} : vector<2x8xf32> to vector<2x1xf32>
      %248 = vector.extract_strided_slice %241 {offsets = [0, 3], sizes = [2, 1], strides = [1, 1]} : vector<2x8xf32> to vector<2x1xf32>
      %249 = vector.extract_strided_slice %242 {offsets = [0, 3], sizes = [2, 1], strides = [1, 1]} : vector<2x8xf32> to vector<2x1xf32>
      %250 = arith.mulf %243, %238 : vector<2x1xf32>
      %251 = arith.mulf %250, %244 : vector<2x1xf32>
      %252 = arith.divf %251, %245 : vector<2x1xf32>
      %cst_91 = arith.constant 2.000000e+00 : f32
      %253 = vector.broadcast %cst_91 : f32 to vector<2x1xf32>
      %254 = arith.mulf %252, %253 : vector<2x1xf32>
      %255 = arith.subf %246, %247 : vector<2x1xf32>
      %cst_92 = arith.constant 0.000000e+00 : f32
      %256 = vector.broadcast %cst_92 : f32 to vector<2x1xf32>
      %257 = arith.subf %256, %255 : vector<2x1xf32>
      %258 = math.exp %257 : vector<2x1xf32>
      %cst_93 = arith.constant 1.000000e+00 : f32
      %259 = vector.broadcast %cst_93 : f32 to vector<2x1xf32>
      %260 = arith.addf %259, %258 : vector<2x1xf32>
      %cst_94 = arith.constant 1.000000e+00 : f32
      %261 = vector.broadcast %cst_94 : f32 to vector<2x1xf32>
      %262 = arith.divf %261, %260 : vector<2x1xf32>
      %263 = arith.mulf %239, %262 : vector<2x1xf32>
      %264 = arith.subf %248, %249 : vector<2x1xf32>
      %cst_95 = arith.constant 0.000000e+00 : f32
      %265 = vector.broadcast %cst_95 : f32 to vector<2x1xf32>
      %266 = arith.subf %265, %264 : vector<2x1xf32>
      %267 = math.exp %266 : vector<2x1xf32>
      %cst_96 = arith.constant 1.000000e+00 : f32
      %268 = vector.broadcast %cst_96 : f32 to vector<2x1xf32>
      %269 = arith.addf %268, %267 : vector<2x1xf32>
      %cst_97 = arith.constant 1.000000e+00 : f32
      %270 = vector.broadcast %cst_97 : f32 to vector<2x1xf32>
      %271 = arith.divf %270, %269 : vector<2x1xf32>
      %272 = arith.mulf %240, %271 : vector<2x1xf32>
      %273 = arith.addf %263, %272 : vector<2x1xf32>
      %274 = arith.mulf %254, %273 : vector<2x1xf32>
      %c0_98 = arith.constant 0 : index
      %c0_99 = arith.constant 0 : index
      %275 = vector.load %arg20[%c0_98, %c0_99] : memref<2x1xf32, #tpu.memory_space<vmem>>, vector<2x1xf32>
      tpu.vector_store %arg20[%c0_98, %c0_99], %274 {strides = array<i32>} : memref<2x1xf32, #tpu.memory_space<vmem>>, vector<2x1xf32>,
    } else {
    }
    return
  }
  func.func @transform_0(%arg0: i32) -> (i32, i32) {
    %c0_i32 = arith.constant 0 : i32
    %c0_i32_0 = arith.constant 0 : i32
    %c0_i32_1 = arith.constant 0 : i32
    return %c0_i32, %c0_i32_0 : i32, i32
  }
  func.func @transform_1(%arg0: i32) -> (i32, i32) {
    %c0_i32 = arith.constant 0 : i32
    %c0_i32_0 = arith.constant 0 : i32
    %c0_i32_1 = arith.constant 0 : i32
    return %c0_i32, %c0_i32_0 : i32, i32
  }
  func.func @transform_2(%arg0: i32) -> (i32, i32) {
    %c0_i32 = arith.constant 0 : i32
    %c0_i32_0 = arith.constant 0 : i32
    %c0_i32_1 = arith.constant 0 : i32
    return %c0_i32, %c0_i32_0 : i32, i32
  }
  func.func @transform_3(%arg0: i32) -> (i32, i32) {
    %c0_i32 = arith.constant 0 : i32
    %c0_i32_0 = arith.constant 0 : i32
    %c0_i32_1 = arith.constant 0 : i32
    return %c0_i32, %c0_i32_0 : i32, i32
  }
  func.func @transform_4(%arg0: i32) -> (i32, i32) {
    %c0_i32 = arith.constant 0 : i32
    %c0_i32_0 = arith.constant 0 : i32
    %c0_i32_1 = arith.constant 0 : i32
    return %c0_i32, %c0_i32_0 : i32, i32
  }
  func.func @transform_5(%arg0: i32) -> (i32, i32, i32) {
    %c0_i32 = arith.constant 0 : i32
    %c0_i32_0 = arith.constant 0 : i32
    %c0_i32_1 = arith.constant 0 : i32
    return %arg0, %c0_i32, %c0_i32_0 : i32, i32, i32
  }
  func.func @transform_6(%arg0: i32) -> (i32, i32, i32) {
    %c0_i32 = arith.constant 0 : i32
    %c0_i32_0 = arith.constant 0 : i32
    %c0_i32_1 = arith.constant 0 : i32
    return %arg0, %c0_i32, %c0_i32_0 : i32, i32, i32
  }
  func.func @transform_7(%arg0: i32) -> (i32, i32, i32) {
    %c0_i32 = arith.constant 0 : i32
    %c0_i32_0 = arith.constant 0 : i32
    %c0_i32_1 = arith.constant 0 : i32
    return %arg0, %c0_i32, %c0_i32_0 : i32, i32, i32
  }
  func.func @transform_8(%arg0: i32) -> (i32, i32, i32) {
    %c0_i32 = arith.constant 0 : i32
    %c0_i32_0 = arith.constant 0 : i32
    %c0_i32_1 = arith.constant 0 : i32
    return %arg0, %c0_i32, %c0_i32_0 : i32, i32, i32
  }
  func.func @transform_9(%arg0: i32) -> (i32, i32, i32) {
    %c0_i32 = arith.constant 0 : i32
    %c0_i32_0 = arith.constant 0 : i32
    %c0_i32_1 = arith.constant 0 : i32
    return %arg0, %c0_i32, %c0_i32_0 : i32, i32, i32
  }
  func.func @transform_10(%arg0: i32) -> (i32, i32, i32) {
    %c0_i32 = arith.constant 0 : i32
    %c0_i32_0 = arith.constant 0 : i32
    %c0_i32_1 = arith.constant 0 : i32
    return %arg0, %c0_i32, %c0_i32_0 : i32, i32, i32
  }
  func.func @transform_11(%arg0: i32) -> (i32, i32, i32) {
    %c0_i32 = arith.constant 0 : i32
    %c0_i32_0 = arith.constant 0 : i32
    %c0_i32_1 = arith.constant 0 : i32
    return %arg0, %c0_i32, %c0_i32_0 : i32, i32, i32
  }
  func.func @transform_12(%arg0: i32) -> (i32, i32, i32) {
    %c0_i32 = arith.constant 0 : i32
    %c0_i32_0 = arith.constant 0 : i32
    %c0_i32_1 = arith.constant 0 : i32
    return %arg0, %c0_i32, %c0_i32_0 : i32, i32, i32
  }
  func.func @transform_13(%arg0: i32) -> (i32, i32, i32) {
    %c0_i32 = arith.constant 0 : i32
    %c0_i32_0 = arith.constant 0 : i32
    %c0_i32_1 = arith.constant 0 : i32
    return %arg0, %c0_i32, %c0_i32_0 : i32, i32, i32
  }
  func.func @transform_14(%arg0: i32) -> (i32, i32, i32) {
    %c0_i32 = arith.constant 0 : i32
    %c0_i32_0 = arith.constant 0 : i32
    %c0_i32_1 = arith.constant 0 : i32
    return %arg0, %c0_i32, %c0_i32_0 : i32, i32, i32
  }
  func.func @transform_15(%arg0: i32) -> (i32, i32) {
    %c0_i32 = arith.constant 0 : i32
    %c0_i32_0 = arith.constant 0 : i32
    %c0_i32_1 = arith.constant 0 : i32
    return %c0_i32, %c0_i32_0 : i32, i32
  }
  func.func @transform_16(%arg0: i32) -> (i32, i32) {
    %c0_i32 = arith.constant 0 : i32
    %c0_i32_0 = arith.constant 0 : i32
    %c0_i32_1 = arith.constant 0 : i32
    return %c0_i32, %c0_i32_0 : i32, i32
  }
  func.func @transform_17(%arg0: i32) -> (i32, i32) {
    %c0_i32 = arith.constant 0 : i32
    %c0_i32_0 = arith.constant 0 : i32
    %c0_i32_1 = arith.constant 0 : i32
    return %c0_i32, %c0_i32_0 : i32, i32
  }
  func.func @transform_18(%arg0: i32) -> (i32, i32) {
    %c0_i32 = arith.constant 0 : i32
    %c0_i32_0 = arith.constant 0 : i32
    %c0_i32_1 = arith.constant 0 : i32
    return %c0_i32, %c0_i32_0 : i32, i32
  }
  func.func @transform_19(%arg0: i32) -> (i32, i32) {
    %c0_i32 = arith.constant 0 : i32
    %c0_i32_0 = arith.constant 0 : i32
    %c0_i32_1 = arith.constant 0 : i32
    return %c0_i32, %c0_i32_0 : i32, i32
  }
}

</mosaic_0001>

<llo_original>
// kernel: tpu_custom_call.1
$region0: #{tpu_custom_call.1}
  #allocation0 [shape = 'u32[]', space=smem, size = 0x4, offset = 0x4, fixed_abs, tag = 'smem constant byte address 0x4 - core index']
  #allocation1 [shape = 'u32[144,128]{1,0:T(1,128)}', space=vmem, size = 0x12000, scoped, tag = 'internal scratch']
  #allocation2 [shape = 'f32[16,128]{1,0:T(8,128)}', space=vmem, size = 0x2000, scoped, tag = 'scratch operand']
  #allocation3 [shape = 'f32[16,256]{1,0:T(8,128)}', space=vmem, size = 0x4000, scoped, tag = 'scratch operand']
  %s0 = inlined_call_operand.vmem [shape: f32[16,8], index: 0, kind: input, shape index: {}]
  %s1 = inlined_call_operand.vmem [shape: f32[2,8], index: 1, kind: input, shape index: {}]
  %s2 = inlined_call_operand.vmem [shape: f32[2,8], index: 2, kind: input, shape index: {}]
  %s3 = inlined_call_operand.vmem [shape: f32[8,128], index: 3, kind: input, shape index: {}]
  %s4 = inlined_call_operand.vmem [shape: f32[1,128], index: 4, kind: input, shape index: {}]
  %s5 = inlined_call_operand.vmem [shape: bf16[5,128,512], index: 5, kind: input, shape index: {}]
  %s6 = inlined_call_operand.vmem [shape: f32[5,1,512], index: 6, kind: input, shape index: {}]
  %s7 = inlined_call_operand.vmem [shape: bf16[5,256,288], index: 7, kind: input, shape index: {}]
  %s8 = inlined_call_operand.vmem [shape: f32[5,1,288], index: 8, kind: input, shape index: {}]
  %s9 = inlined_call_operand.vmem [shape: bf16[5,256,128], index: 9, kind: input, shape index: {}]
  %s10 = inlined_call_operand.vmem [shape: f32[5,1,128], index: 10, kind: input, shape index: {}]
  %s11 = inlined_call_operand.vmem [shape: f32[5,16,256], index: 11, kind: input, shape index: {}]
  %s12 = inlined_call_operand.vmem [shape: f32[5,1,256], index: 12, kind: input, shape index: {}]
  %s13 = inlined_call_operand.vmem [shape: f32[5,1,128], index: 13, kind: input, shape index: {}]
  %s14 = inlined_call_operand.vmem [shape: f32[5,1,128], index: 14, kind: input, shape index: {}]
  %s15 = inlined_call_operand.vmem [shape: f32[128,64], index: 15, kind: input, shape index: {}]
  %s16 = inlined_call_operand.vmem [shape: f32[1,64], index: 16, kind: input, shape index: {}]
  %s17 = inlined_call_operand.vmem [shape: f32[64,3], index: 17, kind: input, shape index: {}]
  %s18 = inlined_call_operand.vmem [shape: f32[1,3], index: 18, kind: input, shape index: {}]
  %s19 = inlined_call_operand.vmem [shape: f32[2,1], index: 19, kind: output, shape index: {}]
  %s20 = sld [smem:[#allocation0]]
  $region117: #{tpu_custom_call.1} parent=0
    _
  %s22 = ssub.s32 1, %s20
  %s23 = scalar_select 0, %s22, %s20
  loop: start=0, step=1, limit=7
  $region2: #{tpu_custom_call.1} parent=0 // loop_pre_header
    _
  $region3: #{tpu_custom_call.1} parent=0 // loop_header
    %s25 = sphi 0, %s29
    %p26 = scmp.ge.s32.totalorder %s25, 7
    %s33 = sphi 0, %s33
    %s35 = sphi 0, %s33
    %s36 = sphi 0, %s35
    %s50 = sphi 0, %s36
    %s54 = sphi 0, %s54
    %s56 = sphi 0, %s54
    %s57 = sphi 0, %s56
    %s71 = sphi 0, %s57
    %s75 = sphi 0, %s75
    %s77 = sphi 0, %s75
    %s78 = sphi 0, %s77
    %s92 = sphi 0, %s78
    %s96 = sphi 0, %s96
    %s98 = sphi 0, %s96
    %s99 = sphi 0, %s98
    %s113 = sphi 0, %s99
    %s117 = sphi 0, %s117
    %s119 = sphi 0, %s117
    %s120 = sphi 0, %s119
    %s134 = sphi 0, %s120
    %s140 = sphi 0, %s142
    %s143 = sphi 0, %s140
    %s144 = sphi 0, %s143
    %s160 = sphi 0, %s144
    %s166 = sphi 0, %s168
    %s169 = sphi 0, %s166
    %s170 = sphi 0, %s169
    %s186 = sphi 0, %s170
    %s192 = sphi 0, %s194
    %s195 = sphi 0, %s192
    %s196 = sphi 0, %s195
    %s212 = sphi 0, %s196
    %s218 = sphi 0, %s220
    %s221 = sphi 0, %s218
    %s222 = sphi 0, %s221
    %s238 = sphi 0, %s222
    %s244 = sphi 0, %s246
    %s247 = sphi 0, %s244
    %s248 = sphi 0, %s247
    %s264 = sphi 0, %s248
    %s270 = sphi 0, %s272
    %s273 = sphi 0, %s270
    %s274 = sphi 0, %s273
    %s290 = sphi 0, %s274
    %s296 = sphi 0, %s298
    %s299 = sphi 0, %s296
    %s300 = sphi 0, %s299
    %s316 = sphi 0, %s300
    %s322 = sphi 0, %s324
    %s325 = sphi 0, %s322
    %s326 = sphi 0, %s325
    %s342 = sphi 0, %s326
    %s348 = sphi 0, %s350
    %s351 = sphi 0, %s348
    %s352 = sphi 0, %s351
    %s368 = sphi 0, %s352
    %s374 = sphi 0, %s376
    %s377 = sphi 0, %s374
    %s378 = sphi 0, %s377
    %s394 = sphi 0, %s378
    %s398 = sphi 0, %s398
    %s400 = sphi 0, %s398
    %s401 = sphi 0, %s400
    %s415 = sphi 0, %s401
    %s419 = sphi 0, %s419
    %s421 = sphi 0, %s419
    %s422 = sphi 0, %s421
    %s436 = sphi 0, %s422
    %s440 = sphi 0, %s440
    %s442 = sphi 0, %s440
    %s443 = sphi 0, %s442
    %s457 = sphi 0, %s443
    %s461 = sphi 0, %s461
    %s463 = sphi 0, %s461
    %s464 = sphi 0, %s463
    %s478 = sphi 0, %s464
    %s482 = sphi 0, %s482
    %s484 = sphi 0, %s482
    %s485 = sphi 0, %s484
    %s499 = sphi 0, %s485
  $region4: #{tpu_custom_call.1} parent=0 // loop_header_branch
    %28 = sbr.rel (%p26) target = $region8
  $region5: #{tpu_custom_call.1} parent=0 // loop_body
    %s30 = ssub.s32 %s25, 1
    %s31 = ssub.s32 %s25, 2
    %s32 = sadd.s32 %s25, 1
    %s34 = sadd.s32 %s33, 1
    %p37 = scmp.eq.s32.totalorder %s25, 4
    %p38 = scmp.ne.s32.totalorder %s33, %s35
    %p39 = scmp.eq.s32.totalorder %s25, 0
    %p40 = por %p38, %p39
    %p41 = scmp.ne.s32.totalorder %s33, %s35
    %p42 = scmp.eq.s32.totalorder %s30, 4
    %p43 = por %p41, %p42
    %p44 = scmp.ne.s32.totalorder %s35, %s36
    %p45 = scmp.eq.s32.totalorder %s30, 0
    %p46 = por %p44, %p45
    %p47 = scmp.ne.s32.totalorder %s35, %s36
    %p48 = scmp.eq.s32.totalorder %s31, 4
    %p49 = por %p47, %p48
    %p51 = scmp.ne.s32.totalorder %s36, %s50
    %p52 = scmp.eq.s32.totalorder %s31, 0
    %p53 = por %p51, %p52
    %s55 = sadd.s32 %s54, 1
    %p58 = scmp.eq.s32.totalorder %s25, 4
    %p59 = scmp.ne.s32.totalorder %s54, %s56
    %p60 = scmp.eq.s32.totalorder %s25, 0
    %p61 = por %p59, %p60
    %p62 = scmp.ne.s32.totalorder %s54, %s56
    %p63 = scmp.eq.s32.totalorder %s30, 4
    %p64 = por %p62, %p63
    %p65 = scmp.ne.s32.totalorder %s56, %s57
    %p66 = scmp.eq.s32.totalorder %s30, 0
    %p67 = por %p65, %p66
    %p68 = scmp.ne.s32.totalorder %s56, %s57
    %p69 = scmp.eq.s32.totalorder %s31, 4
    %p70 = por %p68, %p69
    %p72 = scmp.ne.s32.totalorder %s57, %s71
    %p73 = scmp.eq.s32.totalorder %s31, 0
    %p74 = por %p72, %p73
    %s76 = sadd.s32 %s75, 1
    %p79 = scmp.eq.s32.totalorder %s25, 4
    %p80 = scmp.ne.s32.totalorder %s75, %s77
    %p81 = scmp.eq.s32.totalorder %s25, 0
    %p82 = por %p80, %p81
    %p83 = scmp.ne.s32.totalorder %s75, %s77
    %p84 = scmp.eq.s32.totalorder %s30, 4
    %p85 = por %p83, %p84
    %p86 = scmp.ne.s32.totalorder %s77, %s78
    %p87 = scmp.eq.s32.totalorder %s30, 0
    %p88 = por %p86, %p87
    %p89 = scmp.ne.s32.totalorder %s77, %s78
    %p90 = scmp.eq.s32.totalorder %s31, 4
    %p91 = por %p89, %p90
    %p93 = scmp.ne.s32.totalorder %s78, %s92
    %p94 = scmp.eq.s32.totalorder %s31, 0
    %p95 = por %p93, %p94
    %s97 = sadd.s32 %s96, 1
    %p100 = scmp.eq.s32.totalorder %s25, 4
    %p101 = scmp.ne.s32.totalorder %s96, %s98
    %p102 = scmp.eq.s32.totalorder %s25, 0
    %p103 = por %p101, %p102
    %p104 = scmp.ne.s32.totalorder %s96, %s98
    %p105 = scmp.eq.s32.totalorder %s30, 4
    %p106 = por %p104, %p105
    %p107 = scmp.ne.s32.totalorder %s98, %s99
    %p108 = scmp.eq.s32.totalorder %s30, 0
    %p109 = por %p107, %p108
    %p110 = scmp.ne.s32.totalorder %s98, %s99
    %p111 = scmp.eq.s32.totalorder %s31, 4
    %p112 = por %p110, %p111
    %p114 = scmp.ne.s32.totalorder %s99, %s113
    %p115 = scmp.eq.s32.totalorder %s31, 0
    %p116 = por %p114, %p115
    %s118 = sadd.s32 %s117, 1
    %p121 = scmp.eq.s32.totalorder %s25, 4
    %p122 = scmp.ne.s32.totalorder %s117, %s119
    %p123 = scmp.eq.s32.totalorder %s25, 0
    %p124 = por %p122, %p123
    %p125 = scmp.ne.s32.totalorder %s117, %s119
    %p126 = scmp.eq.s32.totalorder %s30, 4
    %p127 = por %p125, %p126
    %p128 = scmp.ne.s32.totalorder %s119, %s120
    %p129 = scmp.eq.s32.totalorder %s30, 0
    %p130 = por %p128, %p129
    %p131 = scmp.ne.s32.totalorder %s119, %s120
    %p132 = scmp.eq.s32.totalorder %s31, 4
    %p133 = por %p131, %p132
    %p135 = scmp.ne.s32.totalorder %s120, %s134
    %p136 = scmp.eq.s32.totalorder %s31, 0
    %p137 = por %p135, %p136
    %s138 = ssub.s32 %s25, %s32
    %p139 = scmp.eq.s32.totalorder %s138, 0
    %s141 = sadd.s32 %s140, 1
    %s142 = scalar_select %p139, %s140, %s141
    %p145 = pneg %p139
    %p146 = scmp.eq.s32.totalorder %s25, 4
    %p147 = por %p145, %p146
    %p148 = scmp.ne.s32.totalorder %s140, %s143
    %p149 = scmp.eq.s32.totalorder %s25, 0
    %p150 = por %p148, %p149
    %p151 = scmp.ne.s32.totalorder %s140, %s143
    %p152 = scmp.eq.s32.totalorder %s30, 4
    %p153 = por %p151, %p152
    %p154 = scmp.ne.s32.totalorder %s143, %s144
    %p155 = scmp.eq.s32.totalorder %s30, 0
    %p156 = por %p154, %p155
    %p157 = scmp.ne.s32.totalorder %s143, %s144
    %p158 = scmp.eq.s32.totalorder %s31, 4
    %p159 = por %p157, %p158
    %p161 = scmp.ne.s32.totalorder %s144, %s160
    %p162 = scmp.eq.s32.totalorder %s31, 0
    %p163 = por %p161, %p162
    %s164 = ssub.s32 %s25, %s32
    %p165 = scmp.eq.s32.totalorder %s164, 0
    %s167 = sadd.s32 %s166, 1
    %s168 = scalar_select %p165, %s166, %s167
    %p171 = pneg %p165
    %p172 = scmp.eq.s32.totalorder %s25, 4
    %p173 = por %p171, %p172
    %p174 = scmp.ne.s32.totalorder %s166, %s169
    %p175 = scmp.eq.s32.totalorder %s25, 0
    %p176 = por %p174, %p175
    %p177 = scmp.ne.s32.totalorder %s166, %s169
    %p178 = scmp.eq.s32.totalorder %s30, 4
    %p179 = por %p177, %p178
    %p180 = scmp.ne.s32.totalorder %s169, %s170
    %p181 = scmp.eq.s32.totalorder %s30, 0
    %p182 = por %p180, %p181
    %p183 = scmp.ne.s32.totalorder %s169, %s170
    %p184 = scmp.eq.s32.totalorder %s31, 4
    %p185 = por %p183, %p184
    %p187 = scmp.ne.s32.totalorder %s170, %s186
    %p188 = scmp.eq.s32.totalorder %s31, 0
    %p189 = por %p187, %p188
    %s190 = ssub.s32 %s25, %s32
    %p191 = scmp.eq.s32.totalorder %s190, 0
    %s193 = sadd.s32 %s192, 1
    %s194 = scalar_select %p191, %s192, %s193
    %p197 = pneg %p191
    %p198 = scmp.eq.s32.totalorder %s25, 4
    %p199 = por %p197, %p198
    %p200 = scmp.ne.s32.totalorder %s192, %s195
    %p201 = scmp.eq.s32.totalorder %s25, 0
    %p202 = por %p200, %p201
    %p203 = scmp.ne.s32.totalorder %s192, %s195
    %p204 = scmp.eq.s32.totalorder %s30, 4
    %p205 = por %p203, %p204
    %p206 = scmp.ne.s32.totalorder %s195, %s196
    %p207 = scmp.eq.s32.totalorder %s30, 0
    %p208 = por %p206, %p207
    %p209 = scmp.ne.s32.totalorder %s195, %s196
    %p210 = scmp.eq.s32.totalorder %s31, 4
    %p211 = por %p209, %p210
    %p213 = scmp.ne.s32.totalorder %s196, %s212
    %p214 = scmp.eq.s32.totalorder %s31, 0
    %p215 = por %p213, %p214
    %s216 = ssub.s32 %s25, %s32
    %p217 = scmp.eq.s32.totalorder %s216, 0
    %s219 = sadd.s32 %s218, 1
    %s220 = scalar_select %p217, %s218, %s219
    %p223 = pneg %p217
    %p224 = scmp.eq.s32.totalorder %s25, 4
    %p225 = por %p223, %p224
    %p226 = scmp.ne.s32.totalorder %s218, %s221
    %p227 = scmp.eq.s32.totalorder %s25, 0
    %p228 = por %p226, %p227
    %p229 = scmp.ne.s32.totalorder %s218, %s221
    %p230 = scmp.eq.s32.totalorder %s30, 4
    %p231 = por %p229, %p230
    %p232 = scmp.ne.s32.totalorder %s221, %s222
    %p233 = scmp.eq.s32.totalorder %s30, 0
    %p234 = por %p232, %p233
    %p235 = scmp.ne.s32.totalorder %s221, %s222
    %p236 = scmp.eq.s32.totalorder %s31, 4
    %p237 = por %p235, %p236
    %p239 = scmp.ne.s32.totalorder %s222, %s238
    %p240 = scmp.eq.s32.totalorder %s31, 0
    %p241 = por %p239, %p240
    %s242 = ssub.s32 %s25, %s32
    %p243 = scmp.eq.s32.totalorder %s242, 0
    %s245 = sadd.s32 %s244, 1
    %s246 = scalar_select %p243, %s244, %s245
    %p249 = pneg %p243
    %p250 = scmp.eq.s32.totalorder %s25, 4
    %p251 = por %p249, %p250
    %p252 = scmp.ne.s32.totalorder %s244, %s247
    %p253 = scmp.eq.s32.totalorder %s25, 0
    %p254 = por %p252, %p253
    %p255 = scmp.ne.s32.totalorder %s244, %s247
    %p256 = scmp.eq.s32.totalorder %s30, 4
    %p257 = por %p255, %p256
    %p258 = scmp.ne.s32.totalorder %s247, %s248
    %p259 = scmp.eq.s32.totalorder %s30, 0
    %p260 = por %p258, %p259
    %p261 = scmp.ne.s32.totalorder %s247, %s248
    %p262 = scmp.eq.s32.totalorder %s31, 4
    %p263 = por %p261, %p262
    %p265 = scmp.ne.s32.totalorder %s248, %s264
    %p266 = scmp.eq.s32.totalorder %s31, 0
    %p267 = por %p265, %p266
    %s268 = ssub.s32 %s25, %s32
    %p269 = scmp.eq.s32.totalorder %s268, 0
    %s271 = sadd.s32 %s270, 1
    %s272 = scalar_select %p269, %s270, %s271
    %p275 = pneg %p269
    %p276 = scmp.eq.s32.totalorder %s25, 4
    %p277 = por %p275, %p276
    %p278 = scmp.ne.s32.totalorder %s270, %s273
    %p279 = scmp.eq.s32.totalorder %s25, 0
    %p280 = por %p278, %p279
    %p281 = scmp.ne.s32.totalorder %s270, %s273
    %p282 = scmp.eq.s32.totalorder %s30, 4
    %p283 = por %p281, %p282
    %p284 = scmp.ne.s32.totalorder %s273, %s274
    %p285 = scmp.eq.s32.totalorder %s30, 0
    %p286 = por %p284, %p285
    %p287 = scmp.ne.s32.totalorder %s273, %s274
    %p288 = scmp.eq.s32.totalorder %s31, 4
    %p289 = por %p287, %p288
    %p291 = scmp.ne.s32.totalorder %s274, %s290
    %p292 = scmp.eq.s32.totalorder %s31, 0
    %p293 = por %p291, %p292
    %s294 = ssub.s32 %s25, %s32
    %p295 = scmp.eq.s32.totalorder %s294, 0
    %s297 = sadd.s32 %s296, 1
    %s298 = scalar_select %p295, %s296, %s297
    %p301 = pneg %p295
    %p302 = scmp.eq.s32.totalorder %s25, 4
    %p303 = por %p301, %p302
    %p304 = scmp.ne.s32.totalorder %s296, %s299
    %p305 = scmp.eq.s32.totalorder %s25, 0
    %p306 = por %p304, %p305
    %p307 = scmp.ne.s32.totalorder %s296, %s299
    %p308 = scmp.eq.s32.totalorder %s30, 4
    %p309 = por %p307, %p308
    %p310 = scmp.ne.s32.totalorder %s299, %s300
    %p311 = scmp.eq.s32.totalorder %s30, 0
    %p312 = por %p310, %p311
    %p313 = scmp.ne.s32.totalorder %s299, %s300
    %p314 = scmp.eq.s32.totalorder %s31, 4
    %p315 = por %p313, %p314
    %p317 = scmp.ne.s32.totalorder %s300, %s316
    %p318 = scmp.eq.s32.totalorder %s31, 0
    %p319 = por %p317, %p318
    %s320 = ssub.s32 %s25, %s32
    %p321 = scmp.eq.s32.totalorder %s320, 0
    %s323 = sadd.s32 %s322, 1
    %s324 = scalar_select %p321, %s322, %s323
    %p327 = pneg %p321
    %p328 = scmp.eq.s32.totalorder %s25, 4
    %p329 = por %p327, %p328
    %p330 = scmp.ne.s32.totalorder %s322, %s325
    %p331 = scmp.eq.s32.totalorder %s25, 0
    %p332 = por %p330, %p331
    %p333 = scmp.ne.s32.totalorder %s322, %s325
    %p334 = scmp.eq.s32.totalorder %s30, 4
    %p335 = por %p333, %p334
    %p336 = scmp.ne.s32.totalorder %s325, %s326
    %p337 = scmp.eq.s32.totalorder %s30, 0
    %p338 = por %p336, %p337
    %p339 = scmp.ne.s32.totalorder %s325, %s326
    %p340 = scmp.eq.s32.totalorder %s31, 4
    %p341 = por %p339, %p340
    %p343 = scmp.ne.s32.totalorder %s326, %s342
    %p344 = scmp.eq.s32.totalorder %s31, 0
    %p345 = por %p343, %p344
    %s346 = ssub.s32 %s25, %s32
    %p347 = scmp.eq.s32.totalorder %s346, 0
    %s349 = sadd.s32 %s348, 1
    %s350 = scalar_select %p347, %s348, %s349
    %p353 = pneg %p347
    %p354 = scmp.eq.s32.totalorder %s25, 4
    %p355 = por %p353, %p354
    %p356 = scmp.ne.s32.totalorder %s348, %s351
    %p357 = scmp.eq.s32.totalorder %s25, 0
    %p358 = por %p356, %p357
    %p359 = scmp.ne.s32.totalorder %s348, %s351
    %p360 = scmp.eq.s32.totalorder %s30, 4
    %p361 = por %p359, %p360
    %p362 = scmp.ne.s32.totalorder %s351, %s352
    %p363 = scmp.eq.s32.totalorder %s30, 0
    %p364 = por %p362, %p363
    %p365 = scmp.ne.s32.totalorder %s351, %s352
    %p366 = scmp.eq.s32.totalorder %s31, 4
    %p367 = por %p365, %p366
    %p369 = scmp.ne.s32.totalorder %s352, %s368
    %p370 = scmp.eq.s32.totalorder %s31, 0
    %p371 = por %p369, %p370
    %s372 = ssub.s32 %s25, %s32
    %p373 = scmp.eq.s32.totalorder %s372, 0
    %s375 = sadd.s32 %s374, 1
    %s376 = scalar_select %p373, %s374, %s375
    %p379 = pneg %p373
    %p380 = scmp.eq.s32.totalorder %s25, 4
    %p381 = por %p379, %p380
    %p382 = scmp.ne.s32.totalorder %s374, %s377
    %p383 = scmp.eq.s32.totalorder %s25, 0
    %p384 = por %p382, %p383
    %p385 = scmp.ne.s32.totalorder %s374, %s377
    %p386 = scmp.eq.s32.totalorder %s30, 4
    %p387 = por %p385, %p386
    %p388 = scmp.ne.s32.totalorder %s377, %s378
    %p389 = scmp.eq.s32.totalorder %s30, 0
    %p390 = por %p388, %p389
    %p391 = scmp.ne.s32.totalorder %s377, %s378
    %p392 = scmp.eq.s32.totalorder %s31, 4
    %p393 = por %p391, %p392
    %p395 = scmp.ne.s32.totalorder %s378, %s394
    %p396 = scmp.eq.s32.totalorder %s31, 0
    %p397 = por %p395, %p396
    %s399 = sadd.s32 %s398, 1
    %p402 = scmp.eq.s32.totalorder %s25, 4
    %p403 = scmp.ne.s32.totalorder %s398, %s400
    %p404 = scmp.eq.s32.totalorder %s25, 0
    %p405 = por %p403, %p404
    %p406 = scmp.ne.s32.totalorder %s398, %s400
    %p407 = scmp.eq.s32.totalorder %s30, 4
    %p408 = por %p406, %p407
    %p409 = scmp.ne.s32.totalorder %s400, %s401
    %p410 = scmp.eq.s32.totalorder %s30, 0
    %p411 = por %p409, %p410
    %p412 = scmp.ne.s32.totalorder %s400, %s401
    %p413 = scmp.eq.s32.totalorder %s31, 4
    %p414 = por %p412, %p413
    %p416 = scmp.ne.s32.totalorder %s401, %s415
    %p417 = scmp.eq.s32.totalorder %s31, 0
    %p418 = por %p416, %p417
    %s420 = sadd.s32 %s419, 1
    %p423 = scmp.eq.s32.totalorder %s25, 4
    %p424 = scmp.ne.s32.totalorder %s419, %s421
    %p425 = scmp.eq.s32.totalorder %s25, 0
    %p426 = por %p424, %p425
    %p427 = scmp.ne.s32.totalorder %s419, %s421
    %p428 = scmp.eq.s32.totalorder %s30, 4
    %p429 = por %p427, %p428
    %p430 = scmp.ne.s32.totalorder %s421, %s422
    %p431 = scmp.eq.s32.totalorder %s30, 0
    %p432 = por %p430, %p431
    %p433 = scmp.ne.s32.totalorder %s421, %s422
    %p434 = scmp.eq.s32.totalorder %s31, 4
    %p435 = por %p433, %p434
    %p437 = scmp.ne.s32.totalorder %s422, %s436
    %p438 = scmp.eq.s32.totalorder %s31, 0
    %p439 = por %p437, %p438
    %s441 = sadd.s32 %s440, 1
    %p444 = scmp.eq.s32.totalorder %s25, 4
    %p445 = scmp.ne.s32.totalorder %s440, %s442
    %p446 = scmp.eq.s32.totalorder %s25, 0
    %p447 = por %p445, %p446
    %p448 = scmp.ne.s32.totalorder %s440, %s442
    %p449 = scmp.eq.s32.totalorder %s30, 4
    %p450 = por %p448, %p449
    %p451 = scmp.ne.s32.totalorder %s442, %s443
    %p452 = scmp.eq.s32.totalorder %s30, 0
    %p453 = por %p451, %p452
    %p454 = scmp.ne.s32.totalorder %s442, %s443
    %p455 = scmp.eq.s32.totalorder %s31, 4
    %p456 = por %p454, %p455
    %p458 = scmp.ne.s32.totalorder %s443, %s457
    %p459 = scmp.eq.s32.totalorder %s31, 0
    %p460 = por %p458, %p459
    %s462 = sadd.s32 %s461, 1
    %p465 = scmp.eq.s32.totalorder %s25, 4
    %p466 = scmp.ne.s32.totalorder %s461, %s463
    %p467 = scmp.eq.s32.totalorder %s25, 0
    %p468 = por %p466, %p467
    %p469 = scmp.ne.s32.totalorder %s461, %s463
    %p470 = scmp.eq.s32.totalorder %s30, 4
    %p471 = por %p469, %p470
    %p472 = scmp.ne.s32.totalorder %s463, %s464
    %p473 = scmp.eq.s32.totalorder %s30, 0
    %p474 = por %p472, %p473
    %p475 = scmp.ne.s32.totalorder %s463, %s464
    %p476 = scmp.eq.s32.totalorder %s31, 4
    %p477 = por %p475, %p476
    %p479 = scmp.ne.s32.totalorder %s464, %s478
    %p480 = scmp.eq.s32.totalorder %s31, 0
    %p481 = por %p479, %p480
    %s483 = sadd.s32 %s482, 1
    %p486 = scmp.eq.s32.totalorder %s25, 4
    %p487 = scmp.ne.s32.totalorder %s482, %s484
    %p488 = scmp.eq.s32.totalorder %s25, 0
    %p489 = por %p487, %p488
    %p490 = scmp.ne.s32.totalorder %s482, %s484
    %p491 = scmp.eq.s32.totalorder %s30, 4
    %p492 = por %p490, %p491
    %p493 = scmp.ne.s32.totalorder %s484, %s485
    %p494 = scmp.eq.s32.totalorder %s30, 0
    %p495 = por %p493, %p494
    %p496 = scmp.ne.s32.totalorder %s484, %s485
    %p497 = scmp.eq.s32.totalorder %s31, 4
    %p498 = por %p496, %p497
    %p500 = scmp.ne.s32.totalorder %s485, %s499
    %p501 = scmp.eq.s32.totalorder %s31, 0
    %p502 = por %p500, %p501
    %p503 = scmp.le.s32.totalorder 1, %s25
    %p504 = scmp.lt.s32.totalorder %s25, 6
    %p505 = pnand %p503, %p504
    %p506 = pneg %p505
    // Predicated region
    $region9: #{tpu_custom_call.1} parent=5 // pred_check
      _
    $region10: #{tpu_custom_call.1} parent=5 // pred_check_branch
      %508 = sbr.rel (%p505) target = $region12
    $region11: #{tpu_custom_call.1} parent=5 // pred_region
      %s509 = ssub.s32 %s25, 1
      // Predicated region
      $region13: #{tpu_custom_call.1} parent=11 // pred_check
        %p510 = pneg %p46
      $region14: #{tpu_custom_call.1} parent=11 // pred_check_branch
        %512 = sbr.rel (%p510) target = $region16
      $region15: #{tpu_custom_call.1} parent=11 // pred_region
        _
      $region16: #{tpu_custom_call.1} parent=11 // pred_fallthru
        _
      // Predicated region
      $region17: #{tpu_custom_call.1} parent=11 // pred_check
        %p513 = pneg %p67
      $region18: #{tpu_custom_call.1} parent=11 // pred_check_branch
        %515 = sbr.rel (%p513) target = $region20
      $region19: #{tpu_custom_call.1} parent=11 // pred_region
        _
      $region20: #{tpu_custom_call.1} parent=11 // pred_fallthru
        _
      // Predicated region
      $region21: #{tpu_custom_call.1} parent=11 // pred_check
        %p516 = pneg %p88
      $region22: #{tpu_custom_call.1} parent=11 // pred_check_branch
        %518 = sbr.rel (%p516) target = $region24
      $region23: #{tpu_custom_call.1} parent=11 // pred_region
        _
      $region24: #{tpu_custom_call.1} parent=11 // pred_fallthru
        _
      // Predicated region
      $region25: #{tpu_custom_call.1} parent=11 // pred_check
        %p519 = pneg %p109
      $region26: #{tpu_custom_call.1} parent=11 // pred_check_branch
        %521 = sbr.rel (%p519) target = $region28
      $region27: #{tpu_custom_call.1} parent=11 // pred_region
        _
      $region28: #{tpu_custom_call.1} parent=11 // pred_fallthru
        _
      // Predicated region
      $region29: #{tpu_custom_call.1} parent=11 // pred_check
        %p522 = pneg %p130
      $region30: #{tpu_custom_call.1} parent=11 // pred_check_branch
        %524 = sbr.rel (%p522) target = $region32
      $region31: #{tpu_custom_call.1} parent=11 // pred_region
        _
      $region32: #{tpu_custom_call.1} parent=11 // pred_fallthru
        _
      // Predicated region
      $region33: #{tpu_custom_call.1} parent=11 // pred_check
        %p525 = pneg %p411
      $region34: #{tpu_custom_call.1} parent=11 // pred_check_branch
        %527 = sbr.rel (%p525) target = $region36
      $region35: #{tpu_custom_call.1} parent=11 // pred_region
        _
      $region36: #{tpu_custom_call.1} parent=11 // pred_fallthru
        _
      // Predicated region
      $region37: #{tpu_custom_call.1} parent=11 // pred_check
        %p528 = pneg %p432
      $region38: #{tpu_custom_call.1} parent=11 // pred_check_branch
        %530 = sbr.rel (%p528) target = $region40
      $region39: #{tpu_custom_call.1} parent=11 // pred_region
        _
      $region40: #{tpu_custom_call.1} parent=11 // pred_fallthru
        _
      // Predicated region
      $region41: #{tpu_custom_call.1} parent=11 // pred_check
        %p531 = pneg %p453
      $region42: #{tpu_custom_call.1} parent=11 // pred_check_branch
        %533 = sbr.rel (%p531) target = $region44
      $region43: #{tpu_custom_call.1} parent=11 // pred_region
        _
      $region44: #{tpu_custom_call.1} parent=11 // pred_fallthru
        _
      // Predicated region
      $region45: #{tpu_custom_call.1} parent=11 // pred_check
        %p534 = pneg %p474
      $region46: #{tpu_custom_call.1} parent=11 // pred_check_branch
        %536 = sbr.rel (%p534) target = $region48
      $region47: #{tpu_custom_call.1} parent=11 // pred_region
        _
      $region48: #{tpu_custom_call.1} parent=11 // pred_fallthru
        _
    $region12: #{tpu_custom_call.1} parent=5 // pred_fallthru
      _
    %p537 = scmp.lt.s32.totalorder %s25, 5
    // Predicated region
    $region49: #{tpu_custom_call.1} parent=5 // pred_check
      %p538 = pneg %p537
    $region50: #{tpu_custom_call.1} parent=5 // pred_check_branch
      %540 = sbr.rel (%p538) target = $region52
    $region51: #{tpu_custom_call.1} parent=5 // pred_region
      // Predicated region
      $region53: #{tpu_custom_call.1} parent=51 // pred_check
        %p541 = pneg %p150
      $region54: #{tpu_custom_call.1} parent=51 // pred_check_branch
        %543 = sbr.rel (%p541) target = $region56
      $region55: #{tpu_custom_call.1} parent=51 // pred_region
        %p544 = scmp.lt.s32.totalorder %s25, 4
        %s545 = scalar_select %p544, %s25, 4
        %s546 = smul.addr %s545, 64
        %s547 = smul.addr %s546, 4
        %s548 = scalar_lea.vmem %s5, %s547
      $region56: #{tpu_custom_call.1} parent=51 // pred_fallthru
        _
      // Predicated region
      $region57: #{tpu_custom_call.1} parent=51 // pred_check
        %p549 = pneg %p176
      $region58: #{tpu_custom_call.1} parent=51 // pred_check_branch
        %551 = sbr.rel (%p549) target = $region60
      $region59: #{tpu_custom_call.1} parent=51 // pred_region
        %p552 = scmp.lt.s32.totalorder %s25, 4
        %s553 = scalar_select %p552, %s25, 4
        %s554 = smul.addr %s553, 4
        %s555 = scalar_lea.vmem %s6, %s554
      $region60: #{tpu_custom_call.1} parent=51 // pred_fallthru
        _
      // Predicated region
      $region61: #{tpu_custom_call.1} parent=51 // pred_check
        %p556 = pneg %p202
      $region62: #{tpu_custom_call.1} parent=51 // pred_check_branch
        %558 = sbr.rel (%p556) target = $region64
      $region63: #{tpu_custom_call.1} parent=51 // pred_region
        %p559 = scmp.lt.s32.totalorder %s25, 4
        %s560 = scalar_select %p559, %s25, 4
        %s561 = smul.addr %s560, 96
        %s562 = smul.addr %s561, 4
        %s563 = scalar_lea.vmem %s7, %s562
      $region64: #{tpu_custom_call.1} parent=51 // pred_fallthru
        _
      // Predicated region
      $region65: #{tpu_custom_call.1} parent=51 // pred_check
        %p564 = pneg %p228
      $region66: #{tpu_custom_call.1} parent=51 // pred_check_branch
        %566 = sbr.rel (%p564) target = $region68
      $region67: #{tpu_custom_call.1} parent=51 // pred_region
        %p567 = scmp.lt.s32.totalorder %s25, 4
        %s568 = scalar_select %p567, %s25, 4
        %s569 = smul.addr %s568, 3
        %s570 = scalar_lea.vmem %s8, %s569
      $region68: #{tpu_custom_call.1} parent=51 // pred_fallthru
        _
      // Predicated region
      $region69: #{tpu_custom_call.1} parent=51 // pred_check
        %p571 = pneg %p254
      $region70: #{tpu_custom_call.1} parent=51 // pred_check_branch
        %573 = sbr.rel (%p571) target = $region72
      $region71: #{tpu_custom_call.1} parent=51 // pred_region
        %p574 = scmp.lt.s32.totalorder %s25, 4
        %s575 = scalar_select %p574, %s25, 4
        %s576 = smul.addr %s575, 32
        %s577 = smul.addr %s576, 4
        %s578 = scalar_lea.vmem %s9, %s577
      $region72: #{tpu_custom_call.1} parent=51 // pred_fallthru
        _
      // Predicated region
      $region73: #{tpu_custom_call.1} parent=51 // pred_check
        %p579 = pneg %p280
      $region74: #{tpu_custom_call.1} parent=51 // pred_check_branch
        %581 = sbr.rel (%p579) target = $region76
      $region75: #{tpu_custom_call.1} parent=51 // pred_region
        %p582 = scmp.lt.s32.totalorder %s25, 4
        %s583 = scalar_select %p582, %s25, 4
        %s584 = scalar_lea.vmem %s10, %s583
      $region76: #{tpu_custom_call.1} parent=51 // pred_fallthru
        _
      // Predicated region
      $region77: #{tpu_custom_call.1} parent=51 // pred_check
        %p585 = pneg %p306
      $region78: #{tpu_custom_call.1} parent=51 // pred_check_branch
        %587 = sbr.rel (%p585) target = $region80
      $region79: #{tpu_custom_call.1} parent=51 // pred_region
        %p588 = scmp.lt.s32.totalorder %s25, 4
        %s589 = scalar_select %p588, %s25, 4
        %s590 = smul.addr %s589, 4
        %s591 = smul.addr %s590, 8
        %s592 = scalar_lea.vmem %s11, %s591
      $region80: #{tpu_custom_call.1} parent=51 // pred_fallthru
        _
      // Predicated region
      $region81: #{tpu_custom_call.1} parent=51 // pred_check
        %p593 = pneg %p332
      $region82: #{tpu_custom_call.1} parent=51 // pred_check_branch
        %595 = sbr.rel (%p593) target = $region84
      $region83: #{tpu_custom_call.1} parent=51 // pred_region
        %p596 = scmp.lt.s32.totalorder %s25, 4
        %s597 = scalar_select %p596, %s25, 4
        %s598 = smul.addr %s597, 2
        %s599 = scalar_lea.vmem %s12, %s598
      $region84: #{tpu_custom_call.1} parent=51 // pred_fallthru
        _
      // Predicated region
      $region85: #{tpu_custom_call.1} parent=51 // pred_check
        %p600 = pneg %p358
      $region86: #{tpu_custom_call.1} parent=51 // pred_check_branch
        %602 = sbr.rel (%p600) target = $region88
      $region87: #{tpu_custom_call.1} parent=51 // pred_region
        %p603 = scmp.lt.s32.totalorder %s25, 4
        %s604 = scalar_select %p603, %s25, 4
        %s605 = scalar_lea.vmem %s13, %s604
      $region88: #{tpu_custom_call.1} parent=51 // pred_fallthru
        _
      // Predicated region
      $region89: #{tpu_custom_call.1} parent=51 // pred_check
        %p606 = pneg %p384
      $region90: #{tpu_custom_call.1} parent=51 // pred_check_branch
        %608 = sbr.rel (%p606) target = $region92
      $region91: #{tpu_custom_call.1} parent=51 // pred_region
        %p609 = scmp.lt.s32.totalorder %s25, 4
        %s610 = scalar_select %p609, %s25, 4
        %s611 = scalar_lea.vmem %s14, %s610
      $region92: #{tpu_custom_call.1} parent=51 // pred_fallthru
        _
    $region52: #{tpu_custom_call.1} parent=5 // pred_fallthru
      _
    %p612 = scmp.le.s32.totalorder 1, %s25
    %p613 = scmp.lt.s32.totalorder %s25, 6
    %p614 = pnand %p612, %p613
    %p615 = pneg %p614
    // Predicated region
    $region93: #{tpu_custom_call.1} parent=5 // pred_check
      _
    $region94: #{tpu_custom_call.1} parent=5 // pred_check_branch
      %617 = sbr.rel (%p614) target = $region96
    $region95: #{tpu_custom_call.1} parent=5 // pred_region
      %s618 = ssub.s32 %s25, 1
      %p619 = pneg %p46
      %p620 = pneg %p43
      %p621 = pneg %p67
      %p622 = pneg %p64
      %p623 = pneg %p88
      %p624 = pneg %p85
      %p625 = pneg %p109
      %p626 = pneg %p106
      %p627 = pneg %p130
      %p628 = pneg %p127
      %p629 = scmp.lt.s32.totalorder %s30, 4
      %s630 = scalar_select %p629, %s30, 4
      %s631 = smul.addr %s630, 64
      %s632 = smul.addr %s631, 4
      %s633 = scalar_lea.vmem %s5, %s632
      %p634 = pneg %p156
      %p635 = pneg %p153
      %p636 = scmp.lt.s32.totalorder %s30, 4
      %s637 = scalar_select %p636, %s30, 4
      %s638 = smul.addr %s637, 4
      %s639 = scalar_lea.vmem %s6, %s638
      %p640 = pneg %p182
      %p641 = pneg %p179
      %p642 = scmp.lt.s32.totalorder %s30, 4
      %s643 = scalar_select %p642, %s30, 4
      %s644 = smul.addr %s643, 96
      %s645 = smul.addr %s644, 4
      %s646 = scalar_lea.vmem %s7, %s645
      %p647 = pneg %p208
      %p648 = pneg %p205
      %p649 = scmp.lt.s32.totalorder %s30, 4
      %s650 = scalar_select %p649, %s30, 4
      %s651 = smul.addr %s650, 3
      %s652 = scalar_lea.vmem %s8, %s651
      %p653 = pneg %p234
      %p654 = pneg %p231
      %p655 = scmp.lt.s32.totalorder %s30, 4
      %s656 = scalar_select %p655, %s30, 4
      %s657 = smul.addr %s656, 32
      %s658 = smul.addr %s657, 4
      %s659 = scalar_lea.vmem %s9, %s658
      %p660 = pneg %p260
      %p661 = pneg %p257
      %p662 = scmp.lt.s32.totalorder %s30, 4
      %s663 = scalar_select %p662, %s30, 4
      %s664 = scalar_lea.vmem %s10, %s663
      %p665 = pneg %p286
      %p666 = pneg %p283
      %p667 = scmp.lt.s32.totalorder %s30, 4
      %s668 = scalar_select %p667, %s30, 4
      %s669 = smul.addr %s668, 4
      %s670 = smul.addr %s669, 8
      %s671 = scalar_lea.vmem %s11, %s670
      %p672 = pneg %p312
      %p673 = pneg %p309
      %p674 = scmp.lt.s32.totalorder %s30, 4
      %s675 = scalar_select %p674, %s30, 4
      %s676 = smul.addr %s675, 2
      %s677 = scalar_lea.vmem %s12, %s676
      %p678 = pneg %p338
      %p679 = pneg %p335
      %p680 = scmp.lt.s32.totalorder %s30, 4
      %s681 = scalar_select %p680, %s30, 4
      %s682 = scalar_lea.vmem %s13, %s681
      %p683 = pneg %p364
      %p684 = pneg %p361
      %p685 = scmp.lt.s32.totalorder %s30, 4
      %s686 = scalar_select %p685, %s30, 4
      %s687 = scalar_lea.vmem %s14, %s686
      %p688 = pneg %p390
      %p689 = pneg %p387
      %p690 = pneg %p411
      %p691 = pneg %p408
      %p692 = pneg %p432
      %p693 = pneg %p429
      %p694 = pneg %p453
      %p695 = pneg %p450
      %p696 = pneg %p474
      %p697 = pneg %p471
      %p698 = pneg %p495
      %p699 = pneg %p492
      %p700 = scmp.lt.s32.totalorder %s30, 4
      %s701 = scalar_select %p700, %s30, 4
      %s702 = smul.addr %s701, 64
      %s703 = smul.addr %s702, 4
      %s704 = scalar_lea.vmem %s5, %s703
      %p705 = scmp.lt.s32.totalorder %s30, 4
      %s706 = scalar_select %p705, %s30, 4
      %s707 = smul.addr %s706, 4
      %s708 = scalar_lea.vmem %s6, %s707
      %p709 = scmp.lt.s32.totalorder %s30, 4
      %s710 = scalar_select %p709, %s30, 4
      %s711 = smul.addr %s710, 96
      %s712 = smul.addr %s711, 4
      %s713 = scalar_lea.vmem %s7, %s712
      %p714 = scmp.lt.s32.totalorder %s30, 4
      %s715 = scalar_select %p714, %s30, 4
      %s716 = smul.addr %s715, 3
      %s717 = scalar_lea.vmem %s8, %s716
      %p718 = scmp.lt.s32.totalorder %s30, 4
      %s719 = scalar_select %p718, %s30, 4
      %s720 = smul.addr %s719, 32
      %s721 = smul.addr %s720, 4
      %s722 = scalar_lea.vmem %s9, %s721
      %p723 = scmp.lt.s32.totalorder %s30, 4
      %s724 = scalar_select %p723, %s30, 4
      %s725 = scalar_lea.vmem %s10, %s724
      %p726 = scmp.lt.s32.totalorder %s30, 4
      %s727 = scalar_select %p726, %s30, 4
      %s728 = smul.addr %s727, 4
      %s729 = smul.addr %s728, 8
      %s730 = scalar_lea.vmem %s11, %s729
      %p731 = scmp.lt.s32.totalorder %s30, 4
      %s732 = scalar_select %p731, %s30, 4
      %s733 = smul.addr %s732, 2
      %s734 = scalar_lea.vmem %s12, %s733
      %p735 = scmp.lt.s32.totalorder %s30, 4
      %s736 = scalar_select %p735, %s30, 4
      %s737 = scalar_lea.vmem %s13, %s736
      %p738 = scmp.lt.s32.totalorder %s30, 4
      %s739 = scalar_select %p738, %s30, 4
      %s740 = scalar_lea.vmem %s14, %s739
      %p742 = scmp.eq.s32.totalorder %s30, 0
      // Predicated region
      $region97: #{tpu_custom_call.1} parent=95 // pred_check
        %p743 = pneg %p742
      $region98: #{tpu_custom_call.1} parent=95 // pred_check_branch
        %745 = sbr.rel (%p743) target = $region100
      $region99: #{tpu_custom_call.1} parent=95 // pred_region
        %v746 = vld [vmem:[%s0] sm:$0xff]
        %v747 = vld [vmem:[%s0 + $0x8] sm:$0xff]
        %v748 = vld [vmem:[%s3] sm:$0xff]
        %v749 = vld [vmem:[%s4] sm:$0x1]
        %v751 = vlaneseq
        %v752 = vshrl.u32 %v751, 7
        %v753 = vsub.s32 0, %v752
        %v754 = vrot.slane %v749, %v753
        %vm756 = vcmask 64512
        %v758 = vsel %vm756, %v746, 0
        %v761 = vsel %vm756, %v747, 0
        %763 = vmatprep.subr.mxu0 0.0
        %764 = vmatpush1.msra.mxu0 0.0
        %765 = vmatprep.subr.mxu0 0.0
        %766 = vmatpush1.msra.mxu0 0.0
        %767 = vmatprep.subr.mxu0 0.0
        %768 = vmatpush1.msra.mxu0 0.0
        %769 = vmatprep.subr.mxu0 0.0
        %770 = vmatpush1.msra.mxu0 0.0
        %771 = vmatprep.subr.mxu0 0.0
        %772 = vmatpush1.msra.mxu0 0.0
        %773 = vmatprep.subr.mxu0 0.0
        %774 = vmatpush1.msra.mxu0 0.0
        %775 = vmatprep.subr.mxu0 0.0
        %776 = vmatpush1.msra.mxu0 0.0
        %777 = vmatprep.subr.mxu0 0.0
        %778 = vmatpush1.msra.mxu0 0.0
        %779 = vmatprep.subr.mxu0 0.0
        %780 = vmatpush1.msra.mxu0 0.0
        %781 = vmatprep.subr.mxu0 0.0
        %782 = vmatpush1.msra.mxu0 0.0
        %783 = vmatprep.subr.mxu0 0.0
        %784 = vmatpush1.msra.mxu0 0.0
        %785 = vmatprep.subr.mxu0 0.0
        %786 = vmatpush1.msra.mxu0 0.0
        %787 = vmatprep.subr.mxu0 0.0
        %788 = vmatpush1.msra.mxu0 0.0
        %789 = vmatprep.subr.mxu0 0.0
        %790 = vmatpush1.msra.mxu0 0.0
        %791 = vmatprep.subr.mxu0 0.0
        %792 = vmatpush1.msra.mxu0 0.0
        %793 = vmatprep.subr.mxu0 0.0
        %794 = vmatpush1.msra.mxu0 %v748
        %795 = vmatprep.subr.mxu0 0.0
        %796 = vmatpush2.msra.mxu0 0.0
        %797 = vmatprep.subr.mxu0 0.0
        %798 = vmatpush2.msra.mxu0 0.0
        %799 = vmatprep.subr.mxu0 0.0
        %800 = vmatpush2.msra.mxu0 0.0
        %801 = vmatprep.subr.mxu0 0.0
        %802 = vmatpush2.msra.mxu0 0.0
        %803 = vmatprep.subr.mxu0 0.0
        %804 = vmatpush2.msra.mxu0 0.0
        %805 = vmatprep.subr.mxu0 0.0
        %806 = vmatpush2.msra.mxu0 0.0
        %807 = vmatprep.subr.mxu0 0.0
        %808 = vmatpush2.msra.mxu0 0.0
        %809 = vmatprep.subr.mxu0 0.0
        %810 = vmatpush2.msra.mxu0 0.0
        %811 = vmatprep.subr.mxu0 0.0
        %812 = vmatpush2.msra.mxu0 0.0
        %813 = vmatprep.subr.mxu0 0.0
        %814 = vmatpush2.msra.mxu0 0.0
        %815 = vmatprep.subr.mxu0 0.0
        %816 = vmatpush2.msra.mxu0 0.0
        %817 = vmatprep.subr.mxu0 0.0
        %818 = vmatpush2.msra.mxu0 0.0
        %819 = vmatprep.subr.mxu0 0.0
        %820 = vmatpush2.msra.mxu0 0.0
        %821 = vmatprep.subr.mxu0 0.0
        %822 = vmatpush2.msra.mxu0 0.0
        %823 = vmatprep.subr.mxu0 0.0
        %824 = vmatpush2.msra.mxu0 0.0
        %825 = vmatprep.subr.mxu0 0.0
        %826 = vmatpush2.msra.mxu0 0.0
        %827 = vmatprep.mubr.f32.mxu0 0.0
        %828 = vmatmul.mubr.f32.gmra.mxu0 %v758
        %v829 = vpop.f32.mrf.mxu0
        %v830 = vadd.f32 %v754, %v829
        %v831 = vpop.f32.mrf.mxu0
        %832 = vmatprep.mubr.f32.mxu0 0.0
        %833 = vmatmul.mubr.f32.gmra.mxu0 %v761
        %v834 = vpop.f32.mrf.mxu0
        %v835 = vadd.f32 %v754, %v834
        %v836 = vpop.f32.mrf.mxu0
        %837 = vdwg.mxu0
        %838 = vst [vmem:[#allocation2] sm:$0xff] %v830
        %839 = vst [vmem:[#allocation2 + $0x8] sm:$0xff] %v835
      $region100: #{tpu_custom_call.1} parent=95 // pred_fallthru
        _
      %v840 = vld [vmem:[#allocation2] sm:$0xff]
      %v841 = vld [vmem:[#allocation2 + $0x8] sm:$0xff]
      %v842 = vpack.c.bf16 %v841, %v840
      %v843 = vld [vmem:[%s704] sm:$0xff]
      %v844 = vld [vmem:[%s704 + $0x8] sm:$0xff]
      %v845 = vld [vmem:[%s704 + $0x10] sm:$0xff]
      %v846 = vld [vmem:[%s704 + $0x18] sm:$0xff]
      %v847 = vld [vmem:[%s704 + $0x20] sm:$0xff]
      %v848 = vld [vmem:[%s704 + $0x28] sm:$0xff]
      %v849 = vld [vmem:[%s704 + $0x30] sm:$0xff]
      %v850 = vld [vmem:[%s704 + $0x38] sm:$0xff]
      %v851 = vld [vmem:[%s704 + $0x40] sm:$0xff]
      %v852 = vld [vmem:[%s704 + $0x48] sm:$0xff]
      %v853 = vld [vmem:[%s704 + $0x50] sm:$0xff]
      %v854 = vld [vmem:[%s704 + $0x58] sm:$0xff]
      %v855 = vld [vmem:[%s704 + $0x60] sm:$0xff]
      %v856 = vld [vmem:[%s704 + $0x68] sm:$0xff]
      %v857 = vld [vmem:[%s704 + $0x70] sm:$0xff]
      %v858 = vld [vmem:[%s704 + $0x78] sm:$0xff]
      %v859 = vld [vmem:[%s704 + $0x80] sm:$0xff]
      %v860 = vld [vmem:[%s704 + $0x88] sm:$0xff]
      %v861 = vld [vmem:[%s704 + $0x90] sm:$0xff]
      %v862 = vld [vmem:[%s704 + $0x98] sm:$0xff]
      %v863 = vld [vmem:[%s704 + $0xa0] sm:$0xff]
      %v864 = vld [vmem:[%s704 + $0xa8] sm:$0xff]
      %v865 = vld [vmem:[%s704 + $0xb0] sm:$0xff]
      %v866 = vld [vmem:[%s704 + $0xb8] sm:$0xff]
      %v867 = vld [vmem:[%s704 + $0xc0] sm:$0xff]
      %v868 = vld [vmem:[%s704 + $0xc8] sm:$0xff]
      %v869 = vld [vmem:[%s704 + $0xd0] sm:$0xff]
      %v870 = vld [vmem:[%s704 + $0xd8] sm:$0xff]
      %v871 = vld [vmem:[%s704 + $0xe0] sm:$0xff]
      %v872 = vld [vmem:[%s704 + $0xe8] sm:$0xff]
      %v873 = vld [vmem:[%s704 + $0xf0] sm:$0xff]
      %v874 = vld [vmem:[%s704 + $0xf8] sm:$0xff]
      %v875 = vld [vmem:[%s708] sm:$0xf]
      %v877 = vlaneseq
      %v878 = vshrl.u32 %v877, 7
      %v879 = vsub.s32 0, %v878
      %v880 = vrot.slane %v875, %v879
      %v881 = vlaneseq
      %v882 = vshrl.u32 %v881, 7
      %v883 = vsub.s32 1, %v882
      %v884 = vrot.slane %v875, %v883
      %v885 = vlaneseq
      %v886 = vshrl.u32 %v885, 7
      %v887 = vsub.s32 2, %v886
      %v888 = vrot.slane %v875, %v887
      %v889 = vlaneseq
      %v890 = vshrl.u32 %v889, 7
      %v891 = vsub.s32 3, %v890
      %v892 = vrot.slane %v875, %v891
      %v929 = vunpack.c.l.b16 %v843
      %v930 = vunpack.c.h.b16 %v843
      %v931 = vunpack.c.l.b16 %v844
      %v932 = vunpack.c.h.b16 %v844
      %v933 = vunpack.c.l.b16 %v845
      %v934 = vunpack.c.h.b16 %v845
      %v935 = vunpack.c.l.b16 %v846
      %v936 = vunpack.c.h.b16 %v846
      %v937 = vunpack.c.l.b16 %v847
      %v938 = vunpack.c.h.b16 %v847
      %v939 = vunpack.c.l.b16 %v848
      %v940 = vunpack.c.h.b16 %v848
      %v941 = vunpack.c.l.b16 %v849
      %v942 = vunpack.c.h.b16 %v849
      %v943 = vunpack.c.l.b16 %v850
      %v944 = vunpack.c.h.b16 %v850
      %v945 = vunpack.c.l.b16 %v851
      %v946 = vunpack.c.h.b16 %v851
      %v947 = vunpack.c.l.b16 %v852
      %v948 = vunpack.c.h.b16 %v852
      %v949 = vunpack.c.l.b16 %v853
      %v950 = vunpack.c.h.b16 %v853
      %v951 = vunpack.c.l.b16 %v854
      %v952 = vunpack.c.h.b16 %v854
      %v953 = vunpack.c.l.b16 %v855
      %v954 = vunpack.c.h.b16 %v855
      %v955 = vunpack.c.l.b16 %v856
      %v956 = vunpack.c.h.b16 %v856
      %v957 = vunpack.c.l.b16 %v857
      %v958 = vunpack.c.h.b16 %v857
      %v959 = vunpack.c.l.b16 %v858
      %v960 = vunpack.c.h.b16 %v858
      %v961 = vunpack.c.l.b16 %v859
      %v962 = vunpack.c.h.b16 %v859
      %v963 = vunpack.c.l.b16 %v860
      %v964 = vunpack.c.h.b16 %v860
      %v965 = vunpack.c.l.b16 %v861
      %v966 = vunpack.c.h.b16 %v861
      %v967 = vunpack.c.l.b16 %v862
      %v968 = vunpack.c.h.b16 %v862
      %v969 = vunpack.c.l.b16 %v863
      %v970 = vunpack.c.h.b16 %v863
      %v971 = vunpack.c.l.b16 %v864
      %v972 = vunpack.c.h.b16 %v864
      %v973 = vunpack.c.l.b16 %v865
      %v974 = vunpack.c.h.b16 %v865
      %v975 = vunpack.c.l.b16 %v866
      %v976 = vunpack.c.h.b16 %v866
      %v977 = vunpack.c.l.b16 %v867
      %v978 = vunpack.c.h.b16 %v867
      %v979 = vunpack.c.l.b16 %v868
      %v980 = vunpack.c.h.b16 %v868
      %v981 = vunpack.c.l.b16 %v869
      %v982 = vunpack.c.h.b16 %v869
      %v983 = vunpack.c.l.b16 %v870
      %v984 = vunpack.c.h.b16 %v870
      %v985 = vunpack.c.l.b16 %v871
      %v986 = vunpack.c.h.b16 %v871
      %v987 = vunpack.c.l.b16 %v872
      %v988 = vunpack.c.h.b16 %v872
      %v989 = vunpack.c.l.b16 %v873
      %v990 = vunpack.c.h.b16 %v873
      %v991 = vunpack.c.l.b16 %v874
      %v992 = vunpack.c.h.b16 %v874
      %v993 = vpack.c.b16 %v933, %v929
      %v994 = vpack.c.b16 %v934, %v930
      %v995 = vpack.c.b16 %v935, %v931
      %v996 = vpack.c.b16 %v936, %v932
      %v997 = vpack.c.b16 %v941, %v937
      %v998 = vpack.c.b16 %v942, %v938
      %v999 = vpack.c.b16 %v943, %v939
      %v1000 = vpack.c.b16 %v944, %v940
      %v1001 = vpack.c.b16 %v949, %v945
      %v1002 = vpack.c.b16 %v950, %v946
      %v1003 = vpack.c.b16 %v951, %v947
      %v1004 = vpack.c.b16 %v952, %v948
      %v1005 = vpack.c.b16 %v957, %v953
      %v1006 = vpack.c.b16 %v958, %v954
      %v1007 = vpack.c.b16 %v959, %v955
      %v1008 = vpack.c.b16 %v960, %v956
      %v1009 = vpack.c.b16 %v965, %v961
      %v1010 = vpack.c.b16 %v966, %v962
      %v1011 = vpack.c.b16 %v967, %v963
      %v1012 = vpack.c.b16 %v968, %v964
      %v1013 = vpack.c.b16 %v973, %v969
      %v1014 = vpack.c.b16 %v974, %v970
      %v1015 = vpack.c.b16 %v975, %v971
      %v1016 = vpack.c.b16 %v976, %v972
      %v1017 = vpack.c.b16 %v981, %v977
      %v1018 = vpack.c.b16 %v982, %v978
      %v1019 = vpack.c.b16 %v983, %v979
      %v1020 = vpack.c.b16 %v984, %v980
      %v1021 = vpack.c.b16 %v989, %v985
      %v1022 = vpack.c.b16 %v990, %v986
      %v1023 = vpack.c.b16 %v991, %v987
      %v1024 = vpack.c.b16 %v992, %v988
      %1057 = vmatprep.subr.bf16.mxu0 %v1022
      %1058 = vmatpush1.bf16.msra.mxu0 %v1021
      %1059 = vmatprep.subr.bf16.mxu0 %v1018
      %1060 = vmatpush1.bf16.msra.mxu0 %v1017
      %1061 = vmatprep.subr.bf16.mxu0 %v1014
      %1062 = vmatpush1.bf16.msra.mxu0 %v1013
      %1063 = vmatprep.subr.bf16.mxu0 %v1010
      %1064 = vmatpush1.bf16.msra.mxu0 %v1009
      %1065 = vmatprep.subr.bf16.mxu0 %v1006
      %1066 = vmatpush1.bf16.msra.mxu0 %v1005
      %1067 = vmatprep.subr.bf16.mxu0 %v1002
      %1068 = vmatpush1.bf16.msra.mxu0 %v1001
      %1069 = vmatprep.subr.bf16.mxu0 %v998
      %1070 = vmatpush1.bf16.msra.mxu0 %v997
      %1071 = vmatprep.subr.bf16.mxu0 %v994
      %1072 = vmatpush1.bf16.msra.mxu0 %v993
      %1073 = vmatprep.subr.bf16.mxu0 0
      %1074 = vmatpush2.bf16.msra.mxu0 0
      %1075 = vmatprep.subr.bf16.mxu0 0
      %1076 = vmatpush2.bf16.msra.mxu0 0
      %1077 = vmatprep.subr.bf16.mxu0 0
      %1078 = vmatpush2.bf16.msra.mxu0 0
      %1079 = vmatprep.subr.bf16.mxu0 0
      %1080 = vmatpush2.bf16.msra.mxu0 0
      %1081 = vmatprep.subr.bf16.mxu0 0
      %1082 = vmatpush2.bf16.msra.mxu0 0
      %1083 = vmatprep.subr.bf16.mxu0 0
      %1084 = vmatpush2.bf16.msra.mxu0 0
      %1085 = vmatprep.subr.bf16.mxu0 0
      %1086 = vmatpush2.bf16.msra.mxu0 0
      %1087 = vmatprep.subr.bf16.mxu0 0
      %1088 = vmatpush2.bf16.msra.mxu0 0
      %1089 = vmatprep.mubr.bf16.mxu0 0
      %1090 = vmatmul.mubr.bf16.gmra.mxu0 %v842
      %v1091 = vpop.f32.mrf.mxu0
      %v1092 = vadd.f32 %v880, %v1091
      %v1093 = vpop.f32.mrf.mxu0
      %v1094 = vadd.f32 %v884, %v1093
      %v1095 = vpop.f32.mrf.mxu0
      %v1096 = vadd.f32 %v880, %v1095
      %v1097 = vpop.f32.mrf.mxu0
      %v1098 = vadd.f32 %v884, %v1097
      %1099 = vdwg.mxu0
      %1100 = vmatprep.subr.bf16.mxu0 %v1024
      %1101 = vmatpush1.bf16.msra.mxu0 %v1023
      %1102 = vmatprep.subr.bf16.mxu0 %v1020
      %1103 = vmatpush1.bf16.msra.mxu0 %v1019
      %1104 = vmatprep.subr.bf16.mxu0 %v1016
      %1105 = vmatpush1.bf16.msra.mxu0 %v1015
      %1106 = vmatprep.subr.bf16.mxu0 %v1012
      %1107 = vmatpush1.bf16.msra.mxu0 %v1011
      %1108 = vmatprep.subr.bf16.mxu0 %v1008
      %1109 = vmatpush1.bf16.msra.mxu0 %v1007
      %1110 = vmatprep.subr.bf16.mxu0 %v1004
      %1111 = vmatpush1.bf16.msra.mxu0 %v1003
      %1112 = vmatprep.subr.bf16.mxu0 %v1000
      %1113 = vmatpush1.bf16.msra.mxu0 %v999
      %1114 = vmatprep.subr.bf16.mxu0 %v996
      %1115 = vmatpush1.bf16.msra.mxu0 %v995
      %1116 = vmatprep.subr.bf16.mxu0 0
      %1117 = vmatpush2.bf16.msra.mxu0 0
      %1118 = vmatprep.subr.bf16.mxu0 0
      %1119 = vmatpush2.bf16.msra.mxu0 0
      %1120 = vmatprep.subr.bf16.mxu0 0
      %1121 = vmatpush2.bf16.msra.mxu0 0
      %1122 = vmatprep.subr.bf16.mxu0 0
      %1123 = vmatpush2.bf16.msra.mxu0 0
      %1124 = vmatprep.subr.bf16.mxu0 0
      %1125 = vmatpush2.bf16.msra.mxu0 0
      %1126 = vmatprep.subr.bf16.mxu0 0
      %1127 = vmatpush2.bf16.msra.mxu0 0
      %1128 = vmatprep.subr.bf16.mxu0 0
      %1129 = vmatpush2.bf16.msra.mxu0 0
      %1130 = vmatprep.subr.bf16.mxu0 0
      %1131 = vmatpush2.bf16.msra.mxu0 0
      %1132 = vmatprep.mubr.bf16.mxu0 0
      %1133 = vmatmul.mubr.bf16.gmra.mxu0 %v842
      %v1134 = vpop.f32.mrf.mxu0
      %v1135 = vadd.f32 %v888, %v1134
      %v1136 = vpop.f32.mrf.mxu0
      %v1137 = vadd.f32 %v892, %v1136
      %v1138 = vpop.f32.mrf.mxu0
      %v1139 = vadd.f32 %v888, %v1138
      %v1140 = vpop.f32.mrf.mxu0
      %v1141 = vadd.f32 %v892, %v1140
      %1142 = vdwg.mxu0
      %v1143 = vsub.f32 0.0, %v1092
      %v1144 = vsub.f32 0.0, %v1094
      %v1145 = vsub.f32 0.0, %v1096
      %v1146 = vsub.f32 0.0, %v1098
      %v1147 = vmul.f32 %v1143, 1.442695
      %v1148 = vpow.pop %v1147
      %v1149 = vmul.f32 %v1144, 1.442695
      %v1150 = vpow.pop %v1149
      %v1151 = vmul.f32 %v1145, 1.442695
      %v1152 = vpow.pop %v1151
      %v1153 = vmul.f32 %v1146, 1.442695
      %v1154 = vpow.pop %v1153
      %v1155 = vadd.f32 %v1148, 1.0
      %v1156 = vadd.f32 %v1150, 1.0
      %v1157 = vadd.f32 %v1152, 1.0
      %v1158 = vadd.f32 %v1154, 1.0
      %v1159 = vrcp.pop %v1155
      %v1160 = vmul.f32 1.0, %v1159
      %v1161 = vrcp.pop %v1156
      %v1162 = vmul.f32 1.0, %v1161
      %v1163 = vrcp.pop %v1157
      %v1164 = vmul.f32 1.0, %v1163
      %v1165 = vrcp.pop %v1158
      %v1166 = vmul.f32 1.0, %v1165
      %v1167 = vmul.f32 %v1092, %v1160
      %v1168 = vmul.f32 %v1094, %v1162
      %v1169 = vmul.f32 %v1096, %v1164
      %v1170 = vmul.f32 %v1098, %v1166
      %v1171 = vpack.c.bf16 %v1169, %v1167
      %v1172 = vpack.c.bf16 %v1170, %v1168
      %v1173 = vld [vmem:[%s713] sm:$0xff]
      %v1174 = vld [vmem:[%s713 + $0x8] sm:$0xf]
      %v1175 = vld [vmem:[%s713 + $0xc] sm:$0xff]
      %v1176 = vld [vmem:[%s713 + $0x14] sm:$0xf]
      %v1177 = vld [vmem:[%s713 + $0x18] sm:$0xff]
      %v1178 = vld [vmem:[%s713 + $0x20] sm:$0xf]
      %v1179 = vld [vmem:[%s713 + $0x24] sm:$0xff]
      %v1180 = vld [vmem:[%s713 + $0x2c] sm:$0xf]
      %v1181 = vld [vmem:[%s713 + $0x30] sm:$0xff]
      %v1182 = vld [vmem:[%s713 + $0x38] sm:$0xf]
      %v1183 = vld [vmem:[%s713 + $0x3c] sm:$0xff]
      %v1184 = vld [vmem:[%s713 + $0x44] sm:$0xf]
      %v1185 = vld [vmem:[%s713 + $0x48] sm:$0xff]
      %v1186 = vld [vmem:[%s713 + $0x50] sm:$0xf]
      %v1187 = vld [vmem:[%s713 + $0x54] sm:$0xff]
      %v1188 = vld [vmem:[%s713 + $0x5c] sm:$0xf]
      %v1189 = vld [vmem:[%s713 + $0x60] sm:$0xff]
      %v1190 = vld [vmem:[%s713 + $0x68] sm:$0xf]
      %v1191 = vld [vmem:[%s713 + $0x6c] sm:$0xff]
      %v1192 = vld [vmem:[%s713 + $0x74] sm:$0xf]
      %v1193 = vld [vmem:[%s713 + $0x78] sm:$0xff]
      %v1194 = vld [vmem:[%s713 + $0x80] sm:$0xf]
      %v1195 = vld [vmem:[%s713 + $0x84] sm:$0xff]
      %v1196 = vld [vmem:[%s713 + $0x8c] sm:$0xf]
      %v1197 = vld [vmem:[%s713 + $0x90] sm:$0xff]
      %v1198 = vld [vmem:[%s713 + $0x98] sm:$0xf]
      %v1199 = vld [vmem:[%s713 + $0x9c] sm:$0xff]
      %v1200 = vld [vmem:[%s713 + $0xa4] sm:$0xf]
      %v1201 = vld [vmem:[%s713 + $0xa8] sm:$0xff]
      %v1202 = vld [vmem:[%s713 + $0xb0] sm:$0xf]
      %v1203 = vld [vmem:[%s713 + $0xb4] sm:$0xff]
      %v1204 = vld [vmem:[%s713 + $0xbc] sm:$0xf]
      %v1205 = vld [vmem:[%s713 + $0xc0] sm:$0xff]
      %v1206 = vld [vmem:[%s713 + $0xc8] sm:$0xf]
      %v1207 = vld [vmem:[%s713 + $0xcc] sm:$0xff]
      %v1208 = vld [vmem:[%s713 + $0xd4] sm:$0xf]
      %v1209 = vld [vmem:[%s713 + $0xd8] sm:$0xff]
      %v1210 = vld [vmem:[%s713 + $0xe0] sm:$0xf]
      %v1211 = vld [vmem:[%s713 + $0xe4] sm:$0xff]
      %v1212 = vld [vmem:[%s713 + $0xec] sm:$0xf]
      %v1213 = vld [vmem:[%s713 + $0xf0] sm:$0xff]
      %v1214 = vld [vmem:[%s713 + $0xf8] sm:$0xf]
      %v1215 = vld [vmem:[%s713 + $0xfc] sm:$0xff]
      %v1216 = vld [vmem:[%s713 + $0x104] sm:$0xf]
      %v1217 = vld [vmem:[%s713 + $0x108] sm:$0xff]
      %v1218 = vld [vmem:[%s713 + $0x110] sm:$0xf]
      %v1219 = vld [vmem:[%s713 + $0x114] sm:$0xff]
      %v1220 = vld [vmem:[%s713 + $0x11c] sm:$0xf]
      %v1221 = vld [vmem:[%s713 + $0x120] sm:$0xff]
      %v1222 = vld [vmem:[%s713 + $0x128] sm:$0xf]
      %v1223 = vld [vmem:[%s713 + $0x12c] sm:$0xff]
      %v1224 = vld [vmem:[%s713 + $0x134] sm:$0xf]
      %v1225 = vld [vmem:[%s713 + $0x138] sm:$0xff]
      %v1226 = vld [vmem:[%s713 + $0x140] sm:$0xf]
      %v1227 = vld [vmem:[%s713 + $0x144] sm:$0xff]
      %v1228 = vld [vmem:[%s713 + $0x14c] sm:$0xf]
      %v1229 = vld [vmem:[%s713 + $0x150] sm:$0xff]
      %v1230 = vld [vmem:[%s713 + $0x158] sm:$0xf]
      %v1231 = vld [vmem:[%s713 + $0x15c] sm:$0xff]
      %v1232 = vld [vmem:[%s713 + $0x164] sm:$0xf]
      %v1233 = vld [vmem:[%s713 + $0x168] sm:$0xff]
      %v1234 = vld [vmem:[%s713 + $0x170] sm:$0xf]
      %v1235 = vld [vmem:[%s713 + $0x174] sm:$0xff]
      %v1236 = vld [vmem:[%s713 + $0x17c] sm:$0xf]
      %v1237 = vld [vmem:[%s717] sm:$0x7]
      %v1239 = vlaneseq
      %v1240 = vshrl.u32 %v1239, 7
      %v1241 = vsub.s32 0, %v1240
      %v1242 = vrot.slane %v1237, %v1241
      %v1243 = vlaneseq
      %v1244 = vshrl.u32 %v1243, 7
      %v1245 = vsub.s32 1, %v1244
      %v1246 = vrot.slane %v1237, %v1245
      %v1247 = vlaneseq
      %v1248 = vshrl.u32 %v1247, 7
      %v1249 = vsub.s32 2, %v1248
      %v1250 = vrot.slane %v1237, %v1249
      %v1318 = vunpack.c.l.b16 %v1173
      %v1319 = vunpack.c.h.b16 %v1173
      %v1320 = vunpack.c.l.b16 %v1174
      %v1321 = vunpack.c.l.b16 %v1175
      %v1322 = vunpack.c.h.b16 %v1175
      %v1323 = vunpack.c.l.b16 %v1176
      %v1324 = vunpack.c.l.b16 %v1177
      %v1325 = vunpack.c.h.b16 %v1177
      %v1326 = vunpack.c.l.b16 %v1178
      %v1327 = vunpack.c.l.b16 %v1179
      %v1328 = vunpack.c.h.b16 %v1179
      %v1329 = vunpack.c.l.b16 %v1180
      %v1330 = vunpack.c.l.b16 %v1181
      %v1331 = vunpack.c.h.b16 %v1181
      %v1332 = vunpack.c.l.b16 %v1182
      %v1333 = vunpack.c.l.b16 %v1183
      %v1334 = vunpack.c.h.b16 %v1183
      %v1335 = vunpack.c.l.b16 %v1184
      %v1336 = vunpack.c.l.b16 %v1185
      %v1337 = vunpack.c.h.b16 %v1185
      %v1338 = vunpack.c.l.b16 %v1186
      %v1339 = vunpack.c.l.b16 %v1187
      %v1340 = vunpack.c.h.b16 %v1187
      %v1341 = vunpack.c.l.b16 %v1188
      %v1342 = vunpack.c.l.b16 %v1189
      %v1343 = vunpack.c.h.b16 %v1189
      %v1344 = vunpack.c.l.b16 %v1190
      %v1345 = vunpack.c.l.b16 %v1191
      %v1346 = vunpack.c.h.b16 %v1191
      %v1347 = vunpack.c.l.b16 %v1192
      %v1348 = vunpack.c.l.b16 %v1193
      %v1349 = vunpack.c.h.b16 %v1193
      %v1350 = vunpack.c.l.b16 %v1194
      %v1351 = vunpack.c.l.b16 %v1195
      %v1352 = vunpack.c.h.b16 %v1195
      %v1353 = vunpack.c.l.b16 %v1196
      %v1354 = vunpack.c.l.b16 %v1197
      %v1355 = vunpack.c.h.b16 %v1197
      %v1356 = vunpack.c.l.b16 %v1198
      %v1357 = vunpack.c.l.b16 %v1199
      %v1358 = vunpack.c.h.b16 %v1199
      %v1359 = vunpack.c.l.b16 %v1200
      %v1360 = vunpack.c.l.b16 %v1201
      %v1361 = vunpack.c.h.b16 %v1201
      %v1362 = vunpack.c.l.b16 %v1202
      %v1363 = vunpack.c.l.b16 %v1203
      %v1364 = vunpack.c.h.b16 %v1203
      %v1365 = vunpack.c.l.b16 %v1204
      %v1366 = vunpack.c.l.b16 %v1205
      %v1367 = vunpack.c.h.b16 %v1205
      %v1368 = vunpack.c.l.b16 %v1206
      %v1369 = vunpack.c.l.b16 %v1207
      %v1370 = vunpack.c.h.b16 %v1207
      %v1371 = vunpack.c.l.b16 %v1208
      %v1372 = vunpack.c.l.b16 %v1209
      %v1373 = vunpack.c.h.b16 %v1209
      %v1374 = vunpack.c.l.b16 %v1210
      %v1375 = vunpack.c.l.b16 %v1211
      %v1376 = vunpack.c.h.b16 %v1211
      %v1377 = vunpack.c.l.b16 %v1212
      %v1378 = vunpack.c.l.b16 %v1213
      %v1379 = vunpack.c.h.b16 %v1213
      %v1380 = vunpack.c.l.b16 %v1214
      %v1381 = vunpack.c.l.b16 %v1215
      %v1382 = vunpack.c.h.b16 %v1215
      %v1383 = vunpack.c.l.b16 %v1216
      %v1384 = vunpack.c.l.b16 %v1217
      %v1385 = vunpack.c.h.b16 %v1217
      %v1386 = vunpack.c.l.b16 %v1218
      %v1387 = vunpack.c.l.b16 %v1219
      %v1388 = vunpack.c.h.b16 %v1219
      %v1389 = vunpack.c.l.b16 %v1220
      %v1390 = vunpack.c.l.b16 %v1221
      %v1391 = vunpack.c.h.b16 %v1221
      %v1392 = vunpack.c.l.b16 %v1222
      %v1393 = vunpack.c.l.b16 %v1223
      %v1394 = vunpack.c.h.b16 %v1223
      %v1395 = vunpack.c.l.b16 %v1224
      %v1396 = vunpack.c.l.b16 %v1225
      %v1397 = vunpack.c.h.b16 %v1225
      %v1398 = vunpack.c.l.b16 %v1226
      %v1399 = vunpack.c.l.b16 %v1227
      %v1400 = vunpack.c.h.b16 %v1227
      %v1401 = vunpack.c.l.b16 %v1228
      %v1402 = vunpack.c.l.b16 %v1229
      %v1403 = vunpack.c.h.b16 %v1229
      %v1404 = vunpack.c.l.b16 %v1230
      %v1405 = vunpack.c.l.b16 %v1231
      %v1406 = vunpack.c.h.b16 %v1231
      %v1407 = vunpack.c.l.b16 %v1232
      %v1408 = vunpack.c.l.b16 %v1233
      %v1409 = vunpack.c.h.b16 %v1233
      %v1410 = vunpack.c.l.b16 %v1234
      %v1411 = vunpack.c.l.b16 %v1235
      %v1412 = vunpack.c.h.b16 %v1235
      %v1413 = vunpack.c.l.b16 %v1236
      %v1414 = vpack.c.b16 %v1321, %v1318
      %v1415 = vpack.c.b16 %v1322, %v1319
      %v1416 = vpack.c.b16 %v1323, %v1320
      %v1417 = vpack.c.b16 %v1327, %v1324
      %v1418 = vpack.c.b16 %v1328, %v1325
      %v1419 = vpack.c.b16 %v1329, %v1326
      %v1420 = vpack.c.b16 %v1333, %v1330
      %v1421 = vpack.c.b16 %v1334, %v1331
      %v1422 = vpack.c.b16 %v1335, %v1332
      %v1423 = vpack.c.b16 %v1339, %v1336
      %v1424 = vpack.c.b16 %v1340, %v1337
      %v1425 = vpack.c.b16 %v1341, %v1338
      %v1426 = vpack.c.b16 %v1345, %v1342
      %v1427 = vpack.c.b16 %v1346, %v1343
      %v1428 = vpack.c.b16 %v1347, %v1344
      %v1429 = vpack.c.b16 %v1351, %v1348
      %v1430 = vpack.c.b16 %v1352, %v1349
      %v1431 = vpack.c.b16 %v1353, %v1350
      %v1432 = vpack.c.b16 %v1357, %v1354
      %v1433 = vpack.c.b16 %v1358, %v1355
      %v1434 = vpack.c.b16 %v1359, %v1356
      %v1435 = vpack.c.b16 %v1363, %v1360
      %v1436 = vpack.c.b16 %v1364, %v1361
      %v1437 = vpack.c.b16 %v1365, %v1362
      %v1438 = vpack.c.b16 %v1369, %v1366
      %v1439 = vpack.c.b16 %v1370, %v1367
      %v1440 = vpack.c.b16 %v1371, %v1368
      %v1441 = vpack.c.b16 %v1375, %v1372
      %v1442 = vpack.c.b16 %v1376, %v1373
      %v1443 = vpack.c.b16 %v1377, %v1374
      %v1444 = vpack.c.b16 %v1381, %v1378
      %v1445 = vpack.c.b16 %v1382, %v1379
      %v1446 = vpack.c.b16 %v1383, %v1380
      %v1447 = vpack.c.b16 %v1387, %v1384
      %v1448 = vpack.c.b16 %v1388, %v1385
      %v1449 = vpack.c.b16 %v1389, %v1386
      %v1450 = vpack.c.b16 %v1393, %v1390
      %v1451 = vpack.c.b16 %v1394, %v1391
      %v1452 = vpack.c.b16 %v1395, %v1392
      %v1453 = vpack.c.b16 %v1399, %v1396
      %v1454 = vpack.c.b16 %v1400, %v1397
      %v1455 = vpack.c.b16 %v1401, %v1398
      %v1456 = vpack.c.b16 %v1405, %v1402
      %v1457 = vpack.c.b16 %v1406, %v1403
      %v1458 = vpack.c.b16 %v1407, %v1404
      %v1459 = vpack.c.b16 %v1411, %v1408
      %v1460 = vpack.c.b16 %v1412, %v1409
      %v1461 = vpack.c.b16 %v1413, %v1410
      %1510 = vmatprep.subr.bf16.mxu0 %v1436
      %1511 = vmatpush1.bf16.msra.mxu0 %v1435
      %1512 = vmatprep.subr.bf16.mxu0 %v1433
      %1513 = vmatpush1.bf16.msra.mxu0 %v1432
      %1514 = vmatprep.subr.bf16.mxu0 %v1430
      %1515 = vmatpush1.bf16.msra.mxu0 %v1429
      %1516 = vmatprep.subr.bf16.mxu0 %v1427
      %1517 = vmatpush1.bf16.msra.mxu0 %v1426
      %1518 = vmatprep.subr.bf16.mxu0 %v1424
      %1519 = vmatpush1.bf16.msra.mxu0 %v1423
      %1520 = vmatprep.subr.bf16.mxu0 %v1421
      %1521 = vmatpush1.bf16.msra.mxu0 %v1420
      %1522 = vmatprep.subr.bf16.mxu0 %v1418
      %1523 = vmatpush1.bf16.msra.mxu0 %v1417
      %1524 = vmatprep.subr.bf16.mxu0 %v1415
      %1525 = vmatpush1.bf16.msra.mxu0 %v1414
      %1526 = vmatprep.subr.bf16.mxu0 %v1460
      %1527 = vmatpush2.bf16.msra.mxu0 %v1459
      %1528 = vmatprep.subr.bf16.mxu0 %v1457
      %1529 = vmatpush2.bf16.msra.mxu0 %v1456
      %1530 = vmatprep.subr.bf16.mxu0 %v1454
      %1531 = vmatpush2.bf16.msra.mxu0 %v1453
      %1532 = vmatprep.subr.bf16.mxu0 %v1451
      %1533 = vmatpush2.bf16.msra.mxu0 %v1450
      %1534 = vmatprep.subr.bf16.mxu0 %v1448
      %1535 = vmatpush2.bf16.msra.mxu0 %v1447
      %1536 = vmatprep.subr.bf16.mxu0 %v1445
      %1537 = vmatpush2.bf16.msra.mxu0 %v1444
      %1538 = vmatprep.subr.bf16.mxu0 %v1442
      %1539 = vmatpush2.bf16.msra.mxu0 %v1441
      %1540 = vmatprep.subr.bf16.mxu0 %v1439
      %1541 = vmatpush2.bf16.msra.mxu0 %v1438
      %1542 = vmatprep.mubr.bf16.mxu0 %v1172
      %1543 = vmatmul.mubr.bf16.gmra.mxu0 %v1171
      %v1544 = vpop.f32.mrf.mxu0
      %v1545 = vadd.f32 %v1242, %v1544
      %v1546 = vpop.f32.mrf.mxu0
      %v1547 = vadd.f32 %v1246, %v1546
      %v1548 = vpop.f32.mrf.mxu0
      %v1549 = vadd.f32 %v1242, %v1548
      %v1550 = vpop.f32.mrf.mxu0
      %v1551 = vadd.f32 %v1246, %v1550
      %1552 = vdwg.mxu0
      %1553 = vmatprep.subr.bf16.mxu0 0
      %1554 = vmatpush1.bf16.msra.mxu0 %v1437
      %1555 = vmatprep.subr.bf16.mxu0 0
      %1556 = vmatpush1.bf16.msra.mxu0 %v1434
      %1557 = vmatprep.subr.bf16.mxu0 0
      %1558 = vmatpush1.bf16.msra.mxu0 %v1431
      %1559 = vmatprep.subr.bf16.mxu0 0
      %1560 = vmatpush1.bf16.msra.mxu0 %v1428
      %1561 = vmatprep.subr.bf16.mxu0 0
      %1562 = vmatpush1.bf16.msra.mxu0 %v1425
      %1563 = vmatprep.subr.bf16.mxu0 0
      %1564 = vmatpush1.bf16.msra.mxu0 %v1422
      %1565 = vmatprep.subr.bf16.mxu0 0
      %1566 = vmatpush1.bf16.msra.mxu0 %v1419
      %1567 = vmatprep.subr.bf16.mxu0 0
      %1568 = vmatpush1.bf16.msra.mxu0 %v1416
      %1569 = vmatprep.subr.bf16.mxu0 0
      %1570 = vmatpush2.bf16.msra.mxu0 %v1461
      %1571 = vmatprep.subr.bf16.mxu0 0
      %1572 = vmatpush2.bf16.msra.mxu0 %v1458
      %1573 = vmatprep.subr.bf16.mxu0 0
      %1574 = vmatpush2.bf16.msra.mxu0 %v1455
      %1575 = vmatprep.subr.bf16.mxu0 0
      %1576 = vmatpush2.bf16.msra.mxu0 %v1452
      %1577 = vmatprep.subr.bf16.mxu0 0
      %1578 = vmatpush2.bf16.msra.mxu0 %v1449
      %1579 = vmatprep.subr.bf16.mxu0 0
      %1580 = vmatpush2.bf16.msra.mxu0 %v1446
      %1581 = vmatprep.subr.bf16.mxu0 0
      %1582 = vmatpush2.bf16.msra.mxu0 %v1443
      %1583 = vmatprep.subr.bf16.mxu0 0
      %1584 = vmatpush2.bf16.msra.mxu0 %v1440
      %1585 = vmatprep.mubr.bf16.mxu0 %v1172
      %1586 = vmatmul.mubr.bf16.gmra.mxu0 %v1171
      %v1587 = vpop.f32.mrf.mxu0
      %v1588 = vadd.f32 %v1250, %v1587
      %v1589 = vpop.f32.mrf.mxu0
      %v1590 = vpop.f32.mrf.mxu0
      %v1591 = vadd.f32 %v1250, %v1590
      %v1592 = vpop.f32.mrf.mxu0
      %1593 = vdwg.mxu0
      %v1594 = vmax.f32 %v1545, 0.0
      %v1595 = vmax.f32 %v1547, 0.0
      %v1596 = vmax.f32 %v1549, 0.0
      %v1597 = vmax.f32 %v1551, 0.0
      %v1598 = vand.u32 2147483647, %v1545
      %v1599 = vand.u32 2147483647, %v1547
      %v1600 = vand.u32 2147483647, %v1549
      %v1601 = vand.u32 2147483647, %v1551
      %v1602 = vsub.f32 0.0, %v1598
      %v1603 = vsub.f32 0.0, %v1599
      %v1604 = vsub.f32 0.0, %v1600
      %v1605 = vsub.f32 0.0, %v1601
      %v1606 = vmul.f32 %v1602, 1.442695
      %v1607 = vpow.pop %v1606
      %v1608 = vmul.f32 %v1603, 1.442695
      %v1609 = vpow.pop %v1608
      %v1610 = vmul.f32 %v1604, 1.442695
      %v1611 = vpow.pop %v1610
      %v1612 = vmul.f32 %v1605, 1.442695
      %v1613 = vpow.pop %v1612
      %v1614 = vadd.f32 %v1607, 1.0
      %v1615 = vlog2.pop %v1614
      %v1616 = vmul.f32 %v1615, 0.6931472
      %v1617 = vmul.f32 -0.5, %v1607
      %v1618 = vadd.f32 %v1617, 1.0
      %v1619 = vmul.f32 %v1618, %v1607
      %v1620 = vand.u32 2147483647, %v1607
      %vm1621 = vcmp.lt.f32.partialorder %v1620, 0.0004427343
      %v1622 = vsel %vm1621, %v1619, %v1616
      %v1623 = vadd.f32 %v1609, 1.0
      %v1624 = vlog2.pop %v1623
      %v1625 = vmul.f32 %v1624, 0.6931472
      %v1626 = vmul.f32 -0.5, %v1609
      %v1627 = vadd.f32 %v1626, 1.0
      %v1628 = vmul.f32 %v1627, %v1609
      %v1629 = vand.u32 2147483647, %v1609
      %vm1630 = vcmp.lt.f32.partialorder %v1629, 0.0004427343
      %v1631 = vsel %vm1630, %v1628, %v1625
      %v1632 = vadd.f32 %v1611, 1.0
      %v1633 = vlog2.pop %v1632
      %v1634 = vmul.f32 %v1633, 0.6931472
      %v1635 = vmul.f32 -0.5, %v1611
      %v1636 = vadd.f32 %v1635, 1.0
      %v1637 = vmul.f32 %v1636, %v1611
      %v1638 = vand.u32 2147483647, %v1611
      %vm1639 = vcmp.lt.f32.partialorder %v1638, 0.0004427343
      %v1640 = vsel %vm1639, %v1637, %v1634
      %v1641 = vadd.f32 %v1613, 1.0
      %v1642 = vlog2.pop %v1641
      %v1643 = vmul.f32 %v1642, 0.6931472
      %v1644 = vmul.f32 -0.5, %v1613
      %v1645 = vadd.f32 %v1644, 1.0
      %v1646 = vmul.f32 %v1645, %v1613
      %v1647 = vand.u32 2147483647, %v1613
      %vm1648 = vcmp.lt.f32.partialorder %v1647, 0.0004427343
      %v1649 = vsel %vm1648, %v1646, %v1643
      %v1650 = vadd.f32 %v1594, %v1622
      %v1651 = vadd.f32 %v1595, %v1631
      %v1652 = vadd.f32 %v1596, %v1640
      %v1653 = vadd.f32 %v1597, %v1649
      %v1654 = vld [vmem:[%s730] sm:$0xff]
      %v1655 = vld [vmem:[%s730 + $0x8] sm:$0xff]
      %v1656 = vld [vmem:[%s730 + $0x10] sm:$0xff]
      %v1657 = vld [vmem:[%s730 + $0x18] sm:$0xff]
      %v1658 = vld [vmem:[%s734] sm:$0x3]
      %v1663 = vcombine.low %v1650, %v1651
      %v1664 = vcombine.high %v1650, %v1651
      %v1666 = vunpack.c.l.s4 1966171168
      %v1667 = vunpack.c.0.s8 %v1666
      %v1668 = vlaneseq
      %v1669 = vshrl.u32 %v1668, 7
      %v1670 = vsub.s32 %v1667, %v1669
      %v1671 = vrot.slane %v1663, %v1670
      %v1673 = vunpack.c.l.s4 1966171168
      %v1674 = vunpack.c.0.s8 %v1673
      %v1675 = vlaneseq
      %v1676 = vshrl.u32 %v1675, 7
      %v1677 = vsub.s32 %v1674, %v1676
      %v1678 = vrot.slane %v1664, %v1677
      %v1679 = vcombine.high %v1671, %v1671
      %v1680 = vcombine.high %v1678, %v1678
      %v1682 = vunpack.c.l.s4 1966171168
      %v1683 = vunpack.c.0.s8 %v1682
      %v1684 = vlaneseq
      %v1685 = vshrl.u32 %v1684, 7
      %v1686 = vsub.s32 %v1683, %v1685
      %v1687 = vrot.slane %v1671, %v1686
      %v1689 = vunpack.c.l.s4 1966171168
      %v1690 = vunpack.c.0.s8 %v1689
      %v1691 = vlaneseq
      %v1692 = vshrl.u32 %v1691, 7
      %v1693 = vsub.s32 %v1690, %v1692
      %v1694 = vrot.slane %v1678, %v1693
      %v1696 = vunpack.c.l.s4 1966171168
      %v1697 = vunpack.c.0.s8 %v1696
      %v1698 = vlaneseq
      %v1699 = vshrl.u32 %v1698, 7
      %v1700 = vsub.s32 %v1697, %v1699
      %v1701 = vrot.slane %v1679, %v1700
      %v1703 = vunpack.c.l.s4 1966171168
      %v1704 = vunpack.c.0.s8 %v1703
      %v1705 = vlaneseq
      %v1706 = vshrl.u32 %v1705, 7
      %v1707 = vsub.s32 %v1704, %v1706
      %v1708 = vrot.slane %v1680, %v1707
      %v1709 = vcombine.high %v1687, %v1687
      %v1710 = vcombine.high %v1694, %v1694
      %v1711 = vcombine.high %v1701, %v1701
      %v1712 = vcombine.high %v1708, %v1708
      %v1713 = vcombine.low %v1652, %v1653
      %v1714 = vcombine.high %v1652, %v1653
      %v1716 = vunpack.c.l.s4 1966171168
      %v1717 = vunpack.c.0.s8 %v1716
      %v1718 = vlaneseq
      %v1719 = vshrl.u32 %v1718, 7
      %v1720 = vsub.s32 %v1717, %v1719
      %v1721 = vrot.slane %v1713, %v1720
      %v1723 = vunpack.c.l.s4 1966171168
      %v1724 = vunpack.c.0.s8 %v1723
      %v1725 = vlaneseq
      %v1726 = vshrl.u32 %v1725, 7
      %v1727 = vsub.s32 %v1724, %v1726
      %v1728 = vrot.slane %v1714, %v1727
      %v1729 = vcombine.high %v1721, %v1721
      %v1730 = vcombine.high %v1728, %v1728
      %v1732 = vunpack.c.l.s4 1966171168
      %v1733 = vunpack.c.0.s8 %v1732
      %v1734 = vlaneseq
      %v1735 = vshrl.u32 %v1734, 7
      %v1736 = vsub.s32 %v1733, %v1735
      %v1737 = vrot.slane %v1721, %v1736
      %v1739 = vunpack.c.l.s4 1966171168
      %v1740 = vunpack.c.0.s8 %v1739
      %v1741 = vlaneseq
      %v1742 = vshrl.u32 %v1741, 7
      %v1743 = vsub.s32 %v1740, %v1742
      %v1744 = vrot.slane %v1728, %v1743
      %v1746 = vunpack.c.l.s4 1966171168
      %v1747 = vunpack.c.0.s8 %v1746
      %v1748 = vlaneseq
      %v1749 = vshrl.u32 %v1748, 7
      %v1750 = vsub.s32 %v1747, %v1749
      %v1751 = vrot.slane %v1729, %v1750
      %v1753 = vunpack.c.l.s4 1966171168
      %v1754 = vunpack.c.0.s8 %v1753
      %v1755 = vlaneseq
      %v1756 = vshrl.u32 %v1755, 7
      %v1757 = vsub.s32 %v1754, %v1756
      %v1758 = vrot.slane %v1730, %v1757
      %v1759 = vcombine.high %v1737, %v1737
      %v1760 = vcombine.high %v1744, %v1744
      %v1761 = vcombine.high %v1751, %v1751
      %v1762 = vcombine.high %v1758, %v1758
      %v1763 = vlaneseq
      %v1764 = vshrl.u32 %v1763, 7
      %v1765 = vsub.s32 0, %v1764
      %v1766 = vrot.slane %v1687, %v1765
      %v1767 = vlaneseq
      %v1768 = vshrl.u32 %v1767, 7
      %v1769 = vsub.s32 1, %v1768
      %v1770 = vrot.slane %v1687, %v1769
      %v1771 = vlaneseq
      %v1772 = vshrl.u32 %v1771, 7
      %v1773 = vsub.s32 0, %v1772
      %v1774 = vrot.slane %v1701, %v1773
      %v1775 = vlaneseq
      %v1776 = vshrl.u32 %v1775, 7
      %v1777 = vsub.s32 1, %v1776
      %v1778 = vrot.slane %v1701, %v1777
      %v1779 = vlaneseq
      %v1780 = vshrl.u32 %v1779, 7
      %v1781 = vsub.s32 0, %v1780
      %v1782 = vrot.slane %v1709, %v1781
      %v1783 = vlaneseq
      %v1784 = vshrl.u32 %v1783, 7
      %v1785 = vsub.s32 1, %v1784
      %v1786 = vrot.slane %v1709, %v1785
      %v1787 = vlaneseq
      %v1788 = vshrl.u32 %v1787, 7
      %v1789 = vsub.s32 0, %v1788
      %v1790 = vrot.slane %v1711, %v1789
      %v1791 = vlaneseq
      %v1792 = vshrl.u32 %v1791, 7
      %v1793 = vsub.s32 1, %v1792
      %v1794 = vrot.slane %v1711, %v1793
      %v1795 = vlaneseq
      %v1796 = vshrl.u32 %v1795, 7
      %v1797 = vsub.s32 0, %v1796
      %v1798 = vrot.slane %v1694, %v1797
      %v1799 = vlaneseq
      %v1800 = vshrl.u32 %v1799, 7
      %v1801 = vsub.s32 1, %v1800
      %v1802 = vrot.slane %v1694, %v1801
      %v1803 = vlaneseq
      %v1804 = vshrl.u32 %v1803, 7
      %v1805 = vsub.s32 0, %v1804
      %v1806 = vrot.slane %v1708, %v1805
      %v1807 = vlaneseq
      %v1808 = vshrl.u32 %v1807, 7
      %v1809 = vsub.s32 1, %v1808
      %v1810 = vrot.slane %v1708, %v1809
      %v1811 = vlaneseq
      %v1812 = vshrl.u32 %v1811, 7
      %v1813 = vsub.s32 0, %v1812
      %v1814 = vrot.slane %v1710, %v1813
      %v1815 = vlaneseq
      %v1816 = vshrl.u32 %v1815, 7
      %v1817 = vsub.s32 1, %v1816
      %v1818 = vrot.slane %v1710, %v1817
      %v1819 = vlaneseq
      %v1820 = vshrl.u32 %v1819, 7
      %v1821 = vsub.s32 0, %v1820
      %v1822 = vrot.slane %v1712, %v1821
      %v1823 = vlaneseq
      %v1824 = vshrl.u32 %v1823, 7
      %v1825 = vsub.s32 1, %v1824
      %v1826 = vrot.slane %v1712, %v1825
      %v1827 = vlaneseq
      %v1828 = vshrl.u32 %v1827, 7
      %v1829 = vsub.s32 0, %v1828
      %v1830 = vrot.slane %v1737, %v1829
      %v1831 = vlaneseq
      %v1832 = vshrl.u32 %v1831, 7
      %v1833 = vsub.s32 1, %v1832
      %v1834 = vrot.slane %v1737, %v1833
      %v1835 = vlaneseq
      %v1836 = vshrl.u32 %v1835, 7
      %v1837 = vsub.s32 0, %v1836
      %v1838 = vrot.slane %v1751, %v1837
      %v1839 = vlaneseq
      %v1840 = vshrl.u32 %v1839, 7
      %v1841 = vsub.s32 1, %v1840
      %v1842 = vrot.slane %v1751, %v1841
      %v1843 = vlaneseq
      %v1844 = vshrl.u32 %v1843, 7
      %v1845 = vsub.s32 0, %v1844
      %v1846 = vrot.slane %v1759, %v1845
      %v1847 = vlaneseq
      %v1848 = vshrl.u32 %v1847, 7
      %v1849 = vsub.s32 1, %v1848
      %v1850 = vrot.slane %v1759, %v1849
      %v1851 = vlaneseq
      %v1852 = vshrl.u32 %v1851, 7
      %v1853 = vsub.s32 0, %v1852
      %v1854 = vrot.slane %v1761, %v1853
      %v1855 = vlaneseq
      %v1856 = vshrl.u32 %v1855, 7
      %v1857 = vsub.s32 1, %v1856
      %v1858 = vrot.slane %v1761, %v1857
      %v1859 = vlaneseq
      %v1860 = vshrl.u32 %v1859, 7
      %v1861 = vsub.s32 0, %v1860
      %v1862 = vrot.slane %v1744, %v1861
      %v1863 = vlaneseq
      %v1864 = vshrl.u32 %v1863, 7
      %v1865 = vsub.s32 1, %v1864
      %v1866 = vrot.slane %v1744, %v1865
      %v1867 = vlaneseq
      %v1868 = vshrl.u32 %v1867, 7
      %v1869 = vsub.s32 0, %v1868
      %v1870 = vrot.slane %v1758, %v1869
      %v1871 = vlaneseq
      %v1872 = vshrl.u32 %v1871, 7
      %v1873 = vsub.s32 1, %v1872
      %v1874 = vrot.slane %v1758, %v1873
      %v1875 = vlaneseq
      %v1876 = vshrl.u32 %v1875, 7
      %v1877 = vsub.s32 0, %v1876
      %v1878 = vrot.slane %v1760, %v1877
      %v1879 = vlaneseq
      %v1880 = vshrl.u32 %v1879, 7
      %v1881 = vsub.s32 1, %v1880
      %v1882 = vrot.slane %v1760, %v1881
      %v1883 = vlaneseq
      %v1884 = vshrl.u32 %v1883, 7
      %v1885 = vsub.s32 0, %v1884
      %v1886 = vrot.slane %v1762, %v1885
      %v1887 = vlaneseq
      %v1888 = vshrl.u32 %v1887, 7
      %v1889 = vsub.s32 1, %v1888
      %v1890 = vrot.slane %v1762, %v1889
      %v1923 = vmul.f32 %v1766, %v1654
      %v1924 = vmul.f32 %v1770, %v1655
      %v1925 = vmul.f32 %v1766, %v1656
      %v1926 = vmul.f32 %v1770, %v1657
      %v1927 = vmul.f32 %v1774, %v1654
      %v1928 = vmul.f32 %v1778, %v1655
      %v1929 = vmul.f32 %v1774, %v1656
      %v1930 = vmul.f32 %v1778, %v1657
      %v1931 = vmul.f32 %v1782, %v1654
      %v1932 = vmul.f32 %v1786, %v1655
      %v1933 = vmul.f32 %v1782, %v1656
      %v1934 = vmul.f32 %v1786, %v1657
      %v1935 = vmul.f32 %v1790, %v1654
      %v1936 = vmul.f32 %v1794, %v1655
      %v1937 = vmul.f32 %v1790, %v1656
      %v1938 = vmul.f32 %v1794, %v1657
      %v1939 = vmul.f32 %v1798, %v1654
      %v1940 = vmul.f32 %v1802, %v1655
      %v1941 = vmul.f32 %v1798, %v1656
      %v1942 = vmul.f32 %v1802, %v1657
      %v1943 = vmul.f32 %v1806, %v1654
      %v1944 = vmul.f32 %v1810, %v1655
      %v1945 = vmul.f32 %v1806, %v1656
      %v1946 = vmul.f32 %v1810, %v1657
      %v1947 = vmul.f32 %v1814, %v1654
      %v1948 = vmul.f32 %v1818, %v1655
      %v1949 = vmul.f32 %v1814, %v1656
      %v1950 = vmul.f32 %v1818, %v1657
      %v1951 = vmul.f32 %v1822, %v1654
      %v1952 = vmul.f32 %v1826, %v1655
      %v1953 = vmul.f32 %v1822, %v1656
      %v1954 = vmul.f32 %v1826, %v1657
      %v1955 = vmul.f32 %v1830, %v1654
      %v1956 = vmul.f32 %v1834, %v1655
      %v1957 = vmul.f32 %v1830, %v1656
      %v1958 = vmul.f32 %v1834, %v1657
      %v1959 = vmul.f32 %v1838, %v1654
      %v1960 = vmul.f32 %v1842, %v1655
      %v1961 = vmul.f32 %v1838, %v1656
      %v1962 = vmul.f32 %v1842, %v1657
      %v1963 = vmul.f32 %v1846, %v1654
      %v1964 = vmul.f32 %v1850, %v1655
      %v1965 = vmul.f32 %v1846, %v1656
      %v1966 = vmul.f32 %v1850, %v1657
      %v1967 = vmul.f32 %v1854, %v1654
      %v1968 = vmul.f32 %v1858, %v1655
      %v1969 = vmul.f32 %v1854, %v1656
      %v1970 = vmul.f32 %v1858, %v1657
      %v1971 = vmul.f32 %v1862, %v1654
      %v1972 = vmul.f32 %v1866, %v1655
      %v1973 = vmul.f32 %v1862, %v1656
      %v1974 = vmul.f32 %v1866, %v1657
      %v1975 = vmul.f32 %v1870, %v1654
      %v1976 = vmul.f32 %v1874, %v1655
      %v1977 = vmul.f32 %v1870, %v1656
      %v1978 = vmul.f32 %v1874, %v1657
      %v1979 = vmul.f32 %v1878, %v1654
      %v1980 = vmul.f32 %v1882, %v1655
      %v1981 = vmul.f32 %v1878, %v1656
      %v1982 = vmul.f32 %v1882, %v1657
      %v1983 = vmul.f32 %v1886, %v1654
      %v1984 = vmul.f32 %v1890, %v1655
      %v1985 = vmul.f32 %v1886, %v1656
      %v1986 = vmul.f32 %v1890, %v1657
      %v1987 = vmul.f32 %v1923, 1.442695
      %v1988 = vpow.pop %v1987
      %v1989 = vmul.f32 %v1924, 1.442695
      %v1990 = vpow.pop %v1989
      %v1991 = vmul.f32 %v1925, 1.442695
      %v1992 = vpow.pop %v1991
      %v1993 = vmul.f32 %v1926, 1.442695
      %v1994 = vpow.pop %v1993
      %v1995 = vmul.f32 %v1927, 1.442695
      %v1996 = vpow.pop %v1995
      %v1997 = vmul.f32 %v1928, 1.442695
      %v1998 = vpow.pop %v1997
      %v1999 = vmul.f32 %v1929, 1.442695
      %v2000 = vpow.pop %v1999
      %v2001 = vmul.f32 %v1930, 1.442695
      %v2002 = vpow.pop %v2001
      %v2003 = vmul.f32 %v1931, 1.442695
      %v2004 = vpow.pop %v2003
      %v2005 = vmul.f32 %v1932, 1.442695
      %v2006 = vpow.pop %v2005
      %v2007 = vmul.f32 %v1933, 1.442695
      %v2008 = vpow.pop %v2007
      %v2009 = vmul.f32 %v1934, 1.442695
      %v2010 = vpow.pop %v2009
      %v2011 = vmul.f32 %v1935, 1.442695
      %v2012 = vpow.pop %v2011
      %v2013 = vmul.f32 %v1936, 1.442695
      %v2014 = vpow.pop %v2013
      %v2015 = vmul.f32 %v1937, 1.442695
      %v2016 = vpow.pop %v2015
      %v2017 = vmul.f32 %v1938, 1.442695
      %v2018 = vpow.pop %v2017
      %v2019 = vmul.f32 %v1939, 1.442695
      %v2020 = vpow.pop %v2019
      %v2021 = vmul.f32 %v1940, 1.442695
      %v2022 = vpow.pop %v2021
      %v2023 = vmul.f32 %v1941, 1.442695
      %v2024 = vpow.pop %v2023
      %v2025 = vmul.f32 %v1942, 1.442695
      %v2026 = vpow.pop %v2025
      %v2027 = vmul.f32 %v1943, 1.442695
      %v2028 = vpow.pop %v2027
      %v2029 = vmul.f32 %v1944, 1.442695
      %v2030 = vpow.pop %v2029
      %v2031 = vmul.f32 %v1945, 1.442695
      %v2032 = vpow.pop %v2031
      %v2033 = vmul.f32 %v1946, 1.442695
      %v2034 = vpow.pop %v2033
      %v2035 = vmul.f32 %v1947, 1.442695
      %v2036 = vpow.pop %v2035
      %v2037 = vmul.f32 %v1948, 1.442695
      %v2038 = vpow.pop %v2037
      %v2039 = vmul.f32 %v1949, 1.442695
      %v2040 = vpow.pop %v2039
      %v2041 = vmul.f32 %v1950, 1.442695
      %v2042 = vpow.pop %v2041
      %v2043 = vmul.f32 %v1951, 1.442695
      %v2044 = vpow.pop %v2043
      %v2045 = vmul.f32 %v1952, 1.442695
      %v2046 = vpow.pop %v2045
      %v2047 = vmul.f32 %v1953, 1.442695
      %v2048 = vpow.pop %v2047
      %v2049 = vmul.f32 %v1954, 1.442695
      %v2050 = vpow.pop %v2049
      %v2051 = vmul.f32 %v1955, 1.442695
      %v2052 = vpow.pop %v2051
      %v2053 = vmul.f32 %v1956, 1.442695
      %v2054 = vpow.pop %v2053
      %v2055 = vmul.f32 %v1957, 1.442695
      %v2056 = vpow.pop %v2055
      %v2057 = vmul.f32 %v1958, 1.442695
      %v2058 = vpow.pop %v2057
      %v2059 = vmul.f32 %v1959, 1.442695
      %v2060 = vpow.pop %v2059
      %v2061 = vmul.f32 %v1960, 1.442695
      %v2062 = vpow.pop %v2061
      %v2063 = vmul.f32 %v1961, 1.442695
      %v2064 = vpow.pop %v2063
      %v2065 = vmul.f32 %v1962, 1.442695
      %v2066 = vpow.pop %v2065
      %v2067 = vmul.f32 %v1963, 1.442695
      %v2068 = vpow.pop %v2067
      %v2069 = vmul.f32 %v1964, 1.442695
      %v2070 = vpow.pop %v2069
      %v2071 = vmul.f32 %v1965, 1.442695
      %v2072 = vpow.pop %v2071
      %v2073 = vmul.f32 %v1966, 1.442695
      %v2074 = vpow.pop %v2073
      %v2075 = vmul.f32 %v1967, 1.442695
      %v2076 = vpow.pop %v2075
      %v2077 = vmul.f32 %v1968, 1.442695
      %v2078 = vpow.pop %v2077
      %v2079 = vmul.f32 %v1969, 1.442695
      %v2080 = vpow.pop %v2079
      %v2081 = vmul.f32 %v1970, 1.442695
      %v2082 = vpow.pop %v2081
      %v2083 = vmul.f32 %v1971, 1.442695
      %v2084 = vpow.pop %v2083
      %v2085 = vmul.f32 %v1972, 1.442695
      %v2086 = vpow.pop %v2085
      %v2087 = vmul.f32 %v1973, 1.442695
      %v2088 = vpow.pop %v2087
      %v2089 = vmul.f32 %v1974, 1.442695
      %v2090 = vpow.pop %v2089
      %v2091 = vmul.f32 %v1975, 1.442695
      %v2092 = vpow.pop %v2091
      %v2093 = vmul.f32 %v1976, 1.442695
      %v2094 = vpow.pop %v2093
      %v2095 = vmul.f32 %v1977, 1.442695
      %v2096 = vpow.pop %v2095
      %v2097 = vmul.f32 %v1978, 1.442695
      %v2098 = vpow.pop %v2097
      %v2099 = vmul.f32 %v1979, 1.442695
      %v2100 = vpow.pop %v2099
      %v2101 = vmul.f32 %v1980, 1.442695
      %v2102 = vpow.pop %v2101
      %v2103 = vmul.f32 %v1981, 1.442695
      %v2104 = vpow.pop %v2103
      %v2105 = vmul.f32 %v1982, 1.442695
      %v2106 = vpow.pop %v2105
      %v2107 = vmul.f32 %v1983, 1.442695
      %v2108 = vpow.pop %v2107
      %v2109 = vmul.f32 %v1984, 1.442695
      %v2110 = vpow.pop %v2109
      %v2111 = vmul.f32 %v1985, 1.442695
      %v2112 = vpow.pop %v2111
      %v2113 = vmul.f32 %v1986, 1.442695
      %v2114 = vpow.pop %v2113
      %v2115 = vlaneseq
      %v2116 = vshrl.u32 %v2115, 7
      %v2117 = vsub.s32 0, %v2116
      %v2118 = vrot.slane %v1588, %v2117
      %2120 = vbcast.lane.b32.xlu0 %v2118, 256
      %v2121 = vpop.permute.xlu0 %2120
      %s2123 = sor.u32 256, 8
      %2124 = vbcast.lane.b32.xlu0 %v2118, %s2123
      %v2125 = vpop.permute.xlu0 %2124
      %v2126 = vlaneseq
      %v2127 = vshrl.u32 %v2126, 7
      %v2128 = vsub.s32 1, %v2127
      %v2129 = vrot.slane %v1588, %v2128
      %2131 = vbcast.lane.b32.xlu0 %v2129, 256
      %v2132 = vpop.permute.xlu0 %2131
      %s2134 = sor.u32 256, 8
      %2135 = vbcast.lane.b32.xlu0 %v2129, %s2134
      %v2136 = vpop.permute.xlu0 %2135
      %v2137 = vlaneseq
      %v2138 = vshrl.u32 %v2137, 7
      %v2139 = vsub.s32 2, %v2138
      %v2140 = vrot.slane %v1588, %v2139
      %2142 = vbcast.lane.b32.xlu0 %v2140, 256
      %v2143 = vpop.permute.xlu0 %2142
      %s2145 = sor.u32 256, 8
      %2146 = vbcast.lane.b32.xlu0 %v2140, %s2145
      %v2147 = vpop.permute.xlu0 %2146
      %v2148 = vlaneseq
      %v2149 = vshrl.u32 %v2148, 7
      %v2150 = vsub.s32 3, %v2149
      %v2151 = vrot.slane %v1588, %v2150
      %2153 = vbcast.lane.b32.xlu0 %v2151, 256
      %v2154 = vpop.permute.xlu0 %2153
      %s2156 = sor.u32 256, 8
      %2157 = vbcast.lane.b32.xlu0 %v2151, %s2156
      %v2158 = vpop.permute.xlu0 %2157
      %v2159 = vlaneseq
      %v2160 = vshrl.u32 %v2159, 7
      %v2161 = vsub.s32 4, %v2160
      %v2162 = vrot.slane %v1588, %v2161
      %2164 = vbcast.lane.b32.xlu0 %v2162, 256
      %v2165 = vpop.permute.xlu0 %2164
      %s2167 = sor.u32 256, 8
      %2168 = vbcast.lane.b32.xlu0 %v2162, %s2167
      %v2169 = vpop.permute.xlu0 %2168
      %v2170 = vlaneseq
      %v2171 = vshrl.u32 %v2170, 7
      %v2172 = vsub.s32 5, %v2171
      %v2173 = vrot.slane %v1588, %v2172
      %2175 = vbcast.lane.b32.xlu0 %v2173, 256
      %v2176 = vpop.permute.xlu0 %2175
      %s2178 = sor.u32 256, 8
      %2179 = vbcast.lane.b32.xlu0 %v2173, %s2178
      %v2180 = vpop.permute.xlu0 %2179
      %v2181 = vlaneseq
      %v2182 = vshrl.u32 %v2181, 7
      %v2183 = vsub.s32 6, %v2182
      %v2184 = vrot.slane %v1588, %v2183
      %2186 = vbcast.lane.b32.xlu0 %v2184, 256
      %v2187 = vpop.permute.xlu0 %2186
      %s2189 = sor.u32 256, 8
      %2190 = vbcast.lane.b32.xlu0 %v2184, %s2189
      %v2191 = vpop.permute.xlu0 %2190
      %v2192 = vlaneseq
      %v2193 = vshrl.u32 %v2192, 7
      %v2194 = vsub.s32 7, %v2193
      %v2195 = vrot.slane %v1588, %v2194
      %2197 = vbcast.lane.b32.xlu0 %v2195, 256
      %v2198 = vpop.permute.xlu0 %2197
      %s2200 = sor.u32 256, 8
      %2201 = vbcast.lane.b32.xlu0 %v2195, %s2200
      %v2202 = vpop.permute.xlu0 %2201
      %v2203 = vlaneseq
      %v2204 = vshrl.u32 %v2203, 7
      %v2205 = vsub.s32 0, %v2204
      %v2206 = vrot.slane %v1591, %v2205
      %2208 = vbcast.lane.b32.xlu0 %v2206, 256
      %v2209 = vpop.permute.xlu0 %2208
      %s2211 = sor.u32 256, 8
      %2212 = vbcast.lane.b32.xlu0 %v2206, %s2211
      %v2213 = vpop.permute.xlu0 %2212
      %v2214 = vlaneseq
      %v2215 = vshrl.u32 %v2214, 7
      %v2216 = vsub.s32 1, %v2215
      %v2217 = vrot.slane %v1591, %v2216
      %2219 = vbcast.lane.b32.xlu0 %v2217, 256
      %v2220 = vpop.permute.xlu0 %2219
      %s2222 = sor.u32 256, 8
      %2223 = vbcast.lane.b32.xlu0 %v2217, %s2222
      %v2224 = vpop.permute.xlu0 %2223
      %v2225 = vlaneseq
      %v2226 = vshrl.u32 %v2225, 7
      %v2227 = vsub.s32 2, %v2226
      %v2228 = vrot.slane %v1591, %v2227
      %2230 = vbcast.lane.b32.xlu0 %v2228, 256
      %v2231 = vpop.permute.xlu0 %2230
      %s2233 = sor.u32 256, 8
      %2234 = vbcast.lane.b32.xlu0 %v2228, %s2233
      %v2235 = vpop.permute.xlu0 %2234
      %v2236 = vlaneseq
      %v2237 = vshrl.u32 %v2236, 7
      %v2238 = vsub.s32 3, %v2237
      %v2239 = vrot.slane %v1591, %v2238
      %2241 = vbcast.lane.b32.xlu0 %v2239, 256
      %v2242 = vpop.permute.xlu0 %2241
      %s2244 = sor.u32 256, 8
      %2245 = vbcast.lane.b32.xlu0 %v2239, %s2244
      %v2246 = vpop.permute.xlu0 %2245
      %v2247 = vlaneseq
      %v2248 = vshrl.u32 %v2247, 7
      %v2249 = vsub.s32 4, %v2248
      %v2250 = vrot.slane %v1591, %v2249
      %2252 = vbcast.lane.b32.xlu0 %v2250, 256
      %v2253 = vpop.permute.xlu0 %2252
      %s2255 = sor.u32 256, 8
      %2256 = vbcast.lane.b32.xlu0 %v2250, %s2255
      %v2257 = vpop.permute.xlu0 %2256
      %v2258 = vlaneseq
      %v2259 = vshrl.u32 %v2258, 7
      %v2260 = vsub.s32 5, %v2259
      %v2261 = vrot.slane %v1591, %v2260
      %2263 = vbcast.lane.b32.xlu0 %v2261, 256
      %v2264 = vpop.permute.xlu0 %2263
      %s2266 = sor.u32 256, 8
      %2267 = vbcast.lane.b32.xlu0 %v2261, %s2266
      %v2268 = vpop.permute.xlu0 %2267
      %v2269 = vlaneseq
      %v2270 = vshrl.u32 %v2269, 7
      %v2271 = vsub.s32 6, %v2270
      %v2272 = vrot.slane %v1591, %v2271
      %2274 = vbcast.lane.b32.xlu0 %v2272, 256
      %v2275 = vpop.permute.xlu0 %2274
      %s2277 = sor.u32 256, 8
      %2278 = vbcast.lane.b32.xlu0 %v2272, %s2277
      %v2279 = vpop.permute.xlu0 %2278
      %v2280 = vlaneseq
      %v2281 = vshrl.u32 %v2280, 7
      %v2282 = vsub.s32 7, %v2281
      %v2283 = vrot.slane %v1591, %v2282
      %2285 = vbcast.lane.b32.xlu0 %v2283, 256
      %v2286 = vpop.permute.xlu0 %2285
      %s2288 = sor.u32 256, 8
      %2289 = vbcast.lane.b32.xlu0 %v2283, %s2288
      %v2290 = vpop.permute.xlu0 %2289
      %v2291 = vmul.f32 %v1766, %v2121
      %v2292 = vmul.f32 %v1770, %v2121
      %v2293 = vmul.f32 %v1766, %v2125
      %v2294 = vmul.f32 %v1770, %v2125
      %v2295 = vmul.f32 %v1774, %v2132
      %v2296 = vmul.f32 %v1778, %v2132
      %v2297 = vmul.f32 %v1774, %v2136
      %v2298 = vmul.f32 %v1778, %v2136
      %v2299 = vmul.f32 %v1782, %v2143
      %v2300 = vmul.f32 %v1786, %v2143
      %v2301 = vmul.f32 %v1782, %v2147
      %v2302 = vmul.f32 %v1786, %v2147
      %v2303 = vmul.f32 %v1790, %v2154
      %v2304 = vmul.f32 %v1794, %v2154
      %v2305 = vmul.f32 %v1790, %v2158
      %v2306 = vmul.f32 %v1794, %v2158
      %v2307 = vmul.f32 %v1798, %v2165
      %v2308 = vmul.f32 %v1802, %v2165
      %v2309 = vmul.f32 %v1798, %v2169
      %v2310 = vmul.f32 %v1802, %v2169
      %v2311 = vmul.f32 %v1806, %v2176
      %v2312 = vmul.f32 %v1810, %v2176
      %v2313 = vmul.f32 %v1806, %v2180
      %v2314 = vmul.f32 %v1810, %v2180
      %v2315 = vmul.f32 %v1814, %v2187
      %v2316 = vmul.f32 %v1818, %v2187
      %v2317 = vmul.f32 %v1814, %v2191
      %v2318 = vmul.f32 %v1818, %v2191
      %v2319 = vmul.f32 %v1822, %v2198
      %v2320 = vmul.f32 %v1826, %v2198
      %v2321 = vmul.f32 %v1822, %v2202
      %v2322 = vmul.f32 %v1826, %v2202
      %v2323 = vmul.f32 %v1830, %v2209
      %v2324 = vmul.f32 %v1834, %v2209
      %v2325 = vmul.f32 %v1830, %v2213
      %v2326 = vmul.f32 %v1834, %v2213
      %v2327 = vmul.f32 %v1838, %v2220
      %v2328 = vmul.f32 %v1842, %v2220
      %v2329 = vmul.f32 %v1838, %v2224
      %v2330 = vmul.f32 %v1842, %v2224
      %v2331 = vmul.f32 %v1846, %v2231
      %v2332 = vmul.f32 %v1850, %v2231
      %v2333 = vmul.f32 %v1846, %v2235
      %v2334 = vmul.f32 %v1850, %v2235
      %v2335 = vmul.f32 %v1854, %v2242
      %v2336 = vmul.f32 %v1858, %v2242
      %v2337 = vmul.f32 %v1854, %v2246
      %v2338 = vmul.f32 %v1858, %v2246
      %v2339 = vmul.f32 %v1862, %v2253
      %v2340 = vmul.f32 %v1866, %v2253
      %v2341 = vmul.f32 %v1862, %v2257
      %v2342 = vmul.f32 %v1866, %v2257
      %v2343 = vmul.f32 %v1870, %v2264
      %v2344 = vmul.f32 %v1874, %v2264
      %v2345 = vmul.f32 %v1870, %v2268
      %v2346 = vmul.f32 %v1874, %v2268
      %v2347 = vmul.f32 %v1878, %v2275
      %v2348 = vmul.f32 %v1882, %v2275
      %v2349 = vmul.f32 %v1878, %v2279
      %v2350 = vmul.f32 %v1882, %v2279
      %v2351 = vmul.f32 %v1886, %v2286
      %v2352 = vmul.f32 %v1890, %v2286
      %v2353 = vmul.f32 %v1886, %v2290
      %v2354 = vmul.f32 %v1890, %v2290
      %v2359 = vcombine.low %v1167, %v1168
      %v2360 = vcombine.high %v1167, %v1168
      %v2362 = vunpack.c.l.s4 1966171168
      %v2363 = vunpack.c.0.s8 %v2362
      %v2364 = vlaneseq
      %v2365 = vshrl.u32 %v2364, 7
      %v2366 = vsub.s32 %v2363, %v2365
      %v2367 = vrot.slane %v2359, %v2366
      %v2369 = vunpack.c.l.s4 1966171168
      %v2370 = vunpack.c.0.s8 %v2369
      %v2371 = vlaneseq
      %v2372 = vshrl.u32 %v2371, 7
      %v2373 = vsub.s32 %v2370, %v2372
      %v2374 = vrot.slane %v2360, %v2373
      %v2375 = vcombine.high %v2367, %v2367
      %v2376 = vcombine.high %v2374, %v2374
      %v2378 = vunpack.c.l.s4 1966171168
      %v2379 = vunpack.c.0.s8 %v2378
      %v2380 = vlaneseq
      %v2381 = vshrl.u32 %v2380, 7
      %v2382 = vsub.s32 %v2379, %v2381
      %v2383 = vrot.slane %v2367, %v2382
      %v2385 = vunpack.c.l.s4 1966171168
      %v2386 = vunpack.c.0.s8 %v2385
      %v2387 = vlaneseq
      %v2388 = vshrl.u32 %v2387, 7
      %v2389 = vsub.s32 %v2386, %v2388
      %v2390 = vrot.slane %v2374, %v2389
      %v2392 = vunpack.c.l.s4 1966171168
      %v2393 = vunpack.c.0.s8 %v2392
      %v2394 = vlaneseq
      %v2395 = vshrl.u32 %v2394, 7
      %v2396 = vsub.s32 %v2393, %v2395
      %v2397 = vrot.slane %v2375, %v2396
      %v2399 = vunpack.c.l.s4 1966171168
      %v2400 = vunpack.c.0.s8 %v2399
      %v2401 = vlaneseq
      %v2402 = vshrl.u32 %v2401, 7
      %v2403 = vsub.s32 %v2400, %v2402
      %v2404 = vrot.slane %v2376, %v2403
      %v2405 = vcombine.high %v2383, %v2383
      %v2406 = vcombine.high %v2390, %v2390
      %v2407 = vcombine.high %v2397, %v2397
      %v2408 = vcombine.high %v2404, %v2404
      %v2409 = vcombine.low %v1169, %v1170
      %v2410 = vcombine.high %v1169, %v1170
      %v2412 = vunpack.c.l.s4 1966171168
      %v2413 = vunpack.c.0.s8 %v2412
      %v2414 = vlaneseq
      %v2415 = vshrl.u32 %v2414, 7
      %v2416 = vsub.s32 %v2413, %v2415
      %v2417 = vrot.slane %v2409, %v2416
      %v2419 = vunpack.c.l.s4 1966171168
      %v2420 = vunpack.c.0.s8 %v2419
      %v2421 = vlaneseq
      %v2422 = vshrl.u32 %v2421, 7
      %v2423 = vsub.s32 %v2420, %v2422
      %v2424 = vrot.slane %v2410, %v2423
      %v2425 = vcombine.high %v2417, %v2417
      %v2426 = vcombine.high %v2424, %v2424
      %v2428 = vunpack.c.l.s4 1966171168
      %v2429 = vunpack.c.0.s8 %v2428
      %v2430 = vlaneseq
      %v2431 = vshrl.u32 %v2430, 7
      %v2432 = vsub.s32 %v2429, %v2431
      %v2433 = vrot.slane %v2417, %v2432
      %v2435 = vunpack.c.l.s4 1966171168
      %v2436 = vunpack.c.0.s8 %v2435
      %v2437 = vlaneseq
      %v2438 = vshrl.u32 %v2437, 7
      %v2439 = vsub.s32 %v2436, %v2438
      %v2440 = vrot.slane %v2424, %v2439
      %v2442 = vunpack.c.l.s4 1966171168
      %v2443 = vunpack.c.0.s8 %v2442
      %v2444 = vlaneseq
      %v2445 = vshrl.u32 %v2444, 7
      %v2446 = vsub.s32 %v2443, %v2445
      %v2447 = vrot.slane %v2425, %v2446
      %v2449 = vunpack.c.l.s4 1966171168
      %v2450 = vunpack.c.0.s8 %v2449
      %v2451 = vlaneseq
      %v2452 = vshrl.u32 %v2451, 7
      %v2453 = vsub.s32 %v2450, %v2452
      %v2454 = vrot.slane %v2426, %v2453
      %v2455 = vcombine.high %v2433, %v2433
      %v2456 = vcombine.high %v2440, %v2440
      %v2457 = vcombine.high %v2447, %v2447
      %v2458 = vcombine.high %v2454, %v2454
      %v2459 = vlaneseq
      %v2460 = vshrl.u32 %v2459, 7
      %v2461 = vsub.s32 0, %v2460
      %v2462 = vrot.slane %v2383, %v2461
      %v2463 = vlaneseq
      %v2464 = vshrl.u32 %v2463, 7
      %v2465 = vsub.s32 1, %v2464
      %v2466 = vrot.slane %v2383, %v2465
      %v2467 = vlaneseq
      %v2468 = vshrl.u32 %v2467, 7
      %v2469 = vsub.s32 0, %v2468
      %v2470 = vrot.slane %v2397, %v2469
      %v2471 = vlaneseq
      %v2472 = vshrl.u32 %v2471, 7
      %v2473 = vsub.s32 1, %v2472
      %v2474 = vrot.slane %v2397, %v2473
      %v2475 = vlaneseq
      %v2476 = vshrl.u32 %v2475, 7
      %v2477 = vsub.s32 0, %v2476
      %v2478 = vrot.slane %v2405, %v2477
      %v2479 = vlaneseq
      %v2480 = vshrl.u32 %v2479, 7
      %v2481 = vsub.s32 1, %v2480
      %v2482 = vrot.slane %v2405, %v2481
      %v2483 = vlaneseq
      %v2484 = vshrl.u32 %v2483, 7
      %v2485 = vsub.s32 0, %v2484
      %v2486 = vrot.slane %v2407, %v2485
      %v2487 = vlaneseq
      %v2488 = vshrl.u32 %v2487, 7
      %v2489 = vsub.s32 1, %v2488
      %v2490 = vrot.slane %v2407, %v2489
      %v2491 = vlaneseq
      %v2492 = vshrl.u32 %v2491, 7
      %v2493 = vsub.s32 0, %v2492
      %v2494 = vrot.slane %v2390, %v2493
      %v2495 = vlaneseq
      %v2496 = vshrl.u32 %v2495, 7
      %v2497 = vsub.s32 1, %v2496
      %v2498 = vrot.slane %v2390, %v2497
      %v2499 = vlaneseq
      %v2500 = vshrl.u32 %v2499, 7
      %v2501 = vsub.s32 0, %v2500
      %v2502 = vrot.slane %v2404, %v2501
      %v2503 = vlaneseq
      %v2504 = vshrl.u32 %v2503, 7
      %v2505 = vsub.s32 1, %v2504
      %v2506 = vrot.slane %v2404, %v2505
      %v2507 = vlaneseq
      %v2508 = vshrl.u32 %v2507, 7
      %v2509 = vsub.s32 0, %v2508
      %v2510 = vrot.slane %v2406, %v2509
      %v2511 = vlaneseq
      %v2512 = vshrl.u32 %v2511, 7
      %v2513 = vsub.s32 1, %v2512
      %v2514 = vrot.slane %v2406, %v2513
      %v2515 = vlaneseq
      %v2516 = vshrl.u32 %v2515, 7
      %v2517 = vsub.s32 0, %v2516
      %v2518 = vrot.slane %v2408, %v2517
      %v2519 = vlaneseq
      %v2520 = vshrl.u32 %v2519, 7
      %v2521 = vsub.s32 1, %v2520
      %v2522 = vrot.slane %v2408, %v2521
      %v2523 = vlaneseq
      %v2524 = vshrl.u32 %v2523, 7
      %v2525 = vsub.s32 0, %v2524
      %v2526 = vrot.slane %v2433, %v2525
      %v2527 = vlaneseq
      %v2528 = vshrl.u32 %v2527, 7
      %v2529 = vsub.s32 1, %v2528
      %v2530 = vrot.slane %v2433, %v2529
      %v2531 = vlaneseq
      %v2532 = vshrl.u32 %v2531, 7
      %v2533 = vsub.s32 0, %v2532
      %v2534 = vrot.slane %v2447, %v2533
      %v2535 = vlaneseq
      %v2536 = vshrl.u32 %v2535, 7
      %v2537 = vsub.s32 1, %v2536
      %v2538 = vrot.slane %v2447, %v2537
      %v2539 = vlaneseq
      %v2540 = vshrl.u32 %v2539, 7
      %v2541 = vsub.s32 0, %v2540
      %v2542 = vrot.slane %v2455, %v2541
      %v2543 = vlaneseq
      %v2544 = vshrl.u32 %v2543, 7
      %v2545 = vsub.s32 1, %v2544
      %v2546 = vrot.slane %v2455, %v2545
      %v2547 = vlaneseq
      %v2548 = vshrl.u32 %v2547, 7
      %v2549 = vsub.s32 0, %v2548
      %v2550 = vrot.slane %v2457, %v2549
      %v2551 = vlaneseq
      %v2552 = vshrl.u32 %v2551, 7
      %v2553 = vsub.s32 1, %v2552
      %v2554 = vrot.slane %v2457, %v2553
      %v2555 = vlaneseq
      %v2556 = vshrl.u32 %v2555, 7
      %v2557 = vsub.s32 0, %v2556
      %v2558 = vrot.slane %v2440, %v2557
      %v2559 = vlaneseq
      %v2560 = vshrl.u32 %v2559, 7
      %v2561 = vsub.s32 1, %v2560
      %v2562 = vrot.slane %v2440, %v2561
      %v2563 = vlaneseq
      %v2564 = vshrl.u32 %v2563, 7
      %v2565 = vsub.s32 0, %v2564
      %v2566 = vrot.slane %v2454, %v2565
      %v2567 = vlaneseq
      %v2568 = vshrl.u32 %v2567, 7
      %v2569 = vsub.s32 1, %v2568
      %v2570 = vrot.slane %v2454, %v2569
      %v2571 = vlaneseq
      %v2572 = vshrl.u32 %v2571, 7
      %v2573 = vsub.s32 0, %v2572
      %v2574 = vrot.slane %v2456, %v2573
      %v2575 = vlaneseq
      %v2576 = vshrl.u32 %v2575, 7
      %v2577 = vsub.s32 1, %v2576
      %v2578 = vrot.slane %v2456, %v2577
      %v2579 = vlaneseq
      %v2580 = vshrl.u32 %v2579, 7
      %v2581 = vsub.s32 0, %v2580
      %v2582 = vrot.slane %v2458, %v2581
      %v2583 = vlaneseq
      %v2584 = vshrl.u32 %v2583, 7
      %v2585 = vsub.s32 1, %v2584
      %v2586 = vrot.slane %v2458, %v2585
      %v2619 = vmul.f32 %v2291, %v2462
      %v2620 = vmul.f32 %v2292, %v2466
      %v2621 = vmul.f32 %v2293, %v2462
      %v2622 = vmul.f32 %v2294, %v2466
      %v2623 = vmul.f32 %v2295, %v2470
      %v2624 = vmul.f32 %v2296, %v2474
      %v2625 = vmul.f32 %v2297, %v2470
      %v2626 = vmul.f32 %v2298, %v2474
      %v2627 = vmul.f32 %v2299, %v2478
      %v2628 = vmul.f32 %v2300, %v2482
      %v2629 = vmul.f32 %v2301, %v2478
      %v2630 = vmul.f32 %v2302, %v2482
      %v2631 = vmul.f32 %v2303, %v2486
      %v2632 = vmul.f32 %v2304, %v2490
      %v2633 = vmul.f32 %v2305, %v2486
      %v2634 = vmul.f32 %v2306, %v2490
      %v2635 = vmul.f32 %v2307, %v2494
      %v2636 = vmul.f32 %v2308, %v2498
      %v2637 = vmul.f32 %v2309, %v2494
      %v2638 = vmul.f32 %v2310, %v2498
      %v2639 = vmul.f32 %v2311, %v2502
      %v2640 = vmul.f32 %v2312, %v2506
      %v2641 = vmul.f32 %v2313, %v2502
      %v2642 = vmul.f32 %v2314, %v2506
      %v2643 = vmul.f32 %v2315, %v2510
      %v2644 = vmul.f32 %v2316, %v2514
      %v2645 = vmul.f32 %v2317, %v2510
      %v2646 = vmul.f32 %v2318, %v2514
      %v2647 = vmul.f32 %v2319, %v2518
      %v2648 = vmul.f32 %v2320, %v2522
      %v2649 = vmul.f32 %v2321, %v2518
      %v2650 = vmul.f32 %v2322, %v2522
      %v2651 = vmul.f32 %v2323, %v2526
      %v2652 = vmul.f32 %v2324, %v2530
      %v2653 = vmul.f32 %v2325, %v2526
      %v2654 = vmul.f32 %v2326, %v2530
      %v2655 = vmul.f32 %v2327, %v2534
      %v2656 = vmul.f32 %v2328, %v2538
      %v2657 = vmul.f32 %v2329, %v2534
      %v2658 = vmul.f32 %v2330, %v2538
      %v2659 = vmul.f32 %v2331, %v2542
      %v2660 = vmul.f32 %v2332, %v2546
      %v2661 = vmul.f32 %v2333, %v2542
      %v2662 = vmul.f32 %v2334, %v2546
      %v2663 = vmul.f32 %v2335, %v2550
      %v2664 = vmul.f32 %v2336, %v2554
      %v2665 = vmul.f32 %v2337, %v2550
      %v2666 = vmul.f32 %v2338, %v2554
      %v2667 = vmul.f32 %v2339, %v2558
      %v2668 = vmul.f32 %v2340, %v2562
      %v2669 = vmul.f32 %v2341, %v2558
      %v2670 = vmul.f32 %v2342, %v2562
      %v2671 = vmul.f32 %v2343, %v2566
      %v2672 = vmul.f32 %v2344, %v2570
      %v2673 = vmul.f32 %v2345, %v2566
      %v2674 = vmul.f32 %v2346, %v2570
      %v2675 = vmul.f32 %v2347, %v2574
      %v2676 = vmul.f32 %v2348, %v2578
      %v2677 = vmul.f32 %v2349, %v2574
      %v2678 = vmul.f32 %v2350, %v2578
      %v2679 = vmul.f32 %v2351, %v2582
      %v2680 = vmul.f32 %v2352, %v2586
      %v2681 = vmul.f32 %v2353, %v2582
      %v2682 = vmul.f32 %v2354, %v2586
      %s2684 = sor.u32 256, 16
      %2685 = vbcast.lane.b32.xlu0 %v2118, %s2684
      %v2686 = vpop.permute.xlu0 %2685
      %s2688 = sor.u32 256, 24
      %2689 = vbcast.lane.b32.xlu0 %v2118, %s2688
      %v2690 = vpop.permute.xlu0 %2689
      %s2692 = sor.u32 256, 16
      %2693 = vbcast.lane.b32.xlu0 %v2129, %s2692
      %v2694 = vpop.permute.xlu0 %2693
      %s2696 = sor.u32 256, 24
      %2697 = vbcast.lane.b32.xlu0 %v2129, %s2696
      %v2698 = vpop.permute.xlu0 %2697
      %s2700 = sor.u32 256, 16
      %2701 = vbcast.lane.b32.xlu0 %v2140, %s2700
      %v2702 = vpop.permute.xlu0 %2701
      %s2704 = sor.u32 256, 24
      %2705 = vbcast.lane.b32.xlu0 %v2140, %s2704
      %v2706 = vpop.permute.xlu0 %2705
      %s2708 = sor.u32 256, 16
      %2709 = vbcast.lane.b32.xlu0 %v2151, %s2708
      %v2710 = vpop.permute.xlu0 %2709
      %s2712 = sor.u32 256, 24
      %2713 = vbcast.lane.b32.xlu0 %v2151, %s2712
      %v2714 = vpop.permute.xlu0 %2713
      %s2716 = sor.u32 256, 16
      %2717 = vbcast.lane.b32.xlu0 %v2162, %s2716
      %v2718 = vpop.permute.xlu0 %2717
      %s2720 = sor.u32 256, 24
      %2721 = vbcast.lane.b32.xlu0 %v2162, %s2720
      %v2722 = vpop.permute.xlu0 %2721
      %s2724 = sor.u32 256, 16
      %2725 = vbcast.lane.b32.xlu0 %v2173, %s2724
      %v2726 = vpop.permute.xlu0 %2725
      %s2728 = sor.u32 256, 24
      %2729 = vbcast.lane.b32.xlu0 %v2173, %s2728
      %v2730 = vpop.permute.xlu0 %2729
      %s2732 = sor.u32 256, 16
      %2733 = vbcast.lane.b32.xlu0 %v2184, %s2732
      %v2734 = vpop.permute.xlu0 %2733
      %s2736 = sor.u32 256, 24
      %2737 = vbcast.lane.b32.xlu0 %v2184, %s2736
      %v2738 = vpop.permute.xlu0 %2737
      %s2740 = sor.u32 256, 16
      %2741 = vbcast.lane.b32.xlu0 %v2195, %s2740
      %v2742 = vpop.permute.xlu0 %2741
      %s2744 = sor.u32 256, 24
      %2745 = vbcast.lane.b32.xlu0 %v2195, %s2744
      %v2746 = vpop.permute.xlu0 %2745
      %s2748 = sor.u32 256, 16
      %2749 = vbcast.lane.b32.xlu0 %v2206, %s2748
      %v2750 = vpop.permute.xlu0 %2749
      %s2752 = sor.u32 256, 24
      %2753 = vbcast.lane.b32.xlu0 %v2206, %s2752
      %v2754 = vpop.permute.xlu0 %2753
      %s2756 = sor.u32 256, 16
      %2757 = vbcast.lane.b32.xlu0 %v2217, %s2756
      %v2758 = vpop.permute.xlu0 %2757
      %s2760 = sor.u32 256, 24
      %2761 = vbcast.lane.b32.xlu0 %v2217, %s2760
      %v2762 = vpop.permute.xlu0 %2761
      %s2764 = sor.u32 256, 16
      %2765 = vbcast.lane.b32.xlu0 %v2228, %s2764
      %v2766 = vpop.permute.xlu0 %2765
      %s2768 = sor.u32 256, 24
      %2769 = vbcast.lane.b32.xlu0 %v2228, %s2768
      %v2770 = vpop.permute.xlu0 %2769
      %s2772 = sor.u32 256, 16
      %2773 = vbcast.lane.b32.xlu0 %v2239, %s2772
      %v2774 = vpop.permute.xlu0 %2773
      %s2776 = sor.u32 256, 24
      %2777 = vbcast.lane.b32.xlu0 %v2239, %s2776
      %v2778 = vpop.permute.xlu0 %2777
      %s2780 = sor.u32 256, 16
      %2781 = vbcast.lane.b32.xlu0 %v2250, %s2780
      %v2782 = vpop.permute.xlu0 %2781
      %s2784 = sor.u32 256, 24
      %2785 = vbcast.lane.b32.xlu0 %v2250, %s2784
      %v2786 = vpop.permute.xlu0 %2785
      %s2788 = sor.u32 256, 16
      %2789 = vbcast.lane.b32.xlu0 %v2261, %s2788
      %v2790 = vpop.permute.xlu0 %2789
      %s2792 = sor.u32 256, 24
      %2793 = vbcast.lane.b32.xlu0 %v2261, %s2792
      %v2794 = vpop.permute.xlu0 %2793
      %s2796 = sor.u32 256, 16
      %2797 = vbcast.lane.b32.xlu0 %v2272, %s2796
      %v2798 = vpop.permute.xlu0 %2797
      %s2800 = sor.u32 256, 24
      %2801 = vbcast.lane.b32.xlu0 %v2272, %s2800
      %v2802 = vpop.permute.xlu0 %2801
      %s2804 = sor.u32 256, 16
      %2805 = vbcast.lane.b32.xlu0 %v2283, %s2804
      %v2806 = vpop.permute.xlu0 %2805
      %s2808 = sor.u32 256, 24
      %2809 = vbcast.lane.b32.xlu0 %v2283, %s2808
      %v2810 = vpop.permute.xlu0 %2809
      %v2811 = vmul.f32 %v1988, 0.0
      %v2812 = vmul.f32 %v1990, 0.0
      %v2813 = vmul.f32 %v1992, 0.0
      %v2814 = vmul.f32 %v1994, 0.0
      %v2815 = vmul.f32 %v1996, 0.0
      %v2816 = vmul.f32 %v1998, 0.0
      %v2817 = vmul.f32 %v2000, 0.0
      %v2818 = vmul.f32 %v2002, 0.0
      %v2819 = vadd.f32 %v2811, %v2619
      %v2820 = vadd.f32 %v2812, %v2620
      %v2821 = vadd.f32 %v2813, %v2621
      %v2822 = vadd.f32 %v2814, %v2622
      %v2823 = vadd.f32 %v2815, %v2623
      %v2824 = vadd.f32 %v2816, %v2624
      %v2825 = vadd.f32 %v2817, %v2625
      %v2826 = vadd.f32 %v2818, %v2626
      %v2827 = vmul.f32 %v2819, %v2686
      %v2828 = vmul.f32 %v2820, %v2686
      %v2829 = vmul.f32 %v2821, %v2690
      %v2830 = vmul.f32 %v2822, %v2690
      %v2831 = vmul.f32 %v2823, %v2694
      %v2832 = vmul.f32 %v2824, %v2694
      %v2833 = vmul.f32 %v2825, %v2698
      %v2834 = vmul.f32 %v2826, %v2698
      %v2835 = vadd.f32 %v2827, %v2829
      %v2836 = vrot.slane %v2835, 4
      %v2837 = vadd.f32 %v2835, %v2836
      %v2838 = vrot.slane %v2837, 2
      %v2839 = vadd.f32 %v2837, %v2838
      %v2840 = vrot.slane %v2839, 1
      %v2841 = vadd.f32 %v2839, %v2840
      %v2842 = vadd.f32 %v2828, %v2830
      %v2843 = vrot.slane %v2842, 4
      %v2844 = vadd.f32 %v2842, %v2843
      %v2845 = vrot.slane %v2844, 2
      %v2846 = vadd.f32 %v2844, %v2845
      %v2847 = vrot.slane %v2846, 1
      %v2848 = vadd.f32 %v2846, %v2847
      %v2849 = vadd.f32 %v2831, %v2833
      %v2850 = vrot.slane %v2849, 4
      %v2851 = vadd.f32 %v2849, %v2850
      %v2852 = vrot.slane %v2851, 2
      %v2853 = vadd.f32 %v2851, %v2852
      %v2854 = vrot.slane %v2853, 1
      %v2855 = vadd.f32 %v2853, %v2854
      %v2856 = vadd.f32 %v2832, %v2834
      %v2857 = vrot.slane %v2856, 4
      %v2858 = vadd.f32 %v2856, %v2857
      %v2859 = vrot.slane %v2858, 2
      %v2860 = vadd.f32 %v2858, %v2859
      %v2861 = vrot.slane %v2860, 1
      %v2862 = vadd.f32 %v2860, %v2861
      %vm2867 = vcmask 1041409
      %v2868 = vsel %vm2867, %v2855, %v2841
      %v2869 = vsel %vm2867, %v2862, %v2848
      %2872 = vst [vmem:[#allocation3] sm:$0x3] %v2868
      %2873 = vst [vmem:[#allocation3 + $0x8] sm:$0x3] %v2869
      %v2874 = vmul.f32 %v2819, %v2004
      %v2875 = vmul.f32 %v2820, %v2006
      %v2876 = vmul.f32 %v2821, %v2008
      %v2877 = vmul.f32 %v2822, %v2010
      %v2878 = vmul.f32 %v2823, %v2012
      %v2879 = vmul.f32 %v2824, %v2014
      %v2880 = vmul.f32 %v2825, %v2016
      %v2881 = vmul.f32 %v2826, %v2018
      %v2882 = vadd.f32 %v2874, %v2627
      %v2883 = vadd.f32 %v2875, %v2628
      %v2884 = vadd.f32 %v2876, %v2629
      %v2885 = vadd.f32 %v2877, %v2630
      %v2886 = vadd.f32 %v2878, %v2631
      %v2887 = vadd.f32 %v2879, %v2632
      %v2888 = vadd.f32 %v2880, %v2633
      %v2889 = vadd.f32 %v2881, %v2634
      %v2890 = vmul.f32 %v2882, %v2702
      %v2891 = vmul.f32 %v2883, %v2702
      %v2892 = vmul.f32 %v2884, %v2706
      %v2893 = vmul.f32 %v2885, %v2706
      %v2894 = vmul.f32 %v2886, %v2710
      %v2895 = vmul.f32 %v2887, %v2710
      %v2896 = vmul.f32 %v2888, %v2714
      %v2897 = vmul.f32 %v2889, %v2714
      %v2898 = vadd.f32 %v2890, %v2892
      %v2899 = vrot.slane %v2898, 4
      %v2900 = vadd.f32 %v2898, %v2899
      %v2901 = vrot.slane %v2900, 2
      %v2902 = vadd.f32 %v2900, %v2901
      %v2903 = vrot.slane %v2902, 1
      %v2904 = vadd.f32 %v2902, %v2903
      %v2905 = vadd.f32 %v2891, %v2893
      %v2906 = vrot.slane %v2905, 4
      %v2907 = vadd.f32 %v2905, %v2906
      %v2908 = vrot.slane %v2907, 2
      %v2909 = vadd.f32 %v2907, %v2908
      %v2910 = vrot.slane %v2909, 1
      %v2911 = vadd.f32 %v2909, %v2910
      %v2912 = vadd.f32 %v2894, %v2896
      %v2913 = vrot.slane %v2912, 4
      %v2914 = vadd.f32 %v2912, %v2913
      %v2915 = vrot.slane %v2914, 2
      %v2916 = vadd.f32 %v2914, %v2915
      %v2917 = vrot.slane %v2916, 1
      %v2918 = vadd.f32 %v2916, %v2917
      %v2919 = vadd.f32 %v2895, %v2897
      %v2920 = vrot.slane %v2919, 4
      %v2921 = vadd.f32 %v2919, %v2920
      %v2922 = vrot.slane %v2921, 2
      %v2923 = vadd.f32 %v2921, %v2922
      %v2924 = vrot.slane %v2923, 1
      %v2925 = vadd.f32 %v2923, %v2924
      %vm2930 = vcmask 1043459
      %v2931 = vsel %vm2930, %v2918, %v2904
      %v2932 = vsel %vm2930, %v2925, %v2911
      %2935 = vst [vmem:[#allocation3] sm:$0xc] %v2931
      %2936 = vst [vmem:[#allocation3 + $0x8] sm:$0xc] %v2932
      %v2937 = vmul.f32 %v2882, %v2020
      %v2938 = vmul.f32 %v2883, %v2022
      %v2939 = vmul.f32 %v2884, %v2024
      %v2940 = vmul.f32 %v2885, %v2026
      %v2941 = vmul.f32 %v2886, %v2028
      %v2942 = vmul.f32 %v2887, %v2030
      %v2943 = vmul.f32 %v2888, %v2032
      %v2944 = vmul.f32 %v2889, %v2034
      %v2945 = vadd.f32 %v2937, %v2635
      %v2946 = vadd.f32 %v2938, %v2636
      %v2947 = vadd.f32 %v2939, %v2637
      %v2948 = vadd.f32 %v2940, %v2638
      %v2949 = vadd.f32 %v2941, %v2639
      %v2950 = vadd.f32 %v2942, %v2640
      %v2951 = vadd.f32 %v2943, %v2641
      %v2952 = vadd.f32 %v2944, %v2642
      %v2953 = vmul.f32 %v2945, %v2718
      %v2954 = vmul.f32 %v2946, %v2718
      %v2955 = vmul.f32 %v2947, %v2722
      %v2956 = vmul.f32 %v2948, %v2722
      %v2957 = vmul.f32 %v2949, %v2726
      %v2958 = vmul.f32 %v2950, %v2726
      %v2959 = vmul.f32 %v2951, %v2730
      %v2960 = vmul.f32 %v2952, %v2730
      %v2961 = vadd.f32 %v2953, %v2955
      %v2962 = vrot.slane %v2961, 4
      %v2963 = vadd.f32 %v2961, %v2962
      %v2964 = vrot.slane %v2963, 2
      %v2965 = vadd.f32 %v2963, %v2964
      %v2966 = vrot.slane %v2965, 1
      %v2967 = vadd.f32 %v2965, %v2966
      %v2968 = vadd.f32 %v2954, %v2956
      %v2969 = vrot.slane %v2968, 4
      %v2970 = vadd.f32 %v2968, %v2969
      %v2971 = vrot.slane %v2970, 2
      %v2972 = vadd.f32 %v2970, %v2971
      %v2973 = vrot.slane %v2972, 1
      %v2974 = vadd.f32 %v2972, %v2973
      %v2975 = vadd.f32 %v2957, %v2959
      %v2976 = vrot.slane %v2975, 4
      %v2977 = vadd.f32 %v2975, %v2976
      %v2978 = vrot.slane %v2977, 2
      %v2979 = vadd.f32 %v2977, %v2978
      %v2980 = vrot.slane %v2979, 1
      %v2981 = vadd.f32 %v2979, %v2980
      %v2982 = vadd.f32 %v2958, %v2960
      %v2983 = vrot.slane %v2982, 4
      %v2984 = vadd.f32 %v2982, %v2983
      %v2985 = vrot.slane %v2984, 2
      %v2986 = vadd.f32 %v2984, %v2985
      %v2987 = vrot.slane %v2986, 1
      %v2988 = vadd.f32 %v2986, %v2987
      %vm2993 = vcmask 1045509
      %v2994 = vsel %vm2993, %v2981, %v2967
      %v2995 = vsel %vm2993, %v2988, %v2974
      %2998 = vst [vmem:[#allocation3] sm:$0x30] %v2994
      %2999 = vst [vmem:[#allocation3 + $0x8] sm:$0x30] %v2995
      %v3000 = vmul.f32 %v2945, %v2036
      %v3001 = vmul.f32 %v2946, %v2038
      %v3002 = vmul.f32 %v2947, %v2040
      %v3003 = vmul.f32 %v2948, %v2042
      %v3004 = vmul.f32 %v2949, %v2044
      %v3005 = vmul.f32 %v2950, %v2046
      %v3006 = vmul.f32 %v2951, %v2048
      %v3007 = vmul.f32 %v2952, %v2050
      %v3008 = vadd.f32 %v3000, %v2643
      %v3009 = vadd.f32 %v3001, %v2644
      %v3010 = vadd.f32 %v3002, %v2645
      %v3011 = vadd.f32 %v3003, %v2646
      %v3012 = vadd.f32 %v3004, %v2647
      %v3013 = vadd.f32 %v3005, %v2648
      %v3014 = vadd.f32 %v3006, %v2649
      %v3015 = vadd.f32 %v3007, %v2650
      %v3016 = vmul.f32 %v3008, %v2734
      %v3017 = vmul.f32 %v3009, %v2734
      %v3018 = vmul.f32 %v3010, %v2738
      %v3019 = vmul.f32 %v3011, %v2738
      %v3020 = vmul.f32 %v3012, %v2742
      %v3021 = vmul.f32 %v3013, %v2742
      %v3022 = vmul.f32 %v3014, %v2746
      %v3023 = vmul.f32 %v3015, %v2746
      %v3024 = vadd.f32 %v3016, %v3018
      %v3025 = vrot.slane %v3024, 4
      %v3026 = vadd.f32 %v3024, %v3025
      %v3027 = vrot.slane %v3026, 2
      %v3028 = vadd.f32 %v3026, %v3027
      %v3029 = vrot.slane %v3028, 1
      %v3030 = vadd.f32 %v3028, %v3029
      %v3031 = vadd.f32 %v3017, %v3019
      %v3032 = vrot.slane %v3031, 4
      %v3033 = vadd.f32 %v3031, %v3032
      %v3034 = vrot.slane %v3033, 2
      %v3035 = vadd.f32 %v3033, %v3034
      %v3036 = vrot.slane %v3035, 1
      %v3037 = vadd.f32 %v3035, %v3036
      %v3038 = vadd.f32 %v3020, %v3022
      %v3039 = vrot.slane %v3038, 4
      %v3040 = vadd.f32 %v3038, %v3039
      %v3041 = vrot.slane %v3040, 2
      %v3042 = vadd.f32 %v3040, %v3041
      %v3043 = vrot.slane %v3042, 1
      %v3044 = vadd.f32 %v3042, %v3043
      %v3045 = vadd.f32 %v3021, %v3023
      %v3046 = vrot.slane %v3045, 4
      %v3047 = vadd.f32 %v3045, %v3046
      %v3048 = vrot.slane %v3047, 2
      %v3049 = vadd.f32 %v3047, %v3048
      %v3050 = vrot.slane %v3049, 1
      %v3051 = vadd.f32 %v3049, %v3050
      %vm3056 = vcmask 1047559
      %v3057 = vsel %vm3056, %v3044, %v3030
      %v3058 = vsel %vm3056, %v3051, %v3037
      %3061 = vst [vmem:[#allocation3] sm:$0xc0] %v3057
      %3062 = vst [vmem:[#allocation3 + $0x8] sm:$0xc0] %v3058
      %v3063 = vmul.f32 %v3008, %v2052
      %v3064 = vmul.f32 %v3009, %v2054
      %v3065 = vmul.f32 %v3010, %v2056
      %v3066 = vmul.f32 %v3011, %v2058
      %v3067 = vmul.f32 %v3012, %v2060
      %v3068 = vmul.f32 %v3013, %v2062
      %v3069 = vmul.f32 %v3014, %v2064
      %v3070 = vmul.f32 %v3015, %v2066
      %v3071 = vadd.f32 %v3063, %v2651
      %v3072 = vadd.f32 %v3064, %v2652
      %v3073 = vadd.f32 %v3065, %v2653
      %v3074 = vadd.f32 %v3066, %v2654
      %v3075 = vadd.f32 %v3067, %v2655
      %v3076 = vadd.f32 %v3068, %v2656
      %v3077 = vadd.f32 %v3069, %v2657
      %v3078 = vadd.f32 %v3070, %v2658
      %v3079 = vmul.f32 %v3071, %v2750
      %v3080 = vmul.f32 %v3072, %v2750
      %v3081 = vmul.f32 %v3073, %v2754
      %v3082 = vmul.f32 %v3074, %v2754
      %v3083 = vmul.f32 %v3075, %v2758
      %v3084 = vmul.f32 %v3076, %v2758
      %v3085 = vmul.f32 %v3077, %v2762
      %v3086 = vmul.f32 %v3078, %v2762
      %v3087 = vadd.f32 %v3079, %v3081
      %v3088 = vrot.slane %v3087, 4
      %v3089 = vadd.f32 %v3087, %v3088
      %v3090 = vrot.slane %v3089, 2
      %v3091 = vadd.f32 %v3089, %v3090
      %v3092 = vrot.slane %v3091, 1
      %v3093 = vadd.f32 %v3091, %v3092
      %v3094 = vadd.f32 %v3080, %v3082
      %v3095 = vrot.slane %v3094, 4
      %v3096 = vadd.f32 %v3094, %v3095
      %v3097 = vrot.slane %v3096, 2
      %v3098 = vadd.f32 %v3096, %v3097
      %v3099 = vrot.slane %v3098, 1
      %v3100 = vadd.f32 %v3098, %v3099
      %v3101 = vadd.f32 %v3083, %v3085
      %v3102 = vrot.slane %v3101, 4
      %v3103 = vadd.f32 %v3101, %v3102
      %v3104 = vrot.slane %v3103, 2
      %v3105 = vadd.f32 %v3103, %v3104
      %v3106 = vrot.slane %v3105, 1
      %v3107 = vadd.f32 %v3105, %v3106
      %v3108 = vadd.f32 %v3084, %v3086
      %v3109 = vrot.slane %v3108, 4
      %v3110 = vadd.f32 %v3108, %v3109
      %v3111 = vrot.slane %v3110, 2
      %v3112 = vadd.f32 %v3110, %v3111
      %v3113 = vrot.slane %v3112, 1
      %v3114 = vadd.f32 %v3112, %v3113
      %v3119 = vsel %vm2867, %v3107, %v3093
      %v3120 = vsel %vm2867, %v3114, %v3100
      %3123 = vst [vmem:[#allocation3 + $0x10] sm:$0x3] %v3119
      %3124 = vst [vmem:[#allocation3 + $0x18] sm:$0x3] %v3120
      %v3125 = vmul.f32 %v3071, %v2068
      %v3126 = vmul.f32 %v3072, %v2070
      %v3127 = vmul.f32 %v3073, %v2072
      %v3128 = vmul.f32 %v3074, %v2074
      %v3129 = vmul.f32 %v3075, %v2076
      %v3130 = vmul.f32 %v3076, %v2078
      %v3131 = vmul.f32 %v3077, %v2080
      %v3132 = vmul.f32 %v3078, %v2082
      %v3133 = vadd.f32 %v3125, %v2659
      %v3134 = vadd.f32 %v3126, %v2660
      %v3135 = vadd.f32 %v3127, %v2661
      %v3136 = vadd.f32 %v3128, %v2662
      %v3137 = vadd.f32 %v3129, %v2663
      %v3138 = vadd.f32 %v3130, %v2664
      %v3139 = vadd.f32 %v3131, %v2665
      %v3140 = vadd.f32 %v3132, %v2666
      %v3141 = vmul.f32 %v3133, %v2766
      %v3142 = vmul.f32 %v3134, %v2766
      %v3143 = vmul.f32 %v3135, %v2770
      %v3144 = vmul.f32 %v3136, %v2770
      %v3145 = vmul.f32 %v3137, %v2774
      %v3146 = vmul.f32 %v3138, %v2774
      %v3147 = vmul.f32 %v3139, %v2778
      %v3148 = vmul.f32 %v3140, %v2778
      %v3149 = vadd.f32 %v3141, %v3143
      %v3150 = vrot.slane %v3149, 4
      %v3151 = vadd.f32 %v3149, %v3150
      %v3152 = vrot.slane %v3151, 2
      %v3153 = vadd.f32 %v3151, %v3152
      %v3154 = vrot.slane %v3153, 1
      %v3155 = vadd.f32 %v3153, %v3154
      %v3156 = vadd.f32 %v3142, %v3144
      %v3157 = vrot.slane %v3156, 4
      %v3158 = vadd.f32 %v3156, %v3157
      %v3159 = vrot.slane %v3158, 2
      %v3160 = vadd.f32 %v3158, %v3159
      %v3161 = vrot.slane %v3160, 1
      %v3162 = vadd.f32 %v3160, %v3161
      %v3163 = vadd.f32 %v3145, %v3147
      %v3164 = vrot.slane %v3163, 4
      %v3165 = vadd.f32 %v3163, %v3164
      %v3166 = vrot.slane %v3165, 2
      %v3167 = vadd.f32 %v3165, %v3166
      %v3168 = vrot.slane %v3167, 1
      %v3169 = vadd.f32 %v3167, %v3168
      %v3170 = vadd.f32 %v3146, %v3148
      %v3171 = vrot.slane %v3170, 4
      %v3172 = vadd.f32 %v3170, %v3171
      %v3173 = vrot.slane %v3172, 2
      %v3174 = vadd.f32 %v3172, %v3173
      %v3175 = vrot.slane %v3174, 1
      %v3176 = vadd.f32 %v3174, %v3175
      %v3181 = vsel %vm2930, %v3169, %v3155
      %v3182 = vsel %vm2930, %v3176, %v3162
      %3185 = vst [vmem:[#allocation3 + $0x10] sm:$0xc] %v3181
      %3186 = vst [vmem:[#allocation3 + $0x18] sm:$0xc] %v3182
      %v3187 = vmul.f32 %v3133, %v2084
      %v3188 = vmul.f32 %v3134, %v2086
      %v3189 = vmul.f32 %v3135, %v2088
      %v3190 = vmul.f32 %v3136, %v2090
      %v3191 = vmul.f32 %v3137, %v2092
      %v3192 = vmul.f32 %v3138, %v2094
      %v3193 = vmul.f32 %v3139, %v2096
      %v3194 = vmul.f32 %v3140, %v2098
      %v3195 = vadd.f32 %v3187, %v2667
      %v3196 = vadd.f32 %v3188, %v2668
      %v3197 = vadd.f32 %v3189, %v2669
      %v3198 = vadd.f32 %v3190, %v2670
      %v3199 = vadd.f32 %v3191, %v2671
      %v3200 = vadd.f32 %v3192, %v2672
      %v3201 = vadd.f32 %v3193, %v2673
      %v3202 = vadd.f32 %v3194, %v2674
      %v3203 = vmul.f32 %v3195, %v2782
      %v3204 = vmul.f32 %v3196, %v2782
      %v3205 = vmul.f32 %v3197, %v2786
      %v3206 = vmul.f32 %v3198, %v2786
      %v3207 = vmul.f32 %v3199, %v2790
      %v3208 = vmul.f32 %v3200, %v2790
      %v3209 = vmul.f32 %v3201, %v2794
      %v3210 = vmul.f32 %v3202, %v2794
      %v3211 = vadd.f32 %v3203, %v3205
      %v3212 = vrot.slane %v3211, 4
      %v3213 = vadd.f32 %v3211, %v3212
      %v3214 = vrot.slane %v3213, 2
      %v3215 = vadd.f32 %v3213, %v3214
      %v3216 = vrot.slane %v3215, 1
      %v3217 = vadd.f32 %v3215, %v3216
      %v3218 = vadd.f32 %v3204, %v3206
      %v3219 = vrot.slane %v3218, 4
      %v3220 = vadd.f32 %v3218, %v3219
      %v3221 = vrot.slane %v3220, 2
      %v3222 = vadd.f32 %v3220, %v3221
      %v3223 = vrot.slane %v3222, 1
      %v3224 = vadd.f32 %v3222, %v3223
      %v3225 = vadd.f32 %v3207, %v3209
      %v3226 = vrot.slane %v3225, 4
      %v3227 = vadd.f32 %v3225, %v3226
      %v3228 = vrot.slane %v3227, 2
      %v3229 = vadd.f32 %v3227, %v3228
      %v3230 = vrot.slane %v3229, 1
      %v3231 = vadd.f32 %v3229, %v3230
      %v3232 = vadd.f32 %v3208, %v3210
      %v3233 = vrot.slane %v3232, 4
      %v3234 = vadd.f32 %v3232, %v3233
      %v3235 = vrot.slane %v3234, 2
      %v3236 = vadd.f32 %v3234, %v3235
      %v3237 = vrot.slane %v3236, 1
      %v3238 = vadd.f32 %v3236, %v3237
      %v3243 = vsel %vm2993, %v3231, %v3217
      %v3244 = vsel %vm2993, %v3238, %v3224
      %3247 = vst [vmem:[#allocation3 + $0x10] sm:$0x30] %v3243
      %3248 = vst [vmem:[#allocation3 + $0x18] sm:$0x30] %v3244
      %v3249 = vmul.f32 %v3195, %v2100
      %v3250 = vmul.f32 %v3196, %v2102
      %v3251 = vmul.f32 %v3197, %v2104
      %v3252 = vmul.f32 %v3198, %v2106
      %v3253 = vmul.f32 %v3199, %v2108
      %v3254 = vmul.f32 %v3200, %v2110
      %v3255 = vmul.f32 %v3201, %v2112
      %v3256 = vmul.f32 %v3202, %v2114
      %v3257 = vadd.f32 %v3249, %v2675
      %v3258 = vadd.f32 %v3250, %v2676
      %v3259 = vadd.f32 %v3251, %v2677
      %v3260 = vadd.f32 %v3252, %v2678
      %v3261 = vadd.f32 %v3253, %v2679
      %v3262 = vadd.f32 %v3254, %v2680
      %v3263 = vadd.f32 %v3255, %v2681
      %v3264 = vadd.f32 %v3256, %v2682
      %v3265 = vmul.f32 %v3257, %v2798
      %v3266 = vmul.f32 %v3258, %v2798
      %v3267 = vmul.f32 %v3259, %v2802
      %v3268 = vmul.f32 %v3260, %v2802
      %v3269 = vmul.f32 %v3261, %v2806
      %v3270 = vmul.f32 %v3262, %v2806
      %v3271 = vmul.f32 %v3263, %v2810
      %v3272 = vmul.f32 %v3264, %v2810
      %v3273 = vadd.f32 %v3265, %v3267
      %v3274 = vrot.slane %v3273, 4
      %v3275 = vadd.f32 %v3273, %v3274
      %v3276 = vrot.slane %v3275, 2
      %v3277 = vadd.f32 %v3275, %v3276
      %v3278 = vrot.slane %v3277, 1
      %v3279 = vadd.f32 %v3277, %v3278
      %v3280 = vadd.f32 %v3266, %v3268
      %v3281 = vrot.slane %v3280, 4
      %v3282 = vadd.f32 %v3280, %v3281
      %v3283 = vrot.slane %v3282, 2
      %v3284 = vadd.f32 %v3282, %v3283
      %v3285 = vrot.slane %v3284, 1
      %v3286 = vadd.f32 %v3284, %v3285
      %v3287 = vadd.f32 %v3269, %v3271
      %v3288 = vrot.slane %v3287, 4
      %v3289 = vadd.f32 %v3287, %v3288
      %v3290 = vrot.slane %v3289, 2
      %v3291 = vadd.f32 %v3289, %v3290
      %v3292 = vrot.slane %v3291, 1
      %v3293 = vadd.f32 %v3291, %v3292
      %v3294 = vadd.f32 %v3270, %v3272
      %v3295 = vrot.slane %v3294, 4
      %v3296 = vadd.f32 %v3294, %v3295
      %v3297 = vrot.slane %v3296, 2
      %v3298 = vadd.f32 %v3296, %v3297
      %v3299 = vrot.slane %v3298, 1
      %v3300 = vadd.f32 %v3298, %v3299
      %v3305 = vsel %vm3056, %v3293, %v3279
      %v3306 = vsel %vm3056, %v3300, %v3286
      %3309 = vst [vmem:[#allocation3 + $0x10] sm:$0xc0] %v3305
      %3310 = vst [vmem:[#allocation3 + $0x18] sm:$0xc0] %v3306
      %v3311 = vld [vmem:[#allocation3] sm:$0xff]
      %v3312 = vld [vmem:[#allocation3 + $0x8] sm:$0xff]
      %v3313 = vld [vmem:[#allocation3 + $0x10] sm:$0xff]
      %v3314 = vld [vmem:[#allocation3 + $0x18] sm:$0xff]
      %v3316 = vlaneseq
      %v3317 = vshrl.u32 %v3316, 7
      %v3318 = vsub.s32 0, %v3317
      %v3319 = vrot.slane %v1658, %v3318
      %v3320 = vlaneseq
      %v3321 = vshrl.u32 %v3320, 7
      %v3322 = vsub.s32 1, %v3321
      %v3323 = vrot.slane %v1658, %v3322
      %v3326 = vmul.f32 %v1167, %v3319
      %v3327 = vmul.f32 %v1168, %v3323
      %v3328 = vmul.f32 %v1169, %v3319
      %v3329 = vmul.f32 %v1170, %v3323
      %v3330 = vadd.f32 %v3311, %v3326
      %v3331 = vadd.f32 %v3312, %v3327
      %v3332 = vadd.f32 %v3313, %v3328
      %v3333 = vadd.f32 %v3314, %v3329
      %v3334 = vsub.f32 0.0, %v1135
      %v3335 = vsub.f32 0.0, %v1137
      %v3336 = vsub.f32 0.0, %v1139
      %v3337 = vsub.f32 0.0, %v1141
      %v3338 = vmul.f32 %v3334, 1.442695
      %v3339 = vpow.pop %v3338
      %v3340 = vmul.f32 %v3335, 1.442695
      %v3341 = vpow.pop %v3340
      %v3342 = vmul.f32 %v3336, 1.442695
      %v3343 = vpow.pop %v3342
      %v3344 = vmul.f32 %v3337, 1.442695
      %v3345 = vpow.pop %v3344
      %v3346 = vadd.f32 %v3339, 1.0
      %v3347 = vadd.f32 %v3341, 1.0
      %v3348 = vadd.f32 %v3343, 1.0
      %v3349 = vadd.f32 %v3345, 1.0
      %v3350 = vrcp.pop %v3346
      %v3351 = vmul.f32 1.0, %v3350
      %v3352 = vrcp.pop %v3347
      %v3353 = vmul.f32 1.0, %v3352
      %v3354 = vrcp.pop %v3348
      %v3355 = vmul.f32 1.0, %v3354
      %v3356 = vrcp.pop %v3349
      %v3357 = vmul.f32 1.0, %v3356
      %v3358 = vmul.f32 %v1135, %v3351
      %v3359 = vmul.f32 %v1137, %v3353
      %v3360 = vmul.f32 %v1139, %v3355
      %v3361 = vmul.f32 %v1141, %v3357
      %v3362 = vmul.f32 %v3330, %v3358
      %v3363 = vmul.f32 %v3331, %v3359
      %v3364 = vmul.f32 %v3332, %v3360
      %v3365 = vmul.f32 %v3333, %v3361
      %v3366 = vpack.c.bf16 %v3364, %v3362
      %v3367 = vpack.c.bf16 %v3365, %v3363
      %v3368 = vld [vmem:[%s722] sm:$0xf]
      %v3369 = vld [vmem:[%s722 + $0x4] sm:$0xf]
      %v3370 = vld [vmem:[%s722 + $0x8] sm:$0xf]
      %v3371 = vld [vmem:[%s722 + $0xc] sm:$0xf]
      %v3372 = vld [vmem:[%s722 + $0x10] sm:$0xf]
      %v3373 = vld [vmem:[%s722 + $0x14] sm:$0xf]
      %v3374 = vld [vmem:[%s722 + $0x18] sm:$0xf]
      %v3375 = vld [vmem:[%s722 + $0x1c] sm:$0xf]
      %v3376 = vld [vmem:[%s722 + $0x20] sm:$0xf]
      %v3377 = vld [vmem:[%s722 + $0x24] sm:$0xf]
      %v3378 = vld [vmem:[%s722 + $0x28] sm:$0xf]
      %v3379 = vld [vmem:[%s722 + $0x2c] sm:$0xf]
      %v3380 = vld [vmem:[%s722 + $0x30] sm:$0xf]
      %v3381 = vld [vmem:[%s722 + $0x34] sm:$0xf]
      %v3382 = vld [vmem:[%s722 + $0x38] sm:$0xf]
      %v3383 = vld [vmem:[%s722 + $0x3c] sm:$0xf]
      %v3384 = vld [vmem:[%s722 + $0x40] sm:$0xf]
      %v3385 = vld [vmem:[%s722 + $0x44] sm:$0xf]
      %v3386 = vld [vmem:[%s722 + $0x48] sm:$0xf]
      %v3387 = vld [vmem:[%s722 + $0x4c] sm:$0xf]
      %v3388 = vld [vmem:[%s722 + $0x50] sm:$0xf]
      %v3389 = vld [vmem:[%s722 + $0x54] sm:$0xf]
      %v3390 = vld [vmem:[%s722 + $0x58] sm:$0xf]
      %v3391 = vld [vmem:[%s722 + $0x5c] sm:$0xf]
      %v3392 = vld [vmem:[%s722 + $0x60] sm:$0xf]
      %v3393 = vld [vmem:[%s722 + $0x64] sm:$0xf]
      %v3394 = vld [vmem:[%s722 + $0x68] sm:$0xf]
      %v3395 = vld [vmem:[%s722 + $0x6c] sm:$0xf]
      %v3396 = vld [vmem:[%s722 + $0x70] sm:$0xf]
      %v3397 = vld [vmem:[%s722 + $0x74] sm:$0xf]
      %v3398 = vld [vmem:[%s722 + $0x78] sm:$0xf]
      %v3399 = vld [vmem:[%s722 + $0x7c] sm:$0xf]
      %v3400 = vld [vmem:[%s725] sm:$0x1]
      %v3402 = vlaneseq
      %v3403 = vshrl.u32 %v3402, 7
      %v3404 = vsub.s32 0, %v3403
      %v3405 = vrot.slane %v3400, %v3404
      %v3439 = vunpack.c.l.b16 %v3368
      %v3440 = vunpack.c.l.b16 %v3369
      %v3441 = vunpack.c.l.b16 %v3370
      %v3442 = vunpack.c.l.b16 %v3371
      %v3443 = vunpack.c.l.b16 %v3372
      %v3444 = vunpack.c.l.b16 %v3373
      %v3445 = vunpack.c.l.b16 %v3374
      %v3446 = vunpack.c.l.b16 %v3375
      %v3447 = vunpack.c.l.b16 %v3376
      %v3448 = vunpack.c.l.b16 %v3377
      %v3449 = vunpack.c.l.b16 %v3378
      %v3450 = vunpack.c.l.b16 %v3379
      %v3451 = vunpack.c.l.b16 %v3380
      %v3452 = vunpack.c.l.b16 %v3381
      %v3453 = vunpack.c.l.b16 %v3382
      %v3454 = vunpack.c.l.b16 %v3383
      %v3455 = vunpack.c.l.b16 %v3384
      %v3456 = vunpack.c.l.b16 %v3385
      %v3457 = vunpack.c.l.b16 %v3386
      %v3458 = vunpack.c.l.b16 %v3387
      %v3459 = vunpack.c.l.b16 %v3388
      %v3460 = vunpack.c.l.b16 %v3389
      %v3461 = vunpack.c.l.b16 %v3390
      %v3462 = vunpack.c.l.b16 %v3391
      %v3463 = vunpack.c.l.b16 %v3392
      %v3464 = vunpack.c.l.b16 %v3393
      %v3465 = vunpack.c.l.b16 %v3394
      %v3466 = vunpack.c.l.b16 %v3395
      %v3467 = vunpack.c.l.b16 %v3396
      %v3468 = vunpack.c.l.b16 %v3397
      %v3469 = vunpack.c.l.b16 %v3398
      %v3470 = vunpack.c.l.b16 %v3399
      %v3471 = vpack.c.b16 %v3440, %v3439
      %v3472 = vpack.c.b16 %v3442, %v3441
      %v3473 = vpack.c.b16 %v3444, %v3443
      %v3474 = vpack.c.b16 %v3446, %v3445
      %v3475 = vpack.c.b16 %v3448, %v3447
      %v3476 = vpack.c.b16 %v3450, %v3449
      %v3477 = vpack.c.b16 %v3452, %v3451
      %v3478 = vpack.c.b16 %v3454, %v3453
      %v3479 = vpack.c.b16 %v3456, %v3455
      %v3480 = vpack.c.b16 %v3458, %v3457
      %v3481 = vpack.c.b16 %v3460, %v3459
      %v3482 = vpack.c.b16 %v3462, %v3461
      %v3483 = vpack.c.b16 %v3464, %v3463
      %v3484 = vpack.c.b16 %v3466, %v3465
      %v3485 = vpack.c.b16 %v3468, %v3467
      %v3486 = vpack.c.b16 %v3470, %v3469
      %3503 = vmatprep.subr.bf16.mxu0 0
      %3504 = vmatpush1.bf16.msra.mxu0 %v3478
      %3505 = vmatprep.subr.bf16.mxu0 0
      %3506 = vmatpush1.bf16.msra.mxu0 %v3477
      %3507 = vmatprep.subr.bf16.mxu0 0
      %3508 = vmatpush1.bf16.msra.mxu0 %v3476
      %3509 = vmatprep.subr.bf16.mxu0 0
      %3510 = vmatpush1.bf16.msra.mxu0 %v3475
      %3511 = vmatprep.subr.bf16.mxu0 0
      %3512 = vmatpush1.bf16.msra.mxu0 %v3474
      %3513 = vmatprep.subr.bf16.mxu0 0
      %3514 = vmatpush1.bf16.msra.mxu0 %v3473
      %3515 = vmatprep.subr.bf16.mxu0 0
      %3516 = vmatpush1.bf16.msra.mxu0 %v3472
      %3517 = vmatprep.subr.bf16.mxu0 0
      %3518 = vmatpush1.bf16.msra.mxu0 %v3471
      %3519 = vmatprep.subr.bf16.mxu0 0
      %3520 = vmatpush2.bf16.msra.mxu0 %v3486
      %3521 = vmatprep.subr.bf16.mxu0 0
      %3522 = vmatpush2.bf16.msra.mxu0 %v3485
      %3523 = vmatprep.subr.bf16.mxu0 0
      %3524 = vmatpush2.bf16.msra.mxu0 %v3484
      %3525 = vmatprep.subr.bf16.mxu0 0
      %3526 = vmatpush2.bf16.msra.mxu0 %v3483
      %3527 = vmatprep.subr.bf16.mxu0 0
      %3528 = vmatpush2.bf16.msra.mxu0 %v3482
      %3529 = vmatprep.subr.bf16.mxu0 0
      %3530 = vmatpush2.bf16.msra.mxu0 %v3481
      %3531 = vmatprep.subr.bf16.mxu0 0
      %3532 = vmatpush2.bf16.msra.mxu0 %v3480
      %3533 = vmatprep.subr.bf16.mxu0 0
      %3534 = vmatpush2.bf16.msra.mxu0 %v3479
      %3535 = vmatprep.mubr.bf16.mxu0 %v3367
      %3536 = vmatmul.mubr.bf16.gmra.mxu0 %v3366
      %v3537 = vpop.f32.mrf.mxu0
      %v3538 = vadd.f32 %v3405, %v3537
      %v3539 = vpop.f32.mrf.mxu0
      %v3540 = vpop.f32.mrf.mxu0
      %v3541 = vadd.f32 %v3405, %v3540
      %v3542 = vpop.f32.mrf.mxu0
      %3543 = vdwg.mxu0
      %v3544 = vadd.f32 %v3538, %v840
      %v3545 = vadd.f32 %v3541, %v841
      %3546 = vadd.xlane.f32.xlu0 %v3544
      %v3547 = vpop.xlane.xlu0 %3546
      %3548 = vadd.xlane.f32.xlu0 %v3545
      %v3549 = vpop.xlane.xlu0 %3548
      %v3550 = vrcp.pop 128.0
      %v3551 = vmul.f32 %v3547, %v3550
      %v3552 = vmul.f32 %v3549, %v3550
      %v3553 = vsub.f32 %v3544, %v3551
      %v3554 = vsub.f32 %v3545, %v3552
      %v3555 = vmul.f32 %v3553, %v3553
      %v3556 = vmul.f32 %v3554, %v3554
      %3557 = vadd.xlane.f32.xlu0 %v3555
      %v3558 = vpop.xlane.xlu0 %3557
      %3559 = vadd.xlane.f32.xlu0 %v3556
      %v3560 = vpop.xlane.xlu0 %3559
      %v3561 = vmul.f32 %v3558, %v3550
      %v3562 = vmul.f32 %v3560, %v3550
      %v3563 = vadd.f32 %v3561, 1e-05
      %v3564 = vadd.f32 %v3562, 1e-05
      %v3565 = vrsqrt.pop %v3563
      %v3566 = vrsqrt.pop %v3564
      %v3567 = vmul.f32 %v3553, %v3565
      %v3568 = vmul.f32 %v3554, %v3566
      %v3569 = vld [vmem:[%s737] sm:$0x1]
      %v3571 = vlaneseq
      %v3572 = vshrl.u32 %v3571, 7
      %v3573 = vsub.s32 0, %v3572
      %v3574 = vrot.slane %v3569, %v3573
      %v3576 = vmul.f32 %v3567, %v3574
      %v3577 = vmul.f32 %v3568, %v3574
      %v3578 = vld [vmem:[%s740] sm:$0x1]
      %v3580 = vlaneseq
      %v3581 = vshrl.u32 %v3580, 7
      %v3582 = vsub.s32 0, %v3581
      %v3583 = vrot.slane %v3578, %v3582
      %v3585 = vadd.f32 %v3576, %v3583
      %v3586 = vadd.f32 %v3577, %v3583
      %3587 = vst [vmem:[#allocation2] sm:$0xff] %v3585
      %3588 = vst [vmem:[#allocation2 + $0x8] sm:$0xff] %v3586
      %p3589 = scmp.eq.s32.totalorder %s30, 4
      // Predicated region
      $region101: #{tpu_custom_call.1} parent=95 // pred_check
        %p3590 = pneg %p3589
      $region102: #{tpu_custom_call.1} parent=95 // pred_check_branch
        %3592 = sbr.rel (%p3590) target = $region104
      $region103: #{tpu_custom_call.1} parent=95 // pred_region
        %v3595 = vcombine.high %v3585, %v3585
        %v3597 = vunpack.c.l.s4 1983009808
        %v3598 = vunpack.c.0.s8 %v3597
        %v3599 = vlaneseq
        %v3600 = vshrl.u32 %v3599, 7
        %v3601 = vsub.s32 %v3598, %v3600
        %v3602 = vrot.slane %v3585, %v3601
        %v3604 = vunpack.c.l.s4 1983009808
        %v3605 = vunpack.c.0.s8 %v3604
        %v3606 = vlaneseq
        %v3607 = vshrl.u32 %v3606, 7
        %v3608 = vsub.s32 %v3605, %v3607
        %v3609 = vrot.slane %v3595, %v3608
        %v3610 = vcombine.high %v3602, %v3602
        %v3611 = vcombine.high %v3609, %v3609
        %v3612 = vcombine.high %v3586, %v3586
        %v3614 = vunpack.c.l.s4 1983009808
        %v3615 = vunpack.c.0.s8 %v3614
        %v3616 = vlaneseq
        %v3617 = vshrl.u32 %v3616, 7
        %v3618 = vsub.s32 %v3615, %v3617
        %v3619 = vrot.slane %v3586, %v3618
        %v3621 = vunpack.c.l.s4 1983009808
        %v3622 = vunpack.c.0.s8 %v3621
        %v3623 = vlaneseq
        %v3624 = vshrl.u32 %v3623, 7
        %v3625 = vsub.s32 %v3622, %v3624
        %v3626 = vrot.slane %v3612, %v3625
        %v3627 = vcombine.high %v3619, %v3619
        %v3628 = vcombine.high %v3626, %v3626
        %vm3637 = vcmask 1041408
        %v3638 = vsel %vm3637, %v3602, 0.0
        %v3639 = vsel %vm3637, %v3610, 0.0
        %v3640 = vadd.f32 %v3638, %v3639
        %v3641 = vsel %vm3637, %v3609, 0.0
        %v3642 = vadd.f32 %v3640, %v3641
        %v3643 = vsel %vm3637, %v3611, 0.0
        %v3644 = vadd.f32 %v3642, %v3643
        %v3645 = vsel %vm3637, %v3619, 0.0
        %v3646 = vadd.f32 %v3644, %v3645
        %v3647 = vsel %vm3637, %v3627, 0.0
        %v3648 = vadd.f32 %v3646, %v3647
        %v3649 = vsel %vm3637, %v3626, 0.0
        %v3650 = vadd.f32 %v3648, %v3649
        %v3651 = vsel %vm3637, %v3628, 0.0
        %v3652 = vadd.f32 %v3650, %v3651
        %v3653 = vrcp.pop 8.0
        %v3654 = vmul.f32 %v3652, %v3653
        %v3655 = vld [vmem:[%s15] sm:$0xff]
        %v3656 = vld [vmem:[%s15 + $0x8] sm:$0xff]
        %v3657 = vld [vmem:[%s15 + $0x10] sm:$0xff]
        %v3658 = vld [vmem:[%s15 + $0x18] sm:$0xff]
        %v3659 = vld [vmem:[%s15 + $0x20] sm:$0xff]
        %v3660 = vld [vmem:[%s15 + $0x28] sm:$0xff]
        %v3661 = vld [vmem:[%s15 + $0x30] sm:$0xff]
        %v3662 = vld [vmem:[%s15 + $0x38] sm:$0xff]
        %v3663 = vld [vmem:[%s15 + $0x40] sm:$0xff]
        %v3664 = vld [vmem:[%s15 + $0x48] sm:$0xff]
        %v3665 = vld [vmem:[%s15 + $0x50] sm:$0xff]
        %v3666 = vld [vmem:[%s15 + $0x58] sm:$0xff]
        %v3667 = vld [vmem:[%s15 + $0x60] sm:$0xff]
        %v3668 = vld [vmem:[%s15 + $0x68] sm:$0xff]
        %v3669 = vld [vmem:[%s15 + $0x70] sm:$0xff]
        %v3670 = vld [vmem:[%s15 + $0x78] sm:$0xff]
        %v3671 = vld [vmem:[%s16] sm:$0x1]
        %v3673 = vlaneseq
        %v3674 = vshrl.u32 %v3673, 7
        %v3675 = vsub.s32 0, %v3674
        %v3676 = vrot.slane %v3671, %v3675
        %3678 = vmatprep.subr.mxu0 0.0
        %3679 = vmatpush1.msra.mxu0 %v3670
        %3680 = vmatprep.subr.mxu0 0.0
        %3681 = vmatpush1.msra.mxu0 %v3669
        %3682 = vmatprep.subr.mxu0 0.0
        %3683 = vmatpush1.msra.mxu0 %v3668
        %3684 = vmatprep.subr.mxu0 0.0
        %3685 = vmatpush1.msra.mxu0 %v3667
        %3686 = vmatprep.subr.mxu0 0.0
        %3687 = vmatpush1.msra.mxu0 %v3666
        %3688 = vmatprep.subr.mxu0 0.0
        %3689 = vmatpush1.msra.mxu0 %v3665
        %3690 = vmatprep.subr.mxu0 0.0
        %3691 = vmatpush1.msra.mxu0 %v3664
        %3692 = vmatprep.subr.mxu0 0.0
        %3693 = vmatpush1.msra.mxu0 %v3663
        %3694 = vmatprep.subr.mxu0 0.0
        %3695 = vmatpush1.msra.mxu0 %v3662
        %3696 = vmatprep.subr.mxu0 0.0
        %3697 = vmatpush1.msra.mxu0 %v3661
        %3698 = vmatprep.subr.mxu0 0.0
        %3699 = vmatpush1.msra.mxu0 %v3660
        %3700 = vmatprep.subr.mxu0 0.0
        %3701 = vmatpush1.msra.mxu0 %v3659
        %3702 = vmatprep.subr.mxu0 0.0
        %3703 = vmatpush1.msra.mxu0 %v3658
        %3704 = vmatprep.subr.mxu0 0.0
        %3705 = vmatpush1.msra.mxu0 %v3657
        %3706 = vmatprep.subr.mxu0 0.0
        %3707 = vmatpush1.msra.mxu0 %v3656
        %3708 = vmatprep.subr.mxu0 0.0
        %3709 = vmatpush1.msra.mxu0 %v3655
        %3710 = vmatprep.subr.mxu0 0.0
        %3711 = vmatpush2.msra.mxu0 0.0
        %3712 = vmatprep.subr.mxu0 0.0
        %3713 = vmatpush2.msra.mxu0 0.0
        %3714 = vmatprep.subr.mxu0 0.0
        %3715 = vmatpush2.msra.mxu0 0.0
        %3716 = vmatprep.subr.mxu0 0.0
        %3717 = vmatpush2.msra.mxu0 0.0
        %3718 = vmatprep.subr.mxu0 0.0
        %3719 = vmatpush2.msra.mxu0 0.0
        %3720 = vmatprep.subr.mxu0 0.0
        %3721 = vmatpush2.msra.mxu0 0.0
        %3722 = vmatprep.subr.mxu0 0.0
        %3723 = vmatpush2.msra.mxu0 0.0
        %3724 = vmatprep.subr.mxu0 0.0
        %3725 = vmatpush2.msra.mxu0 0.0
        %3726 = vmatprep.subr.mxu0 0.0
        %3727 = vmatpush2.msra.mxu0 0.0
        %3728 = vmatprep.subr.mxu0 0.0
        %3729 = vmatpush2.msra.mxu0 0.0
        %3730 = vmatprep.subr.mxu0 0.0
        %3731 = vmatpush2.msra.mxu0 0.0
        %3732 = vmatprep.subr.mxu0 0.0
        %3733 = vmatpush2.msra.mxu0 0.0
        %3734 = vmatprep.subr.mxu0 0.0
        %3735 = vmatpush2.msra.mxu0 0.0
        %3736 = vmatprep.subr.mxu0 0.0
        %3737 = vmatpush2.msra.mxu0 0.0
        %3738 = vmatprep.subr.mxu0 0.0
        %3739 = vmatpush2.msra.mxu0 0.0
        %3740 = vmatprep.subr.mxu0 0.0
        %3741 = vmatpush2.msra.mxu0 0.0
        %3742 = vmatprep.mubr.f32.mxu0 0.0
        %3743 = vmatmul.mubr.f32.gmra.mxu0 %v3654
        %v3744 = vpop.f32.mrf.mxu0
        %v3745 = vadd.f32 %v3676, %v3744
        %v3746 = vpop.f32.mrf.mxu0
        %3747 = vdwg.mxu0
        %v3748 = vmax.f32 %v3745, 0.0
        %v3749 = vld [vmem:[%s17] sm:$0xff]
        %v3750 = vld [vmem:[%s17 + $0x8] sm:$0xff]
        %v3751 = vld [vmem:[%s17 + $0x10] sm:$0xff]
        %v3752 = vld [vmem:[%s17 + $0x18] sm:$0xff]
        %v3753 = vld [vmem:[%s17 + $0x20] sm:$0xff]
        %v3754 = vld [vmem:[%s17 + $0x28] sm:$0xff]
        %v3755 = vld [vmem:[%s17 + $0x30] sm:$0xff]
        %v3756 = vld [vmem:[%s17 + $0x38] sm:$0xff]
        %v3757 = vld [vmem:[%s18] sm:$0x1]
        %v3759 = vlaneseq
        %v3760 = vshrl.u32 %v3759, 7
        %v3761 = vsub.s32 0, %v3760
        %v3762 = vrot.slane %v3757, %v3761
        %vm3764 = vcmask 523264
        %v3766 = vsel %vm3764, %v3748, 0
        %3768 = vmatprep.subr.mxu0 0.0
        %3769 = vmatpush1.msra.mxu0 0.0
        %3770 = vmatprep.subr.mxu0 0.0
        %3771 = vmatpush1.msra.mxu0 0.0
        %3772 = vmatprep.subr.mxu0 0.0
        %3773 = vmatpush1.msra.mxu0 0.0
        %3774 = vmatprep.subr.mxu0 0.0
        %3775 = vmatpush1.msra.mxu0 0.0
        %3776 = vmatprep.subr.mxu0 0.0
        %3777 = vmatpush1.msra.mxu0 0.0
        %3778 = vmatprep.subr.mxu0 0.0
        %3779 = vmatpush1.msra.mxu0 0.0
        %3780 = vmatprep.subr.mxu0 0.0
        %3781 = vmatpush1.msra.mxu0 0.0
        %3782 = vmatprep.subr.mxu0 0.0
        %3783 = vmatpush1.msra.mxu0 0.0
        %3784 = vmatprep.subr.mxu0 0.0
        %3785 = vmatpush1.msra.mxu0 %v3756
        %3786 = vmatprep.subr.mxu0 0.0
        %3787 = vmatpush1.msra.mxu0 %v3755
        %3788 = vmatprep.subr.mxu0 0.0
        %3789 = vmatpush1.msra.mxu0 %v3754
        %3790 = vmatprep.subr.mxu0 0.0
        %3791 = vmatpush1.msra.mxu0 %v3753
        %3792 = vmatprep.subr.mxu0 0.0
        %3793 = vmatpush1.msra.mxu0 %v3752
        %3794 = vmatprep.subr.mxu0 0.0
        %3795 = vmatpush1.msra.mxu0 %v3751
        %3796 = vmatprep.subr.mxu0 0.0
        %3797 = vmatpush1.msra.mxu0 %v3750
        %3798 = vmatprep.subr.mxu0 0.0
        %3799 = vmatpush1.msra.mxu0 %v3749
        %3800 = vmatprep.subr.mxu0 0.0
        %3801 = vmatpush2.msra.mxu0 0.0
        %3802 = vmatprep.subr.mxu0 0.0
        %3803 = vmatpush2.msra.mxu0 0.0
        %3804 = vmatprep.subr.mxu0 0.0
        %3805 = vmatpush2.msra.mxu0 0.0
        %3806 = vmatprep.subr.mxu0 0.0
        %3807 = vmatpush2.msra.mxu0 0.0
        %3808 = vmatprep.subr.mxu0 0.0
        %3809 = vmatpush2.msra.mxu0 0.0
        %3810 = vmatprep.subr.mxu0 0.0
        %3811 = vmatpush2.msra.mxu0 0.0
        %3812 = vmatprep.subr.mxu0 0.0
        %3813 = vmatpush2.msra.mxu0 0.0
        %3814 = vmatprep.subr.mxu0 0.0
        %3815 = vmatpush2.msra.mxu0 0.0
        %3816 = vmatprep.subr.mxu0 0.0
        %3817 = vmatpush2.msra.mxu0 0.0
        %3818 = vmatprep.subr.mxu0 0.0
        %3819 = vmatpush2.msra.mxu0 0.0
        %3820 = vmatprep.subr.mxu0 0.0
        %3821 = vmatpush2.msra.mxu0 0.0
        %3822 = vmatprep.subr.mxu0 0.0
        %3823 = vmatpush2.msra.mxu0 0.0
        %3824 = vmatprep.subr.mxu0 0.0
        %3825 = vmatpush2.msra.mxu0 0.0
        %3826 = vmatprep.subr.mxu0 0.0
        %3827 = vmatpush2.msra.mxu0 0.0
        %3828 = vmatprep.subr.mxu0 0.0
        %3829 = vmatpush2.msra.mxu0 0.0
        %3830 = vmatprep.subr.mxu0 0.0
        %3831 = vmatpush2.msra.mxu0 0.0
        %3832 = vmatprep.mubr.f32.mxu0 0.0
        %3833 = vmatmul.mubr.f32.gmra.mxu0 %v3766
        %v3834 = vpop.f32.mrf.mxu0
        %v3835 = vadd.f32 %v3762, %v3834
        %v3836 = vpop.f32.mrf.mxu0
        %3837 = vdwg.mxu0
        %v3838 = vsub.f32 0.0, %v3835
        %v3839 = vmul.f32 %v3838, 1.442695
        %v3840 = vpow.pop %v3839
        %v3841 = vadd.f32 %v3840, 1.0
        %v3842 = vrcp.pop %v3841
        %v3843 = vmul.f32 1.0, %v3842
        %v3844 = vmul.f32 %v3843, 2.0
        %v3845 = vld [vmem:[%s1] sm:$0x3]
        %v3846 = vld [vmem:[%s2] sm:$0x3]
        %v3847 = vmul.f32 %v3845, %v3844
        %3849 = vrot.lane.b32.xlu0 %v3845, 127
        %v3850 = vpop.permute.xlu0 %3849
        %v3852 = vmul.f32 %v3847, %v3850
        %3854 = vrot.lane.b32.xlu0 %v3846, 127
        %v3855 = vpop.permute.xlu0 %3854
        %v3857 = vrcp.pop %v3855
        %v3858 = vmul.f32 %v3852, %v3857
        %v3859 = vmul.f32 %v3858, 2.0
        %v3860 = vsub.f32 %v3845, %v3846
        %v3861 = vsub.f32 0.0, %v3860
        %v3862 = vmul.f32 %v3861, 1.442695
        %v3863 = vpow.pop %v3862
        %v3864 = vadd.f32 %v3863, 1.0
        %v3865 = vrcp.pop %v3864
        %v3866 = vmul.f32 1.0, %v3865
        %3868 = vrot.lane.b32.xlu0 %v3866, 127
        %v3869 = vpop.permute.xlu0 %3868
        %v3871 = vmul.f32 %v3844, %v3869
        %3873 = vrot.lane.b32.xlu0 %v3871, 127
        %v3874 = vpop.permute.xlu0 %3873
        %v3876 = vadd.f32 %v3871, %v3874
        %3878 = vrot.lane.b32.xlu0 %v3876, 127
        %v3879 = vpop.permute.xlu0 %3878
        %v3881 = vmul.f32 %v3859, %v3879
        %vm3882 = vcmask 1024
        %3883 = vst.msk [vmem:[%s19] sm:$0x3] %vm3882, %v3881
      $region104: #{tpu_custom_call.1} parent=95 // pred_fallthru
        _
      // Predicated region
      $region105: #{tpu_custom_call.1} parent=95 // pred_check
        %p3884 = pneg %p492
      $region106: #{tpu_custom_call.1} parent=95 // pred_check_branch
        %3886 = sbr.rel (%p3884) target = $region108
      $region107: #{tpu_custom_call.1} parent=95 // pred_region
        _
      $region108: #{tpu_custom_call.1} parent=95 // pred_fallthru
        _
      // Predicated region
      $region109: #{tpu_custom_call.1} parent=95 // pred_check
        %p3887 = pneg %p492
      $region110: #{tpu_custom_call.1} parent=95 // pred_check_branch
        %3889 = sbr.rel (%p3887) target = $region112
      $region111: #{tpu_custom_call.1} parent=95 // pred_region
        _
      $region112: #{tpu_custom_call.1} parent=95 // pred_fallthru
        _
    $region96: #{tpu_custom_call.1} parent=5 // pred_fallthru
      _
    %p3890 = scmp.le.s32.totalorder 2, %s25
    // Predicated region
    $region113: #{tpu_custom_call.1} parent=5 // pred_check
      %p3891 = pneg %p3890
    $region114: #{tpu_custom_call.1} parent=5 // pred_check_branch
      %3893 = sbr.rel (%p3891) target = $region116
    $region115: #{tpu_custom_call.1} parent=5 // pred_region
      %s3894 = ssub.s32 %s25, 2
    $region116: #{tpu_custom_call.1} parent=5 // pred_fallthru
      _
  $region6: #{tpu_custom_call.1} parent=0 // loop_footer
    %s29 = sadd.s32 1, %s25
  $region7: #{tpu_custom_call.1} parent=0 // loop_footer_branch
    %24 = sbr.rel target = $region3
  $region8: #{tpu_custom_call.1} parent=0 // loop_exit
    _

</llo_original>
